<compile_context>
chip_gen: v7x
topology: tpu7x:2x2x1
jax: 0.10.0
libtpu: 0.0.40
codegen_flags: <defaults>
</compile_context>

<pallas_src>
import functools

import jax
import jax.numpy as jnp
from jax.experimental import pallas as pl
from jax.experimental.pallas import tpu as pltpu

# ----------------------------- configuration -------------------------------
TM_MAX = 1024     # max point-tile (lane dim) per grid step
HID = 32          # hidden size of both MLPs
CDIM = 32         # latent plane-feature channels
RESO = 16         # plane resolution
NCELL = RESO * RESO
PADDING = 0.1     # conv_onet bounding-box padding


def _round_up(x, m):
    return ((x + m - 1) // m) * m


def _choose_tile(n):
    """Largest lane tile (multiple of 128, capped at TM_MAX).

    Single-TC chips (v5e/v6e): fewer, fatter steps amortize the ~0.35us/step
    overhead and the MXU weight-load cadence of the K=32 dots.  On v7x the
    batch axis of the grid is "parallel", so both TensorCores get work even
    when the point dimension fits in a single tile."""
    n128 = _round_up(max(n, 128), 128)
    tm = min(TM_MAX, n128)
    return tm, _round_up(n128, tm)


def _rep_spec(arr):
    # whole (small) weight array resident in VMEM; same block every grid step
    return pl.BlockSpec(arr.shape, lambda b, i: (0,) * arr.ndim)


def _norm01(v):
    """conv_onet normalize_coordinate onto the 'xz' plane, per component."""
    return jnp.clip(v / (1.0 + PADDING + 1e-3) + 0.5, 0.0, 1.0 - 1e-5)


# ============================ Pallas kernels ================================
# Layout: activations are (channels, points); hidden weights are (out, in)
# bf16; biases are (out, 1) f32 broadcast across lanes.  Dots accumulate f32.

def _res_block(h, w_a, b_a, w_b, b_b):
    """ResnetBlockFC: h + fc_1(relu(fc_0(relu(h)))) in (C, TM) layout."""
    n = jnp.dot(w_a, jnp.maximum(h, 0.0).astype(jnp.bfloat16),
                preferred_element_type=jnp.float32) + b_a
    dx = jnp.dot(w_b, jnp.maximum(n, 0.0).astype(jnp.bfloat16),
                 preferred_element_type=jnp.float32) + b_b
    return h + dx


def _encoder_kernel(pts_ref, wpos_ref, bpos_ref, wstk_ref, bstk_ref,
                    plane_ref, acc_ref, cnt_ref, *, n_valid):
    """fc_pos -> 2x ResnetBlockFC -> fc_c, then scatter-mean onto the plane
    expressed as a one-hot matmul accumulated in VMEM scratch."""
    i = pl.program_id(1)

    @pl.when(i == 0)
    def _():
        acc_ref[...] = jnp.zeros_like(acc_ref)
        cnt_ref[...] = jnp.zeros_like(cnt_ref)

    x = pts_ref[0]                                       # (3, tm) f32
    tm = x.shape[-1]

    # ---- per-point MLP (positions stay f32 for the first dot) ----
    h = jnp.dot(wpos_ref[...], x,
                preferred_element_type=jnp.float32) + bpos_ref[...]
    for blk in range(2):                                 # ResnetBlockFC x2
        lo = 2 * blk * HID
        h = _res_block(h,
                       wstk_ref[lo:lo + HID, :], bstk_ref[lo:lo + HID, :],
                       wstk_ref[lo + HID:lo + 2 * HID, :],
                       bstk_ref[lo + HID:lo + 2 * HID, :])
    lo = 4 * HID                                         # fc_c
    c = (jnp.dot(wstk_ref[lo:lo + CDIM, :], h.astype(jnp.bfloat16),
                 preferred_element_type=jnp.float32) + bstk_ref[lo:lo + CDIM, :])

    # ---- scatter-mean onto the plane as a one-hot matmul (no XLA scatter) ----
    gx = jnp.clip((_norm01(x[0:1, :]) * RESO).astype(jnp.int32), 0, RESO - 1)
    gz = jnp.clip((_norm01(x[2:3, :]) * RESO).astype(jnp.int32), 0, RESO - 1)
    idx = gx + RESO * gz                                 # (1, tm) flat cell id
    lane = jax.lax.broadcasted_iota(jnp.int32, (1, tm), 1)
    valid = ((i * tm + lane) < n_valid).astype(jnp.float32)
    kio = jax.lax.broadcasted_iota(jnp.int32, (NCELL, tm), 0)
    m_t = (kio == idx).astype(jnp.float32)               # (NCELL, tm) one-hot^T
    dn = (((1,), (1,)), ((), ()))                        # contract over points
    acc_ref[...] += jax.lax.dot_general(c * valid, m_t, dn,
                                        preferred_element_type=jnp.float32)
    cnt_ref[...] += jax.lax.dot_general(valid, m_t, dn,
                                        preferred_element_type=jnp.float32)

    @pl.when(i == pl.num_programs(1) - 1)
    def _():
        plane_ref[0] = acc_ref[...] / jnp.maximum(cnt_ref[...], 1.0)


def _decoder_kernel(pts_ref, plane_ref, wp3_ref, wpc_ref, bpc_ref,
                    wstk_ref, bstk_ref, wout_ref, bout_ref, out_ref,
                    *, apply_sigmoid):
    """Fused LocalDecoder: bilinear plane sampling (as a K=RESO^2 matmul) ->
    stacked fc_p/fc_c0/fc_c1 projection -> 2x ResnetBlockFC -> fc_out."""
    p = pts_ref[0]                                       # (3, tm) f32
    tm = p.shape[-1]
    plane = plane_ref[0]                                 # (CDIM, NCELL) f32

    # ---- fused bilinear sampling (grid_sample, align_corners, border pad) ----
    ux = _norm01(p[0:1, :])                              # x -> W axis
    uz = _norm01(p[2:3, :])                              # z -> H axis
    fx = ux * (RESO - 1)
    fz = uz * (RESO - 1)
    x0 = jnp.floor(fx)
    z0 = jnp.floor(fz)
    wx = fx - x0
    wz = fz - z0
    ix0 = jnp.clip(x0, 0, RESO - 1).astype(jnp.int32)
    ix1 = jnp.clip(x0 + 1.0, 0, RESO - 1).astype(jnp.int32)
    iz0 = jnp.clip(z0, 0, RESO - 1).astype(jnp.int32)
    iz1 = jnp.clip(z0 + 1.0, 0, RESO - 1).astype(jnp.int32)
    kio = jax.lax.broadcasted_iota(jnp.int32, (NCELL, tm), 0)

    def corner(ix, iz, w):
        return (kio == (ix + RESO * iz)).astype(jnp.float32) * w

    wmat = (corner(ix0, iz0, (1.0 - wx) * (1.0 - wz)) +
            corner(ix1, iz0, wx * (1.0 - wz)) +
            corner(ix0, iz1, (1.0 - wx) * wz) +
            corner(ix1, iz1, wx * wz))                   # (NCELL, tm)
    c = jnp.dot(plane, wmat, preferred_element_type=jnp.float32)  # (CDIM, tm)

    # ---- fc_p(p) in f32 + stacked fc_c0/fc_c1(c) in one (2H, CDIM) dot ----
    proj = (jnp.dot(wp3_ref[...], p, preferred_element_type=jnp.float32) +
            jnp.dot(wpc_ref[...], c.astype(jnp.bfloat16),
                    preferred_element_type=jnp.float32) + bpc_ref[...])
    net = proj[:HID, :]                                  # fc_p(p) + fc_c0(c)
    cc1 = proj[HID:, :]                                  # fc_c1(c)

    net = _res_block(net,
                     wstk_ref[0:HID, :], bstk_ref[0:HID, :],
                     wstk_ref[HID:2 * HID, :], bstk_ref[HID:2 * HID, :])
    net = net + cc1
    net = _res_block(net,
                     wstk_ref[2 * HID:3 * HID, :], bstk_ref[2 * HID:3 * HID, :],
                     wstk_ref[3 * HID:4 * HID, :], bstk_ref[3 * HID:4 * HID, :])

    # final (1, HID) projection on VPU/XLU (M=1 would waste the MXU)
    out = (jnp.sum(wout_ref[...] * jnp.maximum(net, 0.0), axis=0, keepdims=True)
           + bout_ref[...])                              # (1, tm) lane-dense
    if apply_sigmoid:                                    # Bernoulli(logits).probs
        out = pl.reciprocal(1.0 + jnp.exp(-out), approx=True)
    out_ref[0] = out


# =========================== pallas_call wrappers ===========================
def encode_inputs(inputs, enc):
    """LocalPoolPointnet-style encoder -> {'xz': (B, CDIM, RESO*RESO)} plane."""
    B, N, _ = inputs.shape
    tm, npad = _choose_tile(N)
    pts = jnp.pad(jnp.swapaxes(inputs, 1, 2), ((0, 0), (0, 0), (0, npad - N)))
    kernel = functools.partial(_encoder_kernel, n_valid=N)
    plane = pl.pallas_call(
        kernel,
        out_shape=jax.ShapeDtypeStruct((B, CDIM, NCELL), jnp.float32),
        grid=(B, npad // tm),
        in_specs=[pl.BlockSpec((1, 3, tm), lambda b, i: (b, 0, i)),
                  _rep_spec(enc["w_pos"]), _rep_spec(enc["b_pos"]),
                  _rep_spec(enc["w_stack"]), _rep_spec(enc["b_stack"])],
        out_specs=pl.BlockSpec((1, CDIM, NCELL), lambda b, i: (b, 0, 0)),
        scratch_shapes=[pltpu.VMEM((CDIM, NCELL), jnp.float32),
                        pltpu.VMEM((1, NCELL), jnp.float32)],
        compiler_params=pltpu.CompilerParams(
            dimension_semantics=("parallel", "arbitrary"),
            vmem_limit_bytes=32 << 20),
    )(pts, enc["w_pos"], enc["b_pos"], enc["w_stack"], enc["b_stack"])
    # TODO(synk): LocalPoolPointnet's local max-pool-and-concat between ResNet
    # blocks and the UNet over the plane are omitted from this synthetic encoder.
    return {"xz": plane}


def decode(p, c_plane, dec, logits=True):
    """LocalDecoder: fused plane sampling + ResNet-FC MLP -> (B, T)."""
    B, T, _ = p.shape
    tm, tpad = _choose_tile(T)
    pts = jnp.pad(jnp.swapaxes(p, 1, 2), ((0, 0), (0, 0), (0, tpad - T)))
    kernel = functools.partial(_decoder_kernel, apply_sigmoid=not logits)
    out = pl.pallas_call(
        kernel,
        out_shape=jax.ShapeDtypeStruct((B, 1, tpad), jnp.float32),
        grid=(B, tpad // tm),
        in_specs=[pl.BlockSpec((1, 3, tm), lambda b, i: (b, 0, i)),
                  pl.BlockSpec((1, CDIM, NCELL), lambda b, i: (b, 0, 0)),
                  _rep_spec(dec["w_p3"]), _rep_spec(dec["w_pc"]),
                  _rep_spec(dec["b_pc"]), _rep_spec(dec["w_stack"]),
                  _rep_spec(dec["b_stack"]), _rep_spec(dec["w_out"]),
                  _rep_spec(dec["b_out"])],
        out_specs=pl.BlockSpec((1, 1, tm), lambda b, i: (b, 0, i)),
        compiler_params=pltpu.CompilerParams(
            dimension_semantics=("parallel", "parallel"),
            vmem_limit_bytes=32 << 20),
    )(pts, c_plane["xz"], dec["w_p3"], dec["w_pc"], dec["b_pc"],
      dec["w_stack"], dec["b_stack"], dec["w_out"], dec["b_out"])
    return out[:, 0, :T]


# ============================= model wrapper ================================
def _dense(key, fan_out, fan_in):
    kw, kb = jax.random.split(key)
    w = jax.random.normal(kw, (fan_out, fan_in), jnp.float32) / jnp.sqrt(fan_in)
    b = 0.01 * jax.random.normal(kb, (fan_out, 1), jnp.float32)
    return w, b


def init_params(key):
    ks = jax.random.split(key, 14)
    # ---- encoder: fc_pos(3->H), 2x ResnetBlockFC(H), fc_c(H->CDIM) ----
    w_pos, b_pos = _dense(ks[0], HID, 3)
    e0a, eb0a = _dense(ks[1], HID, HID)
    e0b, eb0b = _dense(ks[2], HID, HID)
    e1a, eb1a = _dense(ks[3], HID, HID)
    e1b, eb1b = _dense(ks[4], HID, HID)
    w_c, b_c = _dense(ks[5], CDIM, HID)
    enc = {
        "w_pos": w_pos,                                   # f32: positions stay f32
        "b_pos": b_pos,
        "w_stack": jnp.concatenate([e0a, e0b, e1a, e1b, w_c], 0).astype(jnp.bfloat16),
        "b_stack": jnp.concatenate([eb0a, eb0b, eb1a, eb1b, b_c], 0),
    }
    # ---- decoder: fc_p(3->H), per block fc_c(CDIM->H)+ResnetBlockFC(H), fc_out(H->1)
    w_p, b_p = _dense(ks[6], HID, 3)
    w_c0, b_c0 = _dense(ks[7], HID, CDIM)
    d0a, db0a = _dense(ks[8], HID, HID)
    d0b, db0b = _dense(ks[9], HID, HID)
    w_c1, b_c1 = _dense(ks[10], HID, CDIM)
    d1a, db1a = _dense(ks[11], HID, HID)
    d1b, db1b = _dense(ks[12], HID, HID)
    w_out, b_out = _dense(ks[13], 1, HID)
    dec = {
        # fc_p (f32, rows 0:H) with zero rows H:2H (fc_c1 has no position input)
        "w_p3": jnp.concatenate([w_p, jnp.zeros((HID, 3), jnp.float32)], 0),
        # stacked fc_c0 / fc_c1 applied to the sampled plane features
        "w_pc": jnp.concatenate([w_c0, w_c1], 0).astype(jnp.bfloat16),
        "b_pc": jnp.concatenate([b_p + b_c0, b_c1], 0),
        "w_stack": jnp.concatenate([d0a, d0b, d1a, d1b], 0).astype(jnp.bfloat16),
        "b_stack": jnp.concatenate([db0a, db0b, db1a, db1b], 0),
        "w_out": w_out.T,                                 # (HID, 1) f32
        "b_out": b_out,                                   # (1, 1)  f32
    }
    return enc, dec


@functools.partial(jax.jit, static_argnames=("logits",))
def conv_onet_forward(p, inputs, enc_params, dec_params, logits=True):
    """ConvolutionalOccupancyNetwork.forward(p, inputs, logits=True)."""
    c_plane = encode_inputs(inputs, enc_params)
    return decode(p, c_plane, dec_params, logits=logits)


# ================================== main ====================================
if __name__ == "__main__":
    key = jax.random.PRNGKey(0)
    k_param, k_in, k_p = jax.random.split(key, 3)

    B, NIN, T = 2, 256, 256
    inputs = jax.random.uniform(k_in, (B, NIN, 3), jnp.float32,
                                minval=-0.5, maxval=0.5)
    p = jax.random.uniform(k_p, (B, T, 3), jnp.float32,
                           minval=-0.5, maxval=0.5)

    enc_params, dec_params = init_params(k_param)

    logits = conv_onet_forward(p, inputs, enc_params, dec_params, logits=True)
    probs = conv_onet_forward(p, inputs, enc_params, dec_params, logits=False)
    jax.block_until_ready((logits, probs))

    assert logits.shape == (B, T) and logits.dtype == jnp.float32
    assert probs.shape == (B, T)
    assert bool(jnp.all(jnp.isfinite(logits)))
    assert bool(jnp.all(jnp.isfinite(probs)))
    print("KERNEL_OK")
</pallas_src>

<mosaic_0001>
module attributes {stable_mosaic.version = 11 : i64} {
  func.func @_encoder_kernel(%arg0: i32, %arg1: i32, %arg2: memref<1x3x256xf32, #tpu.memory_space<vmem>>, %arg3: memref<32x3xf32, #tpu.memory_space<vmem>>, %arg4: memref<32x1xf32, #tpu.memory_space<vmem>>, %arg5: memref<160x32xbf16, #tpu.memory_space<vmem>>, %arg6: memref<160x1xf32, #tpu.memory_space<vmem>>, %arg7: memref<1x32x256xf32, #tpu.memory_space<vmem>>, %arg8: memref<32x256xf32, #tpu.memory_space<vmem>>, %arg9: memref<1x256xf32, #tpu.memory_space<vmem>>) attributes {dimension_semantics = [#tpu.dimension_semantics<parallel>, #tpu.dimension_semantics<arbitrary>], iteration_bounds = array<i64: 2, 1>, scalar_prefetch = 0 : i64, scratch_operands = 2 : i64, tpu.core_type = #tpu.core_type<tc>, window_params = [{transform_indices = @transform_0, window_bounds = array<i64: 1, 3, 256>}, {pipeline_mode = #tpu.pipeline_mode<synchronous>, transform_indices = @transform_1, window_bounds = array<i64: 32, 3>}, {pipeline_mode = #tpu.pipeline_mode<synchronous>, transform_indices = @transform_2, window_bounds = array<i64: 32, 1>}, {pipeline_mode = #tpu.pipeline_mode<synchronous>, transform_indices = @transform_3, window_bounds = array<i64: 160, 32>}, {pipeline_mode = #tpu.pipeline_mode<synchronous>, transform_indices = @transform_4, window_bounds = array<i64: 160, 1>}, {transform_indices = @transform_5, window_bounds = array<i64: 1, 32, 256>}]} {
    %c0_i32 = arith.constant 0 : i32
    %0 = arith.cmpi eq, %arg1, %c0_i32 : i32
    %1 = arith.extui %0 : i1 to i32
    %c0_i32_0 = arith.constant 0 : i32
    %2 = arith.cmpi ne, %1, %c0_i32_0 : i32
    scf.if %2 {
      %cst_58 = arith.constant 0.000000e+00 : f32
      %111 = vector.broadcast %cst_58 : f32 to vector<32x256xf32>
      %c0_59 = arith.constant 0 : index
      %c0_60 = arith.constant 0 : index
      %112 = vector.load %arg8[%c0_59, %c0_60] : memref<32x256xf32, #tpu.memory_space<vmem>>, vector<32x256xf32>
      tpu.vector_store %arg8[%c0_59, %c0_60], %111 {strides = array<i32>} : memref<32x256xf32, #tpu.memory_space<vmem>>, vector<32x256xf32>,
      %cst_61 = arith.constant 0.000000e+00 : f32
      %113 = vector.broadcast %cst_61 : f32 to vector<1x256xf32>
      %c0_62 = arith.constant 0 : index
      %c0_63 = arith.constant 0 : index
      %114 = vector.load %arg9[%c0_62, %c0_63] : memref<1x256xf32, #tpu.memory_space<vmem>>, vector<1x256xf32>
      tpu.vector_store %arg9[%c0_62, %c0_63], %113 {strides = array<i32>} : memref<1x256xf32, #tpu.memory_space<vmem>>, vector<1x256xf32>,
    } else {
    }
    %c0 = arith.constant 0 : index
    %c0_1 = arith.constant 0 : index
    %c0_2 = arith.constant 0 : index
    %3 = vector.load %arg2[%c0, %c0_1, %c0_2] : memref<1x3x256xf32, #tpu.memory_space<vmem>>, vector<1x3x256xf32>
    %4 = vector.shape_cast %3 : vector<1x3x256xf32> to vector<3x256xf32>
    %c0_3 = arith.constant 0 : index
    %c0_4 = arith.constant 0 : index
    %5 = vector.load %arg3[%c0_3, %c0_4] : memref<32x3xf32, #tpu.memory_space<vmem>>, vector<32x3xf32>
    %cst = arith.constant dense<0.000000e+00> : vector<32x256xf32>
    %6 = tpu.matmul %5, %4, %cst {dimension_numbers = #tpu.dot_dimension_numbers<[1], [0], [0], [1], [0, 0, 1, 1], [], []>} : vector<32x3xf32>, vector<3x256xf32>, vector<32x256xf32> -> vector<32x256xf32>
    %c0_5 = arith.constant 0 : index
    %c0_6 = arith.constant 0 : index
    %7 = vector.load %arg4[%c0_5, %c0_6] : memref<32x1xf32, #tpu.memory_space<vmem>>, vector<32x1xf32>
    %8 = vector.broadcast %7 : vector<32x1xf32> to vector<32x256xf32>
    %9 = arith.addf %6, %8 : vector<32x256xf32>
    %c0_7 = arith.constant 0 : index
    %c0_8 = arith.constant 0 : index
    %10 = vector.load %arg5[%c0_7, %c0_8] : memref<160x32xbf16, #tpu.memory_space<vmem>>, vector<32x32xbf16>
    %c0_9 = arith.constant 0 : index
    %c0_10 = arith.constant 0 : index
    %11 = vector.load %arg6[%c0_9, %c0_10] : memref<160x1xf32, #tpu.memory_space<vmem>>, vector<32x1xf32>
    %c32 = arith.constant 32 : index
    %c0_11 = arith.constant 0 : index
    %12 = vector.load %arg5[%c32, %c0_11] : memref<160x32xbf16, #tpu.memory_space<vmem>>, vector<32x32xbf16>
    %c32_12 = arith.constant 32 : index
    %c0_13 = arith.constant 0 : index
    %13 = vector.load %arg6[%c32_12, %c0_13] : memref<160x1xf32, #tpu.memory_space<vmem>>, vector<32x1xf32>
    %cst_14 = arith.constant 0.000000e+00 : f32
    %14 = vector.broadcast %cst_14 : f32 to vector<32x256xf32>
    %15 = arith.maximumf %9, %14 : vector<32x256xf32>
    %16 = arith.truncf %15 : vector<32x256xf32> to vector<32x256xbf16>
    %cst_15 = arith.constant dense<0.000000e+00> : vector<32x256xf32>
    %17 = tpu.matmul %10, %16, %cst_15 {dimension_numbers = #tpu.dot_dimension_numbers<[1], [0], [0], [1], [0, 0, 1, 1], [], []>} : vector<32x32xbf16>, vector<32x256xbf16>, vector<32x256xf32> -> vector<32x256xf32>
    %18 = vector.broadcast %11 : vector<32x1xf32> to vector<32x256xf32>
    %19 = arith.addf %17, %18 : vector<32x256xf32>
    %cst_16 = arith.constant 0.000000e+00 : f32
    %20 = vector.broadcast %cst_16 : f32 to vector<32x256xf32>
    %21 = arith.maximumf %19, %20 : vector<32x256xf32>
    %22 = arith.truncf %21 : vector<32x256xf32> to vector<32x256xbf16>
    %cst_17 = arith.constant dense<0.000000e+00> : vector<32x256xf32>
    %23 = tpu.matmul %12, %22, %cst_17 {dimension_numbers = #tpu.dot_dimension_numbers<[1], [0], [0], [1], [0, 0, 1, 1], [], []>} : vector<32x32xbf16>, vector<32x256xbf16>, vector<32x256xf32> -> vector<32x256xf32>
    %24 = vector.broadcast %13 : vector<32x1xf32> to vector<32x256xf32>
    %25 = arith.addf %23, %24 : vector<32x256xf32>
    %26 = arith.addf %9, %25 : vector<32x256xf32>
    %c64 = arith.constant 64 : index
    %c0_18 = arith.constant 0 : index
    %27 = vector.load %arg5[%c64, %c0_18] : memref<160x32xbf16, #tpu.memory_space<vmem>>, vector<32x32xbf16>
    %c64_19 = arith.constant 64 : index
    %c0_20 = arith.constant 0 : index
    %28 = vector.load %arg6[%c64_19, %c0_20] : memref<160x1xf32, #tpu.memory_space<vmem>>, vector<32x1xf32>
    %c96 = arith.constant 96 : index
    %c0_21 = arith.constant 0 : index
    %29 = vector.load %arg5[%c96, %c0_21] : memref<160x32xbf16, #tpu.memory_space<vmem>>, vector<32x32xbf16>
    %c96_22 = arith.constant 96 : index
    %c0_23 = arith.constant 0 : index
    %30 = vector.load %arg6[%c96_22, %c0_23] : memref<160x1xf32, #tpu.memory_space<vmem>>, vector<32x1xf32>
    %cst_24 = arith.constant 0.000000e+00 : f32
    %31 = vector.broadcast %cst_24 : f32 to vector<32x256xf32>
    %32 = arith.maximumf %26, %31 : vector<32x256xf32>
    %33 = arith.truncf %32 : vector<32x256xf32> to vector<32x256xbf16>
    %cst_25 = arith.constant dense<0.000000e+00> : vector<32x256xf32>
    %34 = tpu.matmul %27, %33, %cst_25 {dimension_numbers = #tpu.dot_dimension_numbers<[1], [0], [0], [1], [0, 0, 1, 1], [], []>} : vector<32x32xbf16>, vector<32x256xbf16>, vector<32x256xf32> -> vector<32x256xf32>
    %35 = vector.broadcast %28 : vector<32x1xf32> to vector<32x256xf32>
    %36 = arith.addf %34, %35 : vector<32x256xf32>
    %cst_26 = arith.constant 0.000000e+00 : f32
    %37 = vector.broadcast %cst_26 : f32 to vector<32x256xf32>
    %38 = arith.maximumf %36, %37 : vector<32x256xf32>
    %39 = arith.truncf %38 : vector<32x256xf32> to vector<32x256xbf16>
    %cst_27 = arith.constant dense<0.000000e+00> : vector<32x256xf32>
    %40 = tpu.matmul %29, %39, %cst_27 {dimension_numbers = #tpu.dot_dimension_numbers<[1], [0], [0], [1], [0, 0, 1, 1], [], []>} : vector<32x32xbf16>, vector<32x256xbf16>, vector<32x256xf32> -> vector<32x256xf32>
    %41 = vector.broadcast %30 : vector<32x1xf32> to vector<32x256xf32>
    %42 = arith.addf %40, %41 : vector<32x256xf32>
    %43 = arith.addf %26, %42 : vector<32x256xf32>
    %c128 = arith.constant 128 : index
    %c0_28 = arith.constant 0 : index
    %44 = vector.load %arg5[%c128, %c0_28] : memref<160x32xbf16, #tpu.memory_space<vmem>>, vector<32x32xbf16>
    %45 = arith.truncf %43 : vector<32x256xf32> to vector<32x256xbf16>
    %cst_29 = arith.constant dense<0.000000e+00> : vector<32x256xf32>
    %46 = tpu.matmul %44, %45, %cst_29 {dimension_numbers = #tpu.dot_dimension_numbers<[1], [0], [0], [1], [0, 0, 1, 1], [], []>} : vector<32x32xbf16>, vector<32x256xbf16>, vector<32x256xf32> -> vector<32x256xf32>
    %c128_30 = arith.constant 128 : index
    %c0_31 = arith.constant 0 : index
    %47 = vector.load %arg6[%c128_30, %c0_31] : memref<160x1xf32, #tpu.memory_space<vmem>>, vector<32x1xf32>
    %48 = vector.broadcast %47 : vector<32x1xf32> to vector<32x256xf32>
    %49 = arith.addf %46, %48 : vector<32x256xf32>
    %50 = vector.extract_strided_slice %4 {offsets = [0, 0], sizes = [1, 256], strides = [1, 1]} : vector<3x256xf32> to vector<1x256xf32>
    %cst_32 = arith.constant 1.101000e+00 : f32
    %51 = vector.broadcast %cst_32 : f32 to vector<1x256xf32>
    %52 = arith.divf %50, %51 : vector<1x256xf32>
    %cst_33 = arith.constant 5.000000e-01 : f32
    %53 = vector.broadcast %cst_33 : f32 to vector<1x256xf32>
    %54 = arith.addf %52, %53 : vector<1x256xf32>
    %cst_34 = arith.constant 0.000000e+00 : f32
    %cst_35 = arith.constant 0.999989986 : f32
    %55 = vector.broadcast %cst_34 : f32 to vector<1x256xf32>
    %56 = arith.maximumf %55, %54 : vector<1x256xf32>
    %57 = vector.broadcast %cst_35 : f32 to vector<1x256xf32>
    %58 = arith.minimumf %57, %56 : vector<1x256xf32>
    %cst_36 = arith.constant 1.600000e+01 : f32
    %59 = vector.broadcast %cst_36 : f32 to vector<1x256xf32>
    %60 = arith.mulf %58, %59 : vector<1x256xf32>
    %61 = arith.fptosi %60 : vector<1x256xf32> to vector<1x256xi32>
    %c0_i32_37 = arith.constant 0 : i32
    %c15_i32 = arith.constant 15 : i32
    %62 = vector.broadcast %c0_i32_37 : i32 to vector<1x256xi32>
    %63 = arith.maxsi %62, %61 : vector<1x256xi32>
    %64 = vector.broadcast %c15_i32 : i32 to vector<1x256xi32>
    %65 = arith.minsi %64, %63 : vector<1x256xi32>
    %66 = vector.extract_strided_slice %4 {offsets = [2, 0], sizes = [1, 256], strides = [1, 1]} : vector<3x256xf32> to vector<1x256xf32>
    %cst_38 = arith.constant 1.101000e+00 : f32
    %67 = vector.broadcast %cst_38 : f32 to vector<1x256xf32>
    %68 = arith.divf %66, %67 : vector<1x256xf32>
    %cst_39 = arith.constant 5.000000e-01 : f32
    %69 = vector.broadcast %cst_39 : f32 to vector<1x256xf32>
    %70 = arith.addf %68, %69 : vector<1x256xf32>
    %cst_40 = arith.constant 0.000000e+00 : f32
    %cst_41 = arith.constant 0.999989986 : f32
    %71 = vector.broadcast %cst_40 : f32 to vector<1x256xf32>
    %72 = arith.maximumf %71, %70 : vector<1x256xf32>
    %73 = vector.broadcast %cst_41 : f32 to vector<1x256xf32>
    %74 = arith.minimumf %73, %72 : vector<1x256xf32>
    %cst_42 = arith.constant 1.600000e+01 : f32
    %75 = vector.broadcast %cst_42 : f32 to vector<1x256xf32>
    %76 = arith.mulf %74, %75 : vector<1x256xf32>
    %77 = arith.fptosi %76 : vector<1x256xf32> to vector<1x256xi32>
    %c0_i32_43 = arith.constant 0 : i32
    %c15_i32_44 = arith.constant 15 : i32
    %78 = vector.broadcast %c0_i32_43 : i32 to vector<1x256xi32>
    %79 = arith.maxsi %78, %77 : vector<1x256xi32>
    %80 = vector.broadcast %c15_i32_44 : i32 to vector<1x256xi32>
    %81 = arith.minsi %80, %79 : vector<1x256xi32>
    %c16_i32 = arith.constant 16 : i32
    %82 = vector.broadcast %c16_i32 : i32 to vector<1x256xi32>
    %83 = arith.muli %82, %81 : vector<1x256xi32>
    %84 = arith.addi %65, %83 : vector<1x256xi32>
    %85 = tpu.iota {dimensions = array<i32: 1>} : vector<1x256xi32>
    %c256_i32 = arith.constant 256 : i32
    %86 = arith.muli %arg1, %c256_i32 : i32
    %87 = vector.broadcast %86 : i32 to vector<1x256xi32>
    %88 = arith.addi %87, %85 : vector<1x256xi32>
    %c256_i32_45 = arith.constant 256 : i32
    %89 = vector.broadcast %c256_i32_45 : i32 to vector<1x256xi32>
    %90 = arith.cmpi slt, %88, %89 : vector<1x256xi32>
    %91 = arith.extui %90 : vector<1x256xi1> to vector<1x256xi32>
    %92 = arith.sitofp %91 : vector<1x256xi32> to vector<1x256xf32>
    %93 = tpu.iota {dimensions = array<i32: 0>} : vector<256x256xi32>
    %94 = vector.broadcast %84 : vector<1x256xi32> to vector<256x256xi32>
    %95 = arith.cmpi eq, %93, %94 : vector<256x256xi32>
    %96 = arith.extui %95 : vector<256x256xi1> to vector<256x256xi32>
    %97 = arith.sitofp %96 : vector<256x256xi32> to vector<256x256xf32>
    %c0_46 = arith.constant 0 : index
    %c0_47 = arith.constant 0 : index
    %98 = vector.load %arg8[%c0_46, %c0_47] : memref<32x256xf32, #tpu.memory_space<vmem>>, vector<32x256xf32>
    %99 = vector.broadcast %92 : vector<1x256xf32> to vector<32x256xf32>
    %100 = arith.mulf %49, %99 : vector<32x256xf32>
    %cst_48 = arith.constant dense<0.000000e+00> : vector<32x256xf32>
    %101 = tpu.matmul %100, %97, %cst_48 {dimension_numbers = #tpu.dot_dimension_numbers<[1], [1], [0], [0], [0, 0, 1, 0], [], []>} : vector<32x256xf32>, vector<256x256xf32>, vector<32x256xf32> -> vector<32x256xf32>
    %102 = arith.addf %98, %101 : vector<32x256xf32>
    %c0_49 = arith.constant 0 : index
    %c0_50 = arith.constant 0 : index
    %103 = vector.load %arg8[%c0_49, %c0_50] : memref<32x256xf32, #tpu.memory_space<vmem>>, vector<32x256xf32>
    tpu.vector_store %arg8[%c0_49, %c0_50], %102 {strides = array<i32>} : memref<32x256xf32, #tpu.memory_space<vmem>>, vector<32x256xf32>,
    %c0_51 = arith.constant 0 : index
    %c0_52 = arith.constant 0 : index
    %104 = vector.load %arg9[%c0_51, %c0_52] : memref<1x256xf32, #tpu.memory_space<vmem>>, vector<1x256xf32>
    %cst_53 = arith.constant dense<0.000000e+00> : vector<1x256xf32>
    %105 = tpu.matmul %92, %97, %cst_53 {dimension_numbers = #tpu.dot_dimension_numbers<[1], [1], [0], [0], [0, 0, 1, 0], [], []>} : vector<1x256xf32>, vector<256x256xf32>, vector<1x256xf32> -> vector<1x256xf32>
    %106 = arith.addf %104, %105 : vector<1x256xf32>
    %c0_54 = arith.constant 0 : index
    %c0_55 = arith.constant 0 : index
    %107 = vector.load %arg9[%c0_54, %c0_55] : memref<1x256xf32, #tpu.memory_space<vmem>>, vector<1x256xf32>
    tpu.vector_store %arg9[%c0_54, %c0_55], %106 {strides = array<i32>} : memref<1x256xf32, #tpu.memory_space<vmem>>, vector<1x256xf32>,
    %c0_i32_56 = arith.constant 0 : i32
    %108 = arith.cmpi eq, %arg1, %c0_i32_56 : i32
    %109 = arith.extui %108 : i1 to i32
    %c0_i32_57 = arith.constant 0 : i32
    %110 = arith.cmpi ne, %109, %c0_i32_57 : i32
    scf.if %110 {
      %c0_58 = arith.constant 0 : index
      %c0_59 = arith.constant 0 : index
      %111 = vector.load %arg8[%c0_58, %c0_59] : memref<32x256xf32, #tpu.memory_space<vmem>>, vector<32x256xf32>
      %c0_60 = arith.constant 0 : index
      %c0_61 = arith.constant 0 : index
      %112 = vector.load %arg9[%c0_60, %c0_61] : memref<1x256xf32, #tpu.memory_space<vmem>>, vector<1x256xf32>
      %cst_62 = arith.constant 1.000000e+00 : f32
      %113 = vector.broadcast %cst_62 : f32 to vector<1x256xf32>
      %114 = arith.maximumf %112, %113 : vector<1x256xf32>
      %115 = vector.broadcast %114 : vector<1x256xf32> to vector<32x256xf32>
      %116 = arith.divf %111, %115 : vector<32x256xf32>
      %c0_63 = arith.constant 0 : index
      %c0_64 = arith.constant 0 : index
      %c0_65 = arith.constant 0 : index
      %117 = vector.load %arg7[%c0_63, %c0_64, %c0_65] : memref<1x32x256xf32, #tpu.memory_space<vmem>>, vector<1x32x256xf32>
      %118 = vector.shape_cast %117 : vector<1x32x256xf32> to vector<32x256xf32>
      %119 = vector.shape_cast %116 : vector<32x256xf32> to vector<1x32x256xf32>
      tpu.vector_store %arg7[%c0_63, %c0_64, %c0_65], %119 {strides = array<i32>} : memref<1x32x256xf32, #tpu.memory_space<vmem>>, vector<1x32x256xf32>,
    } else {
    }
    return
  }
  func.func @transform_0(%arg0: i32, %arg1: i32) -> (i32, i32, i32) {
    %c0_i32 = arith.constant 0 : i32
    %c0_i32_0 = arith.constant 0 : i32
    return %arg0, %c0_i32, %arg1 : i32, i32, i32
  }
  func.func @transform_1(%arg0: i32, %arg1: i32) -> (i32, i32) {
    %c0_i32 = arith.constant 0 : i32
    %c0_i32_0 = arith.constant 0 : i32
    %c0_i32_1 = arith.constant 0 : i32
    return %c0_i32, %c0_i32_0 : i32, i32
  }
  func.func @transform_2(%arg0: i32, %arg1: i32) -> (i32, i32) {
    %c0_i32 = arith.constant 0 : i32
    %c0_i32_0 = arith.constant 0 : i32
    %c0_i32_1 = arith.constant 0 : i32
    return %c0_i32, %c0_i32_0 : i32, i32
  }
  func.func @transform_3(%arg0: i32, %arg1: i32) -> (i32, i32) {
    %c0_i32 = arith.constant 0 : i32
    %c0_i32_0 = arith.constant 0 : i32
    %c0_i32_1 = arith.constant 0 : i32
    return %c0_i32, %c0_i32_0 : i32, i32
  }
  func.func @transform_4(%arg0: i32, %arg1: i32) -> (i32, i32) {
    %c0_i32 = arith.constant 0 : i32
    %c0_i32_0 = arith.constant 0 : i32
    %c0_i32_1 = arith.constant 0 : i32
    return %c0_i32, %c0_i32_0 : i32, i32
  }
  func.func @transform_5(%arg0: i32, %arg1: i32) -> (i32, i32, i32) {
    %c0_i32 = arith.constant 0 : i32
    %c0_i32_0 = arith.constant 0 : i32
    %c0_i32_1 = arith.constant 0 : i32
    return %arg0, %c0_i32, %c0_i32_0 : i32, i32, i32
  }
}

module attributes {stable_mosaic.version = 11 : i64} {
  func.func @_decoder_kernel(%arg0: i32, %arg1: i32, %arg2: memref<1x3x256xf32, #tpu.memory_space<vmem>>, %arg3: memref<1x32x256xf32, #tpu.memory_space<vmem>>, %arg4: memref<64x3xf32, #tpu.memory_space<vmem>>, %arg5: memref<64x32xbf16, #tpu.memory_space<vmem>>, %arg6: memref<64x1xf32, #tpu.memory_space<vmem>>, %arg7: memref<128x32xbf16, #tpu.memory_space<vmem>>, %arg8: memref<128x1xf32, #tpu.memory_space<vmem>>, %arg9: memref<32x1xf32, #tpu.memory_space<vmem>>, %arg10: memref<1x1xf32, #tpu.memory_space<vmem>>, %arg11: memref<1x1x256xf32, #tpu.memory_space<vmem>>) attributes {dimension_semantics = [#tpu.dimension_semantics<parallel>, #tpu.dimension_semantics<parallel>], iteration_bounds = array<i64: 2, 1>, scalar_prefetch = 0 : i64, scratch_operands = 0 : i64, tpu.core_type = #tpu.core_type<tc>, window_params = [{transform_indices = @transform_0, window_bounds = array<i64: 1, 3, 256>}, {transform_indices = @transform_1, window_bounds = array<i64: 1, 32, 256>}, {pipeline_mode = #tpu.pipeline_mode<synchronous>, transform_indices = @transform_2, window_bounds = array<i64: 64, 3>}, {pipeline_mode = #tpu.pipeline_mode<synchronous>, transform_indices = @transform_3, window_bounds = array<i64: 64, 32>}, {pipeline_mode = #tpu.pipeline_mode<synchronous>, transform_indices = @transform_4, window_bounds = array<i64: 64, 1>}, {pipeline_mode = #tpu.pipeline_mode<synchronous>, transform_indices = @transform_5, window_bounds = array<i64: 128, 32>}, {pipeline_mode = #tpu.pipeline_mode<synchronous>, transform_indices = @transform_6, window_bounds = array<i64: 128, 1>}, {pipeline_mode = #tpu.pipeline_mode<synchronous>, transform_indices = @transform_7, window_bounds = array<i64: 32, 1>}, {pipeline_mode = #tpu.pipeline_mode<synchronous>, transform_indices = @transform_8, window_bounds = array<i64: 1, 1>}, {transform_indices = @transform_9, window_bounds = array<i64: 1, 1, 256>}]} {
    %c0 = arith.constant 0 : index
    %c0_0 = arith.constant 0 : index
    %c0_1 = arith.constant 0 : index
    %0 = vector.load %arg2[%c0, %c0_0, %c0_1] : memref<1x3x256xf32, #tpu.memory_space<vmem>>, vector<1x3x256xf32>
    %1 = vector.shape_cast %0 : vector<1x3x256xf32> to vector<3x256xf32>
    %c0_2 = arith.constant 0 : index
    %c0_3 = arith.constant 0 : index
    %c0_4 = arith.constant 0 : index
    %2 = vector.load %arg3[%c0_2, %c0_3, %c0_4] : memref<1x32x256xf32, #tpu.memory_space<vmem>>, vector<1x32x256xf32>
    %3 = vector.shape_cast %2 : vector<1x32x256xf32> to vector<32x256xf32>
    %4 = vector.extract_strided_slice %1 {offsets = [0, 0], sizes = [1, 256], strides = [1, 1]} : vector<3x256xf32> to vector<1x256xf32>
    %cst = arith.constant 1.101000e+00 : f32
    %5 = vector.broadcast %cst : f32 to vector<1x256xf32>
    %6 = arith.divf %4, %5 : vector<1x256xf32>
    %cst_5 = arith.constant 5.000000e-01 : f32
    %7 = vector.broadcast %cst_5 : f32 to vector<1x256xf32>
    %8 = arith.addf %6, %7 : vector<1x256xf32>
    %cst_6 = arith.constant 0.000000e+00 : f32
    %cst_7 = arith.constant 0.999989986 : f32
    %9 = vector.broadcast %cst_6 : f32 to vector<1x256xf32>
    %10 = arith.maximumf %9, %8 : vector<1x256xf32>
    %11 = vector.broadcast %cst_7 : f32 to vector<1x256xf32>
    %12 = arith.minimumf %11, %10 : vector<1x256xf32>
    %13 = vector.extract_strided_slice %1 {offsets = [2, 0], sizes = [1, 256], strides = [1, 1]} : vector<3x256xf32> to vector<1x256xf32>
    %cst_8 = arith.constant 1.101000e+00 : f32
    %14 = vector.broadcast %cst_8 : f32 to vector<1x256xf32>
    %15 = arith.divf %13, %14 : vector<1x256xf32>
    %cst_9 = arith.constant 5.000000e-01 : f32
    %16 = vector.broadcast %cst_9 : f32 to vector<1x256xf32>
    %17 = arith.addf %15, %16 : vector<1x256xf32>
    %cst_10 = arith.constant 0.000000e+00 : f32
    %cst_11 = arith.constant 0.999989986 : f32
    %18 = vector.broadcast %cst_10 : f32 to vector<1x256xf32>
    %19 = arith.maximumf %18, %17 : vector<1x256xf32>
    %20 = vector.broadcast %cst_11 : f32 to vector<1x256xf32>
    %21 = arith.minimumf %20, %19 : vector<1x256xf32>
    %cst_12 = arith.constant 1.500000e+01 : f32
    %22 = vector.broadcast %cst_12 : f32 to vector<1x256xf32>
    %23 = arith.mulf %12, %22 : vector<1x256xf32>
    %cst_13 = arith.constant 1.500000e+01 : f32
    %24 = vector.broadcast %cst_13 : f32 to vector<1x256xf32>
    %25 = arith.mulf %21, %24 : vector<1x256xf32>
    %26 = math.floor %23 : vector<1x256xf32>
    %27 = math.floor %25 : vector<1x256xf32>
    %28 = arith.subf %23, %26 : vector<1x256xf32>
    %29 = arith.subf %25, %27 : vector<1x256xf32>
    %c0_i32 = arith.constant 0 : i32
    %c15_i32 = arith.constant 15 : i32
    %30 = arith.sitofp %c0_i32 : i32 to f32
    %31 = vector.broadcast %30 : f32 to vector<1x256xf32>
    %32 = arith.maximumf %31, %26 : vector<1x256xf32>
    %33 = arith.sitofp %c15_i32 : i32 to f32
    %34 = vector.broadcast %33 : f32 to vector<1x256xf32>
    %35 = arith.minimumf %34, %32 : vector<1x256xf32>
    %36 = arith.fptosi %35 : vector<1x256xf32> to vector<1x256xi32>
    %cst_14 = arith.constant 1.000000e+00 : f32
    %37 = vector.broadcast %cst_14 : f32 to vector<1x256xf32>
    %38 = arith.addf %26, %37 : vector<1x256xf32>
    %c0_i32_15 = arith.constant 0 : i32
    %c15_i32_16 = arith.constant 15 : i32
    %39 = arith.sitofp %c0_i32_15 : i32 to f32
    %40 = vector.broadcast %39 : f32 to vector<1x256xf32>
    %41 = arith.maximumf %40, %38 : vector<1x256xf32>
    %42 = arith.sitofp %c15_i32_16 : i32 to f32
    %43 = vector.broadcast %42 : f32 to vector<1x256xf32>
    %44 = arith.minimumf %43, %41 : vector<1x256xf32>
    %45 = arith.fptosi %44 : vector<1x256xf32> to vector<1x256xi32>
    %c0_i32_17 = arith.constant 0 : i32
    %c15_i32_18 = arith.constant 15 : i32
    %46 = arith.sitofp %c0_i32_17 : i32 to f32
    %47 = vector.broadcast %46 : f32 to vector<1x256xf32>
    %48 = arith.maximumf %47, %27 : vector<1x256xf32>
    %49 = arith.sitofp %c15_i32_18 : i32 to f32
    %50 = vector.broadcast %49 : f32 to vector<1x256xf32>
    %51 = arith.minimumf %50, %48 : vector<1x256xf32>
    %52 = arith.fptosi %51 : vector<1x256xf32> to vector<1x256xi32>
    %cst_19 = arith.constant 1.000000e+00 : f32
    %53 = vector.broadcast %cst_19 : f32 to vector<1x256xf32>
    %54 = arith.addf %27, %53 : vector<1x256xf32>
    %c0_i32_20 = arith.constant 0 : i32
    %c15_i32_21 = arith.constant 15 : i32
    %55 = arith.sitofp %c0_i32_20 : i32 to f32
    %56 = vector.broadcast %55 : f32 to vector<1x256xf32>
    %57 = arith.maximumf %56, %54 : vector<1x256xf32>
    %58 = arith.sitofp %c15_i32_21 : i32 to f32
    %59 = vector.broadcast %58 : f32 to vector<1x256xf32>
    %60 = arith.minimumf %59, %57 : vector<1x256xf32>
    %61 = arith.fptosi %60 : vector<1x256xf32> to vector<1x256xi32>
    %62 = tpu.iota {dimensions = array<i32: 0>} : vector<256x256xi32>
    %cst_22 = arith.constant 1.000000e+00 : f32
    %63 = vector.broadcast %cst_22 : f32 to vector<1x256xf32>
    %64 = arith.subf %63, %28 : vector<1x256xf32>
    %cst_23 = arith.constant 1.000000e+00 : f32
    %65 = vector.broadcast %cst_23 : f32 to vector<1x256xf32>
    %66 = arith.subf %65, %29 : vector<1x256xf32>
    %67 = arith.mulf %64, %66 : vector<1x256xf32>
    %c16_i32 = arith.constant 16 : i32
    %68 = vector.broadcast %c16_i32 : i32 to vector<1x256xi32>
    %69 = arith.muli %68, %52 : vector<1x256xi32>
    %70 = arith.addi %36, %69 : vector<1x256xi32>
    %71 = vector.broadcast %70 : vector<1x256xi32> to vector<256x256xi32>
    %72 = arith.cmpi eq, %62, %71 : vector<256x256xi32>
    %73 = arith.extui %72 : vector<256x256xi1> to vector<256x256xi32>
    %74 = arith.sitofp %73 : vector<256x256xi32> to vector<256x256xf32>
    %75 = vector.broadcast %67 : vector<1x256xf32> to vector<256x256xf32>
    %76 = arith.mulf %74, %75 : vector<256x256xf32>
    %cst_24 = arith.constant 1.000000e+00 : f32
    %77 = vector.broadcast %cst_24 : f32 to vector<1x256xf32>
    %78 = arith.subf %77, %29 : vector<1x256xf32>
    %79 = arith.mulf %28, %78 : vector<1x256xf32>
    %c16_i32_25 = arith.constant 16 : i32
    %80 = vector.broadcast %c16_i32_25 : i32 to vector<1x256xi32>
    %81 = arith.muli %80, %52 : vector<1x256xi32>
    %82 = arith.addi %45, %81 : vector<1x256xi32>
    %83 = vector.broadcast %82 : vector<1x256xi32> to vector<256x256xi32>
    %84 = arith.cmpi eq, %62, %83 : vector<256x256xi32>
    %85 = arith.extui %84 : vector<256x256xi1> to vector<256x256xi32>
    %86 = arith.sitofp %85 : vector<256x256xi32> to vector<256x256xf32>
    %87 = vector.broadcast %79 : vector<1x256xf32> to vector<256x256xf32>
    %88 = arith.mulf %86, %87 : vector<256x256xf32>
    %89 = arith.addf %76, %88 : vector<256x256xf32>
    %cst_26 = arith.constant 1.000000e+00 : f32
    %90 = vector.broadcast %cst_26 : f32 to vector<1x256xf32>
    %91 = arith.subf %90, %28 : vector<1x256xf32>
    %92 = arith.mulf %91, %29 : vector<1x256xf32>
    %c16_i32_27 = arith.constant 16 : i32
    %93 = vector.broadcast %c16_i32_27 : i32 to vector<1x256xi32>
    %94 = arith.muli %93, %61 : vector<1x256xi32>
    %95 = arith.addi %36, %94 : vector<1x256xi32>
    %96 = vector.broadcast %95 : vector<1x256xi32> to vector<256x256xi32>
    %97 = arith.cmpi eq, %62, %96 : vector<256x256xi32>
    %98 = arith.extui %97 : vector<256x256xi1> to vector<256x256xi32>
    %99 = arith.sitofp %98 : vector<256x256xi32> to vector<256x256xf32>
    %100 = vector.broadcast %92 : vector<1x256xf32> to vector<256x256xf32>
    %101 = arith.mulf %99, %100 : vector<256x256xf32>
    %102 = arith.addf %89, %101 : vector<256x256xf32>
    %103 = arith.mulf %28, %29 : vector<1x256xf32>
    %c16_i32_28 = arith.constant 16 : i32
    %104 = vector.broadcast %c16_i32_28 : i32 to vector<1x256xi32>
    %105 = arith.muli %104, %61 : vector<1x256xi32>
    %106 = arith.addi %45, %105 : vector<1x256xi32>
    %107 = vector.broadcast %106 : vector<1x256xi32> to vector<256x256xi32>
    %108 = arith.cmpi eq, %62, %107 : vector<256x256xi32>
    %109 = arith.extui %108 : vector<256x256xi1> to vector<256x256xi32>
    %110 = arith.sitofp %109 : vector<256x256xi32> to vector<256x256xf32>
    %111 = vector.broadcast %103 : vector<1x256xf32> to vector<256x256xf32>
    %112 = arith.mulf %110, %111 : vector<256x256xf32>
    %113 = arith.addf %102, %112 : vector<256x256xf32>
    %cst_29 = arith.constant dense<0.000000e+00> : vector<32x256xf32>
    %114 = tpu.matmul %3, %113, %cst_29 {dimension_numbers = #tpu.dot_dimension_numbers<[1], [0], [0], [1], [0, 0, 1, 1], [], []>} : vector<32x256xf32>, vector<256x256xf32>, vector<32x256xf32> -> vector<32x256xf32>
    %c0_30 = arith.constant 0 : index
    %c0_31 = arith.constant 0 : index
    %115 = vector.load %arg4[%c0_30, %c0_31] : memref<64x3xf32, #tpu.memory_space<vmem>>, vector<64x3xf32>
    %cst_32 = arith.constant dense<0.000000e+00> : vector<64x256xf32>
    %116 = tpu.matmul %115, %1, %cst_32 {dimension_numbers = #tpu.dot_dimension_numbers<[1], [0], [0], [1], [0, 0, 1, 1], [], []>} : vector<64x3xf32>, vector<3x256xf32>, vector<64x256xf32> -> vector<64x256xf32>
    %c0_33 = arith.constant 0 : index
    %c0_34 = arith.constant 0 : index
    %117 = vector.load %arg5[%c0_33, %c0_34] : memref<64x32xbf16, #tpu.memory_space<vmem>>, vector<64x32xbf16>
    %118 = arith.truncf %114 : vector<32x256xf32> to vector<32x256xbf16>
    %cst_35 = arith.constant dense<0.000000e+00> : vector<64x256xf32>
    %119 = tpu.matmul %117, %118, %cst_35 {dimension_numbers = #tpu.dot_dimension_numbers<[1], [0], [0], [1], [0, 0, 1, 1], [], []>} : vector<64x32xbf16>, vector<32x256xbf16>, vector<64x256xf32> -> vector<64x256xf32>
    %120 = arith.addf %116, %119 : vector<64x256xf32>
    %c0_36 = arith.constant 0 : index
    %c0_37 = arith.constant 0 : index
    %121 = vector.load %arg6[%c0_36, %c0_37] : memref<64x1xf32, #tpu.memory_space<vmem>>, vector<64x1xf32>
    %122 = vector.broadcast %121 : vector<64x1xf32> to vector<64x256xf32>
    %123 = arith.addf %120, %122 : vector<64x256xf32>
    %124 = vector.extract_strided_slice %123 {offsets = [0, 0], sizes = [32, 256], strides = [1, 1]} : vector<64x256xf32> to vector<32x256xf32>
    %125 = vector.extract_strided_slice %123 {offsets = [32, 0], sizes = [32, 256], strides = [1, 1]} : vector<64x256xf32> to vector<32x256xf32>
    %c0_38 = arith.constant 0 : index
    %c0_39 = arith.constant 0 : index
    %126 = vector.load %arg7[%c0_38, %c0_39] : memref<128x32xbf16, #tpu.memory_space<vmem>>, vector<32x32xbf16>
    %c0_40 = arith.constant 0 : index
    %c0_41 = arith.constant 0 : index
    %127 = vector.load %arg8[%c0_40, %c0_41] : memref<128x1xf32, #tpu.memory_space<vmem>>, vector<32x1xf32>
    %c32 = arith.constant 32 : index
    %c0_42 = arith.constant 0 : index
    %128 = vector.load %arg7[%c32, %c0_42] : memref<128x32xbf16, #tpu.memory_space<vmem>>, vector<32x32xbf16>
    %c32_43 = arith.constant 32 : index
    %c0_44 = arith.constant 0 : index
    %129 = vector.load %arg8[%c32_43, %c0_44] : memref<128x1xf32, #tpu.memory_space<vmem>>, vector<32x1xf32>
    %cst_45 = arith.constant 0.000000e+00 : f32
    %130 = vector.broadcast %cst_45 : f32 to vector<32x256xf32>
    %131 = arith.maximumf %124, %130 : vector<32x256xf32>
    %132 = arith.truncf %131 : vector<32x256xf32> to vector<32x256xbf16>
    %cst_46 = arith.constant dense<0.000000e+00> : vector<32x256xf32>
    %133 = tpu.matmul %126, %132, %cst_46 {dimension_numbers = #tpu.dot_dimension_numbers<[1], [0], [0], [1], [0, 0, 1, 1], [], []>} : vector<32x32xbf16>, vector<32x256xbf16>, vector<32x256xf32> -> vector<32x256xf32>
    %134 = vector.broadcast %127 : vector<32x1xf32> to vector<32x256xf32>
    %135 = arith.addf %133, %134 : vector<32x256xf32>
    %cst_47 = arith.constant 0.000000e+00 : f32
    %136 = vector.broadcast %cst_47 : f32 to vector<32x256xf32>
    %137 = arith.maximumf %135, %136 : vector<32x256xf32>
    %138 = arith.truncf %137 : vector<32x256xf32> to vector<32x256xbf16>
    %cst_48 = arith.constant dense<0.000000e+00> : vector<32x256xf32>
    %139 = tpu.matmul %128, %138, %cst_48 {dimension_numbers = #tpu.dot_dimension_numbers<[1], [0], [0], [1], [0, 0, 1, 1], [], []>} : vector<32x32xbf16>, vector<32x256xbf16>, vector<32x256xf32> -> vector<32x256xf32>
    %140 = vector.broadcast %129 : vector<32x1xf32> to vector<32x256xf32>
    %141 = arith.addf %139, %140 : vector<32x256xf32>
    %142 = arith.addf %124, %141 : vector<32x256xf32>
    %143 = arith.addf %142, %125 : vector<32x256xf32>
    %c64 = arith.constant 64 : index
    %c0_49 = arith.constant 0 : index
    %144 = vector.load %arg7[%c64, %c0_49] : memref<128x32xbf16, #tpu.memory_space<vmem>>, vector<32x32xbf16>
    %c64_50 = arith.constant 64 : index
    %c0_51 = arith.constant 0 : index
    %145 = vector.load %arg8[%c64_50, %c0_51] : memref<128x1xf32, #tpu.memory_space<vmem>>, vector<32x1xf32>
    %c96 = arith.constant 96 : index
    %c0_52 = arith.constant 0 : index
    %146 = vector.load %arg7[%c96, %c0_52] : memref<128x32xbf16, #tpu.memory_space<vmem>>, vector<32x32xbf16>
    %c96_53 = arith.constant 96 : index
    %c0_54 = arith.constant 0 : index
    %147 = vector.load %arg8[%c96_53, %c0_54] : memref<128x1xf32, #tpu.memory_space<vmem>>, vector<32x1xf32>
    %cst_55 = arith.constant 0.000000e+00 : f32
    %148 = vector.broadcast %cst_55 : f32 to vector<32x256xf32>
    %149 = arith.maximumf %143, %148 : vector<32x256xf32>
    %150 = arith.truncf %149 : vector<32x256xf32> to vector<32x256xbf16>
    %cst_56 = arith.constant dense<0.000000e+00> : vector<32x256xf32>
    %151 = tpu.matmul %144, %150, %cst_56 {dimension_numbers = #tpu.dot_dimension_numbers<[1], [0], [0], [1], [0, 0, 1, 1], [], []>} : vector<32x32xbf16>, vector<32x256xbf16>, vector<32x256xf32> -> vector<32x256xf32>
    %152 = vector.broadcast %145 : vector<32x1xf32> to vector<32x256xf32>
    %153 = arith.addf %151, %152 : vector<32x256xf32>
    %cst_57 = arith.constant 0.000000e+00 : f32
    %154 = vector.broadcast %cst_57 : f32 to vector<32x256xf32>
    %155 = arith.maximumf %153, %154 : vector<32x256xf32>
    %156 = arith.truncf %155 : vector<32x256xf32> to vector<32x256xbf16>
    %cst_58 = arith.constant dense<0.000000e+00> : vector<32x256xf32>
    %157 = tpu.matmul %146, %156, %cst_58 {dimension_numbers = #tpu.dot_dimension_numbers<[1], [0], [0], [1], [0, 0, 1, 1], [], []>} : vector<32x32xbf16>, vector<32x256xbf16>, vector<32x256xf32> -> vector<32x256xf32>
    %158 = vector.broadcast %147 : vector<32x1xf32> to vector<32x256xf32>
    %159 = arith.addf %157, %158 : vector<32x256xf32>
    %160 = arith.addf %143, %159 : vector<32x256xf32>
    %c0_59 = arith.constant 0 : index
    %c0_60 = arith.constant 0 : index
    %161 = vector.load %arg9[%c0_59, %c0_60] : memref<32x1xf32, #tpu.memory_space<vmem>>, vector<32x1xf32>
    %cst_61 = arith.constant 0.000000e+00 : f32
    %162 = vector.broadcast %cst_61 : f32 to vector<32x256xf32>
    %163 = arith.maximumf %160, %162 : vector<32x256xf32>
    %164 = vector.broadcast %161 : vector<32x1xf32> to vector<32x256xf32>
    %165 = arith.mulf %164, %163 : vector<32x256xf32>
    %cst_62 = arith.constant dense<0.000000e+00> : vector<256xf32>
    %166 = vector.multi_reduction <add>, %165, %cst_62 [0] : vector<32x256xf32> to vector<256xf32>
    %167 = vector.shape_cast %166 : vector<256xf32> to vector<1x256xf32>
    %c0_63 = arith.constant 0 : index
    %c0_64 = arith.constant 0 : index
    %168 = vector.load %arg10[%c0_63, %c0_64] : memref<1x1xf32, #tpu.memory_space<vmem>>, vector<1x1xf32>
    %169 = vector.broadcast %168 : vector<1x1xf32> to vector<1x256xf32>
    %170 = arith.addf %167, %169 : vector<1x256xf32>
    %c0_65 = arith.constant 0 : index
    %c0_66 = arith.constant 0 : index
    %c0_67 = arith.constant 0 : index
    %171 = vector.load %arg11[%c0_65, %c0_66, %c0_67] : memref<1x1x256xf32, #tpu.memory_space<vmem>>, vector<1x1x256xf32>
    %172 = vector.shape_cast %171 : vector<1x1x256xf32> to vector<1x256xf32>
    %173 = vector.shape_cast %170 : vector<1x256xf32> to vector<1x1x256xf32>
    tpu.vector_store %arg11[%c0_65, %c0_66, %c0_67], %173 {strides = array<i32>} : memref<1x1x256xf32, #tpu.memory_space<vmem>>, vector<1x1x256xf32>,
    return
  }
  func.func @transform_0(%arg0: i32, %arg1: i32) -> (i32, i32, i32) {
    %c0_i32 = arith.constant 0 : i32
    %c0_i32_0 = arith.constant 0 : i32
    return %arg0, %c0_i32, %arg1 : i32, i32, i32
  }
  func.func @transform_1(%arg0: i32, %arg1: i32) -> (i32, i32, i32) {
    %c0_i32 = arith.constant 0 : i32
    %c0_i32_0 = arith.constant 0 : i32
    %c0_i32_1 = arith.constant 0 : i32
    return %arg0, %c0_i32, %c0_i32_0 : i32, i32, i32
  }
  func.func @transform_2(%arg0: i32, %arg1: i32) -> (i32, i32) {
    %c0_i32 = arith.constant 0 : i32
    %c0_i32_0 = arith.constant 0 : i32
    %c0_i32_1 = arith.constant 0 : i32
    return %c0_i32, %c0_i32_0 : i32, i32
  }
  func.func @transform_3(%arg0: i32, %arg1: i32) -> (i32, i32) {
    %c0_i32 = arith.constant 0 : i32
    %c0_i32_0 = arith.constant 0 : i32
    %c0_i32_1 = arith.constant 0 : i32
    return %c0_i32, %c0_i32_0 : i32, i32
  }
  func.func @transform_4(%arg0: i32, %arg1: i32) -> (i32, i32) {
    %c0_i32 = arith.constant 0 : i32
    %c0_i32_0 = arith.constant 0 : i32
    %c0_i32_1 = arith.constant 0 : i32
    return %c0_i32, %c0_i32_0 : i32, i32
  }
  func.func @transform_5(%arg0: i32, %arg1: i32) -> (i32, i32) {
    %c0_i32 = arith.constant 0 : i32
    %c0_i32_0 = arith.constant 0 : i32
    %c0_i32_1 = arith.constant 0 : i32
    return %c0_i32, %c0_i32_0 : i32, i32
  }
  func.func @transform_6(%arg0: i32, %arg1: i32) -> (i32, i32) {
    %c0_i32 = arith.constant 0 : i32
    %c0_i32_0 = arith.constant 0 : i32
    %c0_i32_1 = arith.constant 0 : i32
    return %c0_i32, %c0_i32_0 : i32, i32
  }
  func.func @transform_7(%arg0: i32, %arg1: i32) -> (i32, i32) {
    %c0_i32 = arith.constant 0 : i32
    %c0_i32_0 = arith.constant 0 : i32
    %c0_i32_1 = arith.constant 0 : i32
    return %c0_i32, %c0_i32_0 : i32, i32
  }
  func.func @transform_8(%arg0: i32, %arg1: i32) -> (i32, i32) {
    %c0_i32 = arith.constant 0 : i32
    %c0_i32_0 = arith.constant 0 : i32
    %c0_i32_1 = arith.constant 0 : i32
    return %c0_i32, %c0_i32_0 : i32, i32
  }
  func.func @transform_9(%arg0: i32, %arg1: i32) -> (i32, i32, i32) {
    %c0_i32 = arith.constant 0 : i32
    %c0_i32_0 = arith.constant 0 : i32
    return %arg0, %c0_i32, %arg1 : i32, i32, i32
  }
}

</mosaic_0001>

<llo_original>
// kernel: conv_onet_forward.2
$region0: #{conv_onet_forward.2}
  #allocation0 [shape = 'u32[]', space=smem, size = 0x4, offset = 0x4, fixed_abs, tag = 'smem constant byte address 0x4 - core index']
  #allocation1 [shape = 'u32[144,128]{1,0:T(1,128)}', space=vmem, size = 0x12000, scoped, tag = 'internal scratch']
  #allocation2 [shape = 'f32[32,256]{1,0:T(8,128)}', space=vmem, size = 0x8000, scoped, tag = 'scratch operand']
  #allocation3 [shape = 'f32[1,256]{1,0:T(1,128)}', space=vmem, size = 0x400, scoped, tag = 'scratch operand']
  %s0 = inlined_call_operand.vmem [shape: f32[2,3,256], index: 0, kind: input, shape index: {}]
  %s1 = inlined_call_operand.vmem [shape: f32[32,3], index: 1, kind: input, shape index: {}]
  %s2 = inlined_call_operand.vmem [shape: f32[32,1], index: 2, kind: input, shape index: {}]
  %s3 = inlined_call_operand.vmem [shape: bf16[160,32], index: 3, kind: input, shape index: {}]
  %s4 = inlined_call_operand.vmem [shape: f32[160,1], index: 4, kind: input, shape index: {}]
  %s5 = inlined_call_operand.vmem [shape: f32[2,32,256], index: 5, kind: output, shape index: {}]
  %s6 = sld [smem:[#allocation0]]
  $region61: #{conv_onet_forward.2} parent=0
    _
  %s8 = ssub.s32 1, %s6
  %s9 = scalar_select 0, %s8, %s6
  loop: start=0, step=1, limit=4
  $region2: #{conv_onet_forward.2} parent=0 // loop_pre_header
    _
  $region3: #{conv_onet_forward.2} parent=0 // loop_header
    %s11 = sphi 0, %s15
    %p12 = scmp.ge.s32.totalorder %s11, 4
    %s18 = sphi 0, %s30
    %s19 = sphi 0, %s26
    %s20 = sphi 0, %s18
    %s21 = sphi 0, %s19
    %s22 = sphi 0, %s20
    %s23 = sphi 0, %s21
    %s35 = sphi 0, %s37
    %s38 = sphi 0, %s35
    %s39 = sphi 0, %s38
    %s55 = sphi 0, %s39
    %s59 = sphi 0, %s59
    %s61 = sphi 0, %s59
    %s62 = sphi 0, %s61
    %s76 = sphi 0, %s62
    %s80 = sphi 0, %s80
    %s82 = sphi 0, %s80
    %s83 = sphi 0, %s82
    %s97 = sphi 0, %s83
    %s101 = sphi 0, %s101
    %s103 = sphi 0, %s101
    %s104 = sphi 0, %s103
    %s118 = sphi 0, %s104
    %s122 = sphi 0, %s122
    %s124 = sphi 0, %s122
    %s125 = sphi 0, %s124
    %s139 = sphi 0, %s125
    %s145 = sphi 0, %s147
    %s148 = sphi 0, %s145
    %s149 = sphi 0, %s148
    %s165 = sphi 0, %s149
  $region4: #{conv_onet_forward.2} parent=0 // loop_header_branch
    %14 = sbr.rel (%p12) target = $region8
  $region5: #{conv_onet_forward.2} parent=0 // loop_body
    %s16 = ssub.s32 %s11, 1
    %s17 = ssub.s32 %s11, 2
    %s24 = sadd.s32 1, %s19
    %p25 = scmp.ge.s32.totalorder %s24, 1
    %s26 = scalar_select %p25, 0, %s24
    %s27 = sadd.s32 1, %s18
    %s28 = scalar_select %p25, %s27, %s18
    %p29 = scmp.ge.s32.totalorder %s28, 2
    %s30 = scalar_select %p29, 0, %s28
    %s31 = ssub.s32 %s18, %s30
    %s32 = ssub.s32 %s19, %s26
    %s33 = sor.u32 %s31, %s32
    %p34 = scmp.eq.s32.totalorder %s33, 0
    %s36 = sadd.s32 %s35, 1
    %s37 = scalar_select %p34, %s35, %s36
    %p40 = pneg %p34
    %p41 = scmp.eq.s32.totalorder %s11, 1
    %p42 = por %p40, %p41
    %p43 = scmp.ne.s32.totalorder %s35, %s38
    %p44 = scmp.eq.s32.totalorder %s11, 0
    %p45 = por %p43, %p44
    %p46 = scmp.ne.s32.totalorder %s35, %s38
    %p47 = scmp.eq.s32.totalorder %s16, 1
    %p48 = por %p46, %p47
    %p49 = scmp.ne.s32.totalorder %s38, %s39
    %p50 = scmp.eq.s32.totalorder %s16, 0
    %p51 = por %p49, %p50
    %p52 = scmp.ne.s32.totalorder %s38, %s39
    %p53 = scmp.eq.s32.totalorder %s17, 1
    %p54 = por %p52, %p53
    %p56 = scmp.ne.s32.totalorder %s39, %s55
    %p57 = scmp.eq.s32.totalorder %s17, 0
    %p58 = por %p56, %p57
    %s60 = sadd.s32 %s59, 1
    %p63 = scmp.eq.s32.totalorder %s11, 1
    %p64 = scmp.ne.s32.totalorder %s59, %s61
    %p65 = scmp.eq.s32.totalorder %s11, 0
    %p66 = por %p64, %p65
    %p67 = scmp.ne.s32.totalorder %s59, %s61
    %p68 = scmp.eq.s32.totalorder %s16, 1
    %p69 = por %p67, %p68
    %p70 = scmp.ne.s32.totalorder %s61, %s62
    %p71 = scmp.eq.s32.totalorder %s16, 0
    %p72 = por %p70, %p71
    %p73 = scmp.ne.s32.totalorder %s61, %s62
    %p74 = scmp.eq.s32.totalorder %s17, 1
    %p75 = por %p73, %p74
    %p77 = scmp.ne.s32.totalorder %s62, %s76
    %p78 = scmp.eq.s32.totalorder %s17, 0
    %p79 = por %p77, %p78
    %s81 = sadd.s32 %s80, 1
    %p84 = scmp.eq.s32.totalorder %s11, 1
    %p85 = scmp.ne.s32.totalorder %s80, %s82
    %p86 = scmp.eq.s32.totalorder %s11, 0
    %p87 = por %p85, %p86
    %p88 = scmp.ne.s32.totalorder %s80, %s82
    %p89 = scmp.eq.s32.totalorder %s16, 1
    %p90 = por %p88, %p89
    %p91 = scmp.ne.s32.totalorder %s82, %s83
    %p92 = scmp.eq.s32.totalorder %s16, 0
    %p93 = por %p91, %p92
    %p94 = scmp.ne.s32.totalorder %s82, %s83
    %p95 = scmp.eq.s32.totalorder %s17, 1
    %p96 = por %p94, %p95
    %p98 = scmp.ne.s32.totalorder %s83, %s97
    %p99 = scmp.eq.s32.totalorder %s17, 0
    %p100 = por %p98, %p99
    %s102 = sadd.s32 %s101, 1
    %p105 = scmp.eq.s32.totalorder %s11, 1
    %p106 = scmp.ne.s32.totalorder %s101, %s103
    %p107 = scmp.eq.s32.totalorder %s11, 0
    %p108 = por %p106, %p107
    %p109 = scmp.ne.s32.totalorder %s101, %s103
    %p110 = scmp.eq.s32.totalorder %s16, 1
    %p111 = por %p109, %p110
    %p112 = scmp.ne.s32.totalorder %s103, %s104
    %p113 = scmp.eq.s32.totalorder %s16, 0
    %p114 = por %p112, %p113
    %p115 = scmp.ne.s32.totalorder %s103, %s104
    %p116 = scmp.eq.s32.totalorder %s17, 1
    %p117 = por %p115, %p116
    %p119 = scmp.ne.s32.totalorder %s104, %s118
    %p120 = scmp.eq.s32.totalorder %s17, 0
    %p121 = por %p119, %p120
    %s123 = sadd.s32 %s122, 1
    %p126 = scmp.eq.s32.totalorder %s11, 1
    %p127 = scmp.ne.s32.totalorder %s122, %s124
    %p128 = scmp.eq.s32.totalorder %s11, 0
    %p129 = por %p127, %p128
    %p130 = scmp.ne.s32.totalorder %s122, %s124
    %p131 = scmp.eq.s32.totalorder %s16, 1
    %p132 = por %p130, %p131
    %p133 = scmp.ne.s32.totalorder %s124, %s125
    %p134 = scmp.eq.s32.totalorder %s16, 0
    %p135 = por %p133, %p134
    %p136 = scmp.ne.s32.totalorder %s124, %s125
    %p137 = scmp.eq.s32.totalorder %s17, 1
    %p138 = por %p136, %p137
    %p140 = scmp.ne.s32.totalorder %s125, %s139
    %p141 = scmp.eq.s32.totalorder %s17, 0
    %p142 = por %p140, %p141
    %s143 = ssub.s32 %s18, %s30
    %p144 = scmp.eq.s32.totalorder %s143, 0
    %s146 = sadd.s32 %s145, 1
    %s147 = scalar_select %p144, %s145, %s146
    %p150 = pneg %p144
    %p151 = scmp.eq.s32.totalorder %s11, 1
    %p152 = por %p150, %p151
    %p153 = scmp.ne.s32.totalorder %s145, %s148
    %p154 = scmp.eq.s32.totalorder %s11, 0
    %p155 = por %p153, %p154
    %p156 = scmp.ne.s32.totalorder %s145, %s148
    %p157 = scmp.eq.s32.totalorder %s16, 1
    %p158 = por %p156, %p157
    %p159 = scmp.ne.s32.totalorder %s148, %s149
    %p160 = scmp.eq.s32.totalorder %s16, 0
    %p161 = por %p159, %p160
    %p162 = scmp.ne.s32.totalorder %s148, %s149
    %p163 = scmp.eq.s32.totalorder %s17, 1
    %p164 = por %p162, %p163
    %p166 = scmp.ne.s32.totalorder %s149, %s165
    %p167 = scmp.eq.s32.totalorder %s17, 0
    %p168 = por %p166, %p167
    %p169 = scmp.le.s32.totalorder 1, %s11
    %p170 = scmp.lt.s32.totalorder %s11, 3
    %p171 = pnand %p169, %p170
    %p172 = pneg %p171
    // Predicated region
    $region9: #{conv_onet_forward.2} parent=5 // pred_check
      _
    $region10: #{conv_onet_forward.2} parent=5 // pred_check_branch
      %174 = sbr.rel (%p171) target = $region12
    $region11: #{conv_onet_forward.2} parent=5 // pred_region
      %s175 = ssub.s32 %s11, 1
      // Predicated region
      $region13: #{conv_onet_forward.2} parent=11 // pred_check
        %p176 = pneg %p72
      $region14: #{conv_onet_forward.2} parent=11 // pred_check_branch
        %178 = sbr.rel (%p176) target = $region16
      $region15: #{conv_onet_forward.2} parent=11 // pred_region
        _
      $region16: #{conv_onet_forward.2} parent=11 // pred_fallthru
        _
      // Predicated region
      $region17: #{conv_onet_forward.2} parent=11 // pred_check
        %p179 = pneg %p93
      $region18: #{conv_onet_forward.2} parent=11 // pred_check_branch
        %181 = sbr.rel (%p179) target = $region20
      $region19: #{conv_onet_forward.2} parent=11 // pred_region
        _
      $region20: #{conv_onet_forward.2} parent=11 // pred_fallthru
        _
      // Predicated region
      $region21: #{conv_onet_forward.2} parent=11 // pred_check
        %p182 = pneg %p114
      $region22: #{conv_onet_forward.2} parent=11 // pred_check_branch
        %184 = sbr.rel (%p182) target = $region24
      $region23: #{conv_onet_forward.2} parent=11 // pred_region
        _
      $region24: #{conv_onet_forward.2} parent=11 // pred_fallthru
        _
      // Predicated region
      $region25: #{conv_onet_forward.2} parent=11 // pred_check
        %p185 = pneg %p135
      $region26: #{conv_onet_forward.2} parent=11 // pred_check_branch
        %187 = sbr.rel (%p185) target = $region28
      $region27: #{conv_onet_forward.2} parent=11 // pred_region
        _
      $region28: #{conv_onet_forward.2} parent=11 // pred_fallthru
        _
    $region12: #{conv_onet_forward.2} parent=5 // pred_fallthru
      _
    %p188 = scmp.lt.s32.totalorder %s11, 2
    // Predicated region
    $region29: #{conv_onet_forward.2} parent=5 // pred_check
      %p189 = pneg %p188
    $region30: #{conv_onet_forward.2} parent=5 // pred_check_branch
      %191 = sbr.rel (%p189) target = $region32
    $region31: #{conv_onet_forward.2} parent=5 // pred_region
      // Predicated region
      $region33: #{conv_onet_forward.2} parent=31 // pred_check
        %p192 = pneg %p45
      $region34: #{conv_onet_forward.2} parent=31 // pred_check_branch
        %194 = sbr.rel (%p192) target = $region36
      $region35: #{conv_onet_forward.2} parent=31 // pred_region
        %s195 = smul.u32 2, %s19
        %p196 = scmp.lt.s32.totalorder %s18, 1
        %s197 = scalar_select %p196, %s18, 1
        %p198 = scmp.lt.s32.totalorder %s195, 1
        %s199 = scalar_select %p198, %s195, 1
        %s200 = smul.addr %s197, 2
        %s201 = sadd.s32 %s199, %s200
        %s202 = smul.addr %s201, 4
        %s203 = scalar_lea.vmem %s0, %s202
        %s204 = smul.u32 2, %s19
      $region36: #{conv_onet_forward.2} parent=31 // pred_fallthru
        _
    $region32: #{conv_onet_forward.2} parent=5 // pred_fallthru
      _
    %p205 = scmp.le.s32.totalorder 1, %s11
    %p206 = scmp.lt.s32.totalorder %s11, 3
    %p207 = pnand %p205, %p206
    %p208 = pneg %p207
    // Predicated region
    $region37: #{conv_onet_forward.2} parent=5 // pred_check
      _
    $region38: #{conv_onet_forward.2} parent=5 // pred_check_branch
      %210 = sbr.rel (%p207) target = $region40
    $region39: #{conv_onet_forward.2} parent=5 // pred_region
      %s211 = ssub.s32 %s11, 1
      %s212 = smul.u32 2, %s21
      %p213 = scmp.lt.s32.totalorder %s20, 1
      %s214 = scalar_select %p213, %s20, 1
      %p215 = scmp.lt.s32.totalorder %s212, 1
      %s216 = scalar_select %p215, %s212, 1
      %s217 = smul.addr %s214, 2
      %s218 = sadd.s32 %s216, %s217
      %s219 = smul.addr %s218, 4
      %s220 = scalar_lea.vmem %s0, %s219
      %p221 = pneg %p51
      %p222 = pneg %p48
      %p223 = pneg %p72
      %p224 = pneg %p69
      %p225 = pneg %p93
      %p226 = pneg %p90
      %p227 = pneg %p114
      %p228 = pneg %p111
      %p229 = pneg %p135
      %p230 = pneg %p132
      %p231 = pneg %p161
      %p232 = pneg %p158
      %p233 = scmp.lt.s32.totalorder %s20, 1
      %s234 = scalar_select %p233, %s20, 1
      %s235 = smul.addr %s234, 8
      %s236 = smul.addr %s235, 8
      %s237 = scalar_lea.vmem %s5, %s236
      %s238 = smul.u32 2, %s21
      %p239 = scmp.lt.s32.totalorder %s20, 1
      %s240 = scalar_select %p239, %s20, 1
      %p241 = scmp.lt.s32.totalorder %s238, 1
      %s242 = scalar_select %p241, %s238, 1
      %s243 = smul.addr %s240, 2
      %s244 = sadd.s32 %s242, %s243
      %s245 = smul.addr %s244, 4
      %s246 = scalar_lea.vmem %s0, %s245
      %s247 = smul.u32 2, %s21
      %p248 = scmp.lt.s32.totalorder %s20, 1
      %s249 = scalar_select %p248, %s20, 1
      %s250 = smul.addr %s249, 8
      %s251 = smul.addr %s250, 8
      %s252 = scalar_lea.vmem %s5, %s251
      %p254 = scmp.eq.s32.totalorder %s21, 0
      // Predicated region
      $region41: #{conv_onet_forward.2} parent=39 // pred_check
        %p255 = pneg %p254
      $region42: #{conv_onet_forward.2} parent=39 // pred_check_branch
        %257 = sbr.rel (%p255) target = $region44
      $region43: #{conv_onet_forward.2} parent=39 // pred_region
        %258 = vst [vmem:[#allocation2] sm:$0xff] 0.0
        %259 = vst [vmem:[#allocation2 + $0x8] sm:$0xff] 0.0
        %260 = vst [vmem:[#allocation2 + $0x10] sm:$0xff] 0.0
        %261 = vst [vmem:[#allocation2 + $0x18] sm:$0xff] 0.0
        %262 = vst [vmem:[#allocation2 + $0x20] sm:$0xff] 0.0
        %263 = vst [vmem:[#allocation2 + $0x28] sm:$0xff] 0.0
        %264 = vst [vmem:[#allocation2 + $0x30] sm:$0xff] 0.0
        %265 = vst [vmem:[#allocation2 + $0x38] sm:$0xff] 0.0
        %v266 = vlaneseq
        %vm267 = vcmp.ge.s32.totalorder %v266, 0
        %vm268 = vcmp.lt.s32.totalorder %v266, 256
        %vm269 = vmand %vm267, %vm268
        %270 = vst.msk [vmem:[#allocation3] sm:$0x3] %vm269, 0.0
      $region44: #{conv_onet_forward.2} parent=39 // pred_fallthru
        _
      %v271 = vld [vmem:[%s246] sm:$0x77]
      %v272 = vld [vmem:[%s1] sm:$0xff]
      %v273 = vld [vmem:[%s1 + $0x8] sm:$0xff]
      %v274 = vld [vmem:[%s1 + $0x10] sm:$0xff]
      %v275 = vld [vmem:[%s1 + $0x18] sm:$0xff]
      %v276 = vld [vmem:[%s2] sm:$0xff]
      %v277 = vld [vmem:[%s2 + $0x8] sm:$0xff]
      %v278 = vld [vmem:[%s2 + $0x10] sm:$0xff]
      %v279 = vld [vmem:[%s2 + $0x18] sm:$0xff]
      %281 = vset.pattern.permute.xlu0 0
      %282 = vperm.xlu0 %281, %v276
      %v283 = vpop.permute.xlu0 %282
      %286 = vset.pattern.permute.xlu0 0
      %287 = vperm.xlu0 %286, %v277
      %v288 = vpop.permute.xlu0 %287
      %291 = vset.pattern.permute.xlu0 0
      %292 = vperm.xlu0 %291, %v278
      %v293 = vpop.permute.xlu0 %292
      %296 = vset.pattern.permute.xlu0 0
      %297 = vperm.xlu0 %296, %v279
      %v298 = vpop.permute.xlu0 %297
      %v301 = vcombine.high %v271, %v271
      %vm302 = vcmask 23552
      %v304 = vsel %vm302, %v272, 0
      %v307 = vsel %vm302, %v273, 0
      %v310 = vsel %vm302, %v274, 0
      %v313 = vsel %vm302, %v275, 0
      %vm315 = vcmask 1042432
      %v316 = vsel %vm315, %v271, 0
      %v318 = vsel %vm315, %v301, 0
      %320 = vmatprep.subr.mxu0 %v318
      %321 = vmatpush1.msra.mxu0 %v316
      %322 = vmatprep.subr.mxu0 0.0
      %323 = vmatpush1.msra.mxu0 0.0
      %324 = vmatprep.subr.mxu0 0.0
      %325 = vmatpush1.msra.mxu0 0.0
      %326 = vmatprep.subr.mxu0 0.0
      %327 = vmatpush1.msra.mxu0 0.0
      %328 = vmatprep.subr.mxu0 0.0
      %329 = vmatpush1.msra.mxu0 0.0
      %330 = vmatprep.subr.mxu0 0.0
      %331 = vmatpush1.msra.mxu0 0.0
      %332 = vmatprep.subr.mxu0 0.0
      %333 = vmatpush1.msra.mxu0 0.0
      %334 = vmatprep.subr.mxu0 0.0
      %335 = vmatpush1.msra.mxu0 0.0
      %336 = vmatprep.subr.mxu0 0.0
      %337 = vmatpush1.msra.mxu0 0.0
      %338 = vmatprep.subr.mxu0 0.0
      %339 = vmatpush1.msra.mxu0 0.0
      %340 = vmatprep.subr.mxu0 0.0
      %341 = vmatpush1.msra.mxu0 0.0
      %342 = vmatprep.subr.mxu0 0.0
      %343 = vmatpush1.msra.mxu0 0.0
      %344 = vmatprep.subr.mxu0 0.0
      %345 = vmatpush1.msra.mxu0 0.0
      %346 = vmatprep.subr.mxu0 0.0
      %347 = vmatpush1.msra.mxu0 0.0
      %348 = vmatprep.subr.mxu0 0.0
      %349 = vmatpush1.msra.mxu0 0.0
      %350 = vmatprep.subr.mxu0 0.0
      %351 = vmatpush1.msra.mxu0 0.0
      %352 = vmatprep.subr.mxu0 0.0
      %353 = vmatpush1.msra.mxu0 0.0
      %354 = vmatprep.subr.mxu0 0.0
      %355 = vmatpush1.msra.mxu0 0.0
      %356 = vmatprep.subr.mxu0 0.0
      %357 = vmatpush1.msra.mxu0 0.0
      %358 = vmatprep.subr.mxu0 0.0
      %359 = vmatpush1.msra.mxu0 0.0
      %360 = vmatprep.subr.mxu0 0.0
      %361 = vmatpush1.msra.mxu0 0.0
      %362 = vmatprep.subr.mxu0 0.0
      %363 = vmatpush1.msra.mxu0 0.0
      %364 = vmatprep.subr.mxu0 0.0
      %365 = vmatpush1.msra.mxu0 0.0
      %366 = vmatprep.subr.mxu0 0.0
      %367 = vmatpush1.msra.mxu0 0.0
      %368 = vmatprep.subr.mxu0 0.0
      %369 = vmatpush1.msra.mxu0 0.0
      %370 = vmatprep.subr.mxu0 0.0
      %371 = vmatpush1.msra.mxu0 0.0
      %372 = vmatprep.subr.mxu0 0.0
      %373 = vmatpush1.msra.mxu0 0.0
      %374 = vmatprep.subr.mxu0 0.0
      %375 = vmatpush1.msra.mxu0 0.0
      %376 = vmatprep.subr.mxu0 0.0
      %377 = vmatpush1.msra.mxu0 0.0
      %378 = vmatprep.subr.mxu0 0.0
      %379 = vmatpush1.msra.mxu0 0.0
      %380 = vmatprep.subr.mxu0 0.0
      %381 = vmatpush1.msra.mxu0 0.0
      %382 = vmatprep.subr.mxu0 0.0
      %383 = vmatpush1.msra.mxu0 0.0
      %384 = vmatprep.mubr.f32.mxu0 0.0
      %385 = vmatmul.mubr.f32.gmra.mrb[0].mxu0 %v304
      %v386 = vpop.f32.mrb[0].mxu0
      %v387 = vadd.f32 %v283, %v386
      %v388 = vpop.f32.mrb[0].mxu0
      %v389 = vadd.f32 %v283, %v388
      %390 = vmatprep.mubr.f32.mxu0 0.0
      %391 = vmatmul.mubr.f32.gmra.mrb[0].mxu0 %v307
      %v392 = vpop.f32.mrb[0].mxu0
      %v393 = vadd.f32 %v288, %v392
      %v394 = vpop.f32.mrb[0].mxu0
      %v395 = vadd.f32 %v288, %v394
      %396 = vmatprep.mubr.f32.mxu0 0.0
      %397 = vmatmul.mubr.f32.gmra.mrb[0].mxu0 %v310
      %v398 = vpop.f32.mrb[0].mxu0
      %v399 = vadd.f32 %v293, %v398
      %v400 = vpop.f32.mrb[0].mxu0
      %v401 = vadd.f32 %v293, %v400
      %402 = vmatprep.mubr.f32.mxu0 0.0
      %403 = vmatmul.mubr.f32.gmra.mrb[0].mxu0 %v313
      %v404 = vpop.f32.mrb[0].mxu0
      %v405 = vadd.f32 %v298, %v404
      %v406 = vpop.f32.mrb[0].mxu0
      %v407 = vadd.f32 %v298, %v406
      %408 = vdwg.mxu0
      %v409 = vld [vmem:[%s3] sm:$0xf]
      %v410 = vld [vmem:[%s3 + $0x4] sm:$0xf]
      %v411 = vld [vmem:[%s3 + $0x8] sm:$0xf]
      %v412 = vld [vmem:[%s3 + $0xc] sm:$0xf]
      %v413 = vld [vmem:[%s4] sm:$0xff]
      %v414 = vld [vmem:[%s4 + $0x8] sm:$0xff]
      %v415 = vld [vmem:[%s4 + $0x10] sm:$0xff]
      %v416 = vld [vmem:[%s4 + $0x18] sm:$0xff]
      %v417 = vld [vmem:[%s3 + $0x10] sm:$0xf]
      %v418 = vld [vmem:[%s3 + $0x14] sm:$0xf]
      %v419 = vld [vmem:[%s3 + $0x18] sm:$0xf]
      %v420 = vld [vmem:[%s3 + $0x1c] sm:$0xf]
      %v421 = vld [vmem:[%s4 + $0x20] sm:$0xff]
      %v422 = vld [vmem:[%s4 + $0x28] sm:$0xff]
      %v423 = vld [vmem:[%s4 + $0x30] sm:$0xff]
      %v424 = vld [vmem:[%s4 + $0x38] sm:$0xff]
      %v425 = vmax.f32 %v387, 0.0
      %v426 = vmax.f32 %v389, 0.0
      %v427 = vmax.f32 %v393, 0.0
      %v428 = vmax.f32 %v395, 0.0
      %v429 = vmax.f32 %v399, 0.0
      %v430 = vmax.f32 %v401, 0.0
      %v431 = vmax.f32 %v405, 0.0
      %v432 = vmax.f32 %v407, 0.0
      %v433 = vpack.c.bf16 %v427, %v425
      %v434 = vpack.c.bf16 %v428, %v426
      %v435 = vpack.c.bf16 %v431, %v429
      %v436 = vpack.c.bf16 %v432, %v430
      %438 = vset.pattern.permute.xlu0 0
      %439 = vperm.xlu0 %438, %v413
      %v440 = vpop.permute.xlu0 %439
      %443 = vset.pattern.permute.xlu0 0
      %444 = vperm.xlu0 %443, %v414
      %v445 = vpop.permute.xlu0 %444
      %448 = vset.pattern.permute.xlu0 0
      %449 = vperm.xlu0 %448, %v415
      %v450 = vpop.permute.xlu0 %449
      %453 = vset.pattern.permute.xlu0 0
      %454 = vperm.xlu0 %453, %v416
      %v455 = vpop.permute.xlu0 %454
      %v461 = vunpack.c.l.b16 %v409
      %v462 = vunpack.c.l.b16 %v410
      %v463 = vunpack.c.l.b16 %v411
      %v464 = vunpack.c.l.b16 %v412
      %v465 = vpack.c.b16 %v462, %v461
      %v466 = vpack.c.b16 %v464, %v463
      %vm467 = vcmask 261120
      %v469 = vsel %vm467, %v465, 0
      %v472 = vsel %vm467, %v466, 0
      %474 = vmatprep.subr.bf16.mxu0 %v434
      %475 = vmatpush1.bf16.msra.mxu0 %v433
      %476 = vmatprep.subr.bf16.mxu0 %v436
      %477 = vmatpush1.bf16.msra.mxu0 %v435
      %478 = vmatprep.subr.bf16.mxu0 0
      %479 = vmatpush1.bf16.msra.mxu0 0
      %480 = vmatprep.subr.bf16.mxu0 0
      %481 = vmatpush1.bf16.msra.mxu0 0
      %482 = vmatprep.subr.bf16.mxu0 0
      %483 = vmatpush1.bf16.msra.mxu0 0
      %484 = vmatprep.subr.bf16.mxu0 0
      %485 = vmatpush1.bf16.msra.mxu0 0
      %486 = vmatprep.subr.bf16.mxu0 0
      %487 = vmatpush1.bf16.msra.mxu0 0
      %488 = vmatprep.subr.bf16.mxu0 0
      %489 = vmatpush1.bf16.msra.mxu0 0
      %490 = vmatprep.subr.bf16.mxu0 0
      %491 = vmatpush1.bf16.msra.mxu0 0
      %492 = vmatprep.subr.bf16.mxu0 0
      %493 = vmatpush1.bf16.msra.mxu0 0
      %494 = vmatprep.subr.bf16.mxu0 0
      %495 = vmatpush1.bf16.msra.mxu0 0
      %496 = vmatprep.subr.bf16.mxu0 0
      %497 = vmatpush1.bf16.msra.mxu0 0
      %498 = vmatprep.subr.bf16.mxu0 0
      %499 = vmatpush1.bf16.msra.mxu0 0
      %500 = vmatprep.subr.bf16.mxu0 0
      %501 = vmatpush1.bf16.msra.mxu0 0
      %502 = vmatprep.subr.bf16.mxu0 0
      %503 = vmatpush1.bf16.msra.mxu0 0
      %504 = vmatprep.subr.bf16.mxu0 0
      %505 = vmatpush1.bf16.msra.mxu0 0
      %506 = vmatprep.mubr.bf16.mxu0 0
      %507 = vmatmul.mubr.bf16.gmra.mrb[0].mxu0 %v469
      %v508 = vpop.f32.mrb[0].mxu0
      %v509 = vadd.f32 %v440, %v508
      %v510 = vpop.f32.mrb[0].mxu0
      %v511 = vadd.f32 %v440, %v510
      %v512 = vpop.f32.mrb[0].mxu0
      %v513 = vadd.f32 %v445, %v512
      %v514 = vpop.f32.mrb[0].mxu0
      %v515 = vadd.f32 %v445, %v514
      %516 = vmatprep.mubr.bf16.mxu0 0
      %517 = vmatmul.mubr.bf16.gmra.mrb[0].mxu0 %v472
      %v518 = vpop.f32.mrb[0].mxu0
      %v519 = vadd.f32 %v450, %v518
      %v520 = vpop.f32.mrb[0].mxu0
      %v521 = vadd.f32 %v450, %v520
      %v522 = vpop.f32.mrb[0].mxu0
      %v523 = vadd.f32 %v455, %v522
      %v524 = vpop.f32.mrb[0].mxu0
      %v525 = vadd.f32 %v455, %v524
      %526 = vdwg.mxu0
      %v527 = vmax.f32 %v509, 0.0
      %v528 = vmax.f32 %v511, 0.0
      %v529 = vmax.f32 %v513, 0.0
      %v530 = vmax.f32 %v515, 0.0
      %v531 = vmax.f32 %v519, 0.0
      %v532 = vmax.f32 %v521, 0.0
      %v533 = vmax.f32 %v523, 0.0
      %v534 = vmax.f32 %v525, 0.0
      %v535 = vpack.c.bf16 %v529, %v527
      %v536 = vpack.c.bf16 %v530, %v528
      %v537 = vpack.c.bf16 %v533, %v531
      %v538 = vpack.c.bf16 %v534, %v532
      %540 = vset.pattern.permute.xlu0 0
      %541 = vperm.xlu0 %540, %v421
      %v542 = vpop.permute.xlu0 %541
      %545 = vset.pattern.permute.xlu0 0
      %546 = vperm.xlu0 %545, %v422
      %v547 = vpop.permute.xlu0 %546
      %550 = vset.pattern.permute.xlu0 0
      %551 = vperm.xlu0 %550, %v423
      %v552 = vpop.permute.xlu0 %551
      %555 = vset.pattern.permute.xlu0 0
      %556 = vperm.xlu0 %555, %v424
      %v557 = vpop.permute.xlu0 %556
      %v563 = vunpack.c.l.b16 %v417
      %v564 = vunpack.c.l.b16 %v418
      %v565 = vunpack.c.l.b16 %v419
      %v566 = vunpack.c.l.b16 %v420
      %v567 = vpack.c.b16 %v564, %v563
      %v568 = vpack.c.b16 %v566, %v565
      %v570 = vsel %vm467, %v567, 0
      %v573 = vsel %vm467, %v568, 0
      %575 = vmatprep.subr.bf16.mxu0 %v536
      %576 = vmatpush1.bf16.msra.mxu0 %v535
      %577 = vmatprep.subr.bf16.mxu0 %v538
      %578 = vmatpush1.bf16.msra.mxu0 %v537
      %579 = vmatprep.subr.bf16.mxu0 0
      %580 = vmatpush1.bf16.msra.mxu0 0
      %581 = vmatprep.subr.bf16.mxu0 0
      %582 = vmatpush1.bf16.msra.mxu0 0
      %583 = vmatprep.subr.bf16.mxu0 0
      %584 = vmatpush1.bf16.msra.mxu0 0
      %585 = vmatprep.subr.bf16.mxu0 0
      %586 = vmatpush1.bf16.msra.mxu0 0
      %587 = vmatprep.subr.bf16.mxu0 0
      %588 = vmatpush1.bf16.msra.mxu0 0
      %589 = vmatprep.subr.bf16.mxu0 0
      %590 = vmatpush1.bf16.msra.mxu0 0
      %591 = vmatprep.subr.bf16.mxu0 0
      %592 = vmatpush1.bf16.msra.mxu0 0
      %593 = vmatprep.subr.bf16.mxu0 0
      %594 = vmatpush1.bf16.msra.mxu0 0
      %595 = vmatprep.subr.bf16.mxu0 0
      %596 = vmatpush1.bf16.msra.mxu0 0
      %597 = vmatprep.subr.bf16.mxu0 0
      %598 = vmatpush1.bf16.msra.mxu0 0
      %599 = vmatprep.subr.bf16.mxu0 0
      %600 = vmatpush1.bf16.msra.mxu0 0
      %601 = vmatprep.subr.bf16.mxu0 0
      %602 = vmatpush1.bf16.msra.mxu0 0
      %603 = vmatprep.subr.bf16.mxu0 0
      %604 = vmatpush1.bf16.msra.mxu0 0
      %605 = vmatprep.subr.bf16.mxu0 0
      %606 = vmatpush1.bf16.msra.mxu0 0
      %607 = vmatprep.mubr.bf16.mxu0 0
      %608 = vmatmul.mubr.bf16.gmra.mrb[0].mxu0 %v570
      %v609 = vpop.f32.mrb[0].mxu0
      %v610 = vadd.f32 %v542, %v609
      %v611 = vpop.f32.mrb[0].mxu0
      %v612 = vadd.f32 %v542, %v611
      %v613 = vpop.f32.mrb[0].mxu0
      %v614 = vadd.f32 %v547, %v613
      %v615 = vpop.f32.mrb[0].mxu0
      %v616 = vadd.f32 %v547, %v615
      %617 = vmatprep.mubr.bf16.mxu0 0
      %618 = vmatmul.mubr.bf16.gmra.mrb[0].mxu0 %v573
      %v619 = vpop.f32.mrb[0].mxu0
      %v620 = vadd.f32 %v552, %v619
      %v621 = vpop.f32.mrb[0].mxu0
      %v622 = vadd.f32 %v552, %v621
      %v623 = vpop.f32.mrb[0].mxu0
      %v624 = vadd.f32 %v557, %v623
      %v625 = vpop.f32.mrb[0].mxu0
      %v626 = vadd.f32 %v557, %v625
      %627 = vdwg.mxu0
      %v628 = vadd.f32 %v387, %v610
      %v629 = vadd.f32 %v389, %v612
      %v630 = vadd.f32 %v393, %v614
      %v631 = vadd.f32 %v395, %v616
      %v632 = vadd.f32 %v399, %v620
      %v633 = vadd.f32 %v401, %v622
      %v634 = vadd.f32 %v405, %v624
      %v635 = vadd.f32 %v407, %v626
      %v636 = vld [vmem:[%s3 + $0x20] sm:$0xf]
      %v637 = vld [vmem:[%s3 + $0x24] sm:$0xf]
      %v638 = vld [vmem:[%s3 + $0x28] sm:$0xf]
      %v639 = vld [vmem:[%s3 + $0x2c] sm:$0xf]
      %v640 = vld [vmem:[%s4 + $0x40] sm:$0xff]
      %v641 = vld [vmem:[%s4 + $0x48] sm:$0xff]
      %v642 = vld [vmem:[%s4 + $0x50] sm:$0xff]
      %v643 = vld [vmem:[%s4 + $0x58] sm:$0xff]
      %v644 = vld [vmem:[%s3 + $0x30] sm:$0xf]
      %v645 = vld [vmem:[%s3 + $0x34] sm:$0xf]
      %v646 = vld [vmem:[%s3 + $0x38] sm:$0xf]
      %v647 = vld [vmem:[%s3 + $0x3c] sm:$0xf]
      %v648 = vld [vmem:[%s4 + $0x60] sm:$0xff]
      %v649 = vld [vmem:[%s4 + $0x68] sm:$0xff]
      %v650 = vld [vmem:[%s4 + $0x70] sm:$0xff]
      %v651 = vld [vmem:[%s4 + $0x78] sm:$0xff]
      %v652 = vmax.f32 %v628, 0.0
      %v653 = vmax.f32 %v629, 0.0
      %v654 = vmax.f32 %v630, 0.0
      %v655 = vmax.f32 %v631, 0.0
      %v656 = vmax.f32 %v632, 0.0
      %v657 = vmax.f32 %v633, 0.0
      %v658 = vmax.f32 %v634, 0.0
      %v659 = vmax.f32 %v635, 0.0
      %v660 = vpack.c.bf16 %v654, %v652
      %v661 = vpack.c.bf16 %v655, %v653
      %v662 = vpack.c.bf16 %v658, %v656
      %v663 = vpack.c.bf16 %v659, %v657
      %665 = vset.pattern.permute.xlu0 0
      %666 = vperm.xlu0 %665, %v640
      %v667 = vpop.permute.xlu0 %666
      %670 = vset.pattern.permute.xlu0 0
      %671 = vperm.xlu0 %670, %v641
      %v672 = vpop.permute.xlu0 %671
      %675 = vset.pattern.permute.xlu0 0
      %676 = vperm.xlu0 %675, %v642
      %v677 = vpop.permute.xlu0 %676
      %680 = vset.pattern.permute.xlu0 0
      %681 = vperm.xlu0 %680, %v643
      %v682 = vpop.permute.xlu0 %681
      %v688 = vunpack.c.l.b16 %v636
      %v689 = vunpack.c.l.b16 %v637
      %v690 = vunpack.c.l.b16 %v638
      %v691 = vunpack.c.l.b16 %v639
      %v692 = vpack.c.b16 %v689, %v688
      %v693 = vpack.c.b16 %v691, %v690
      %v695 = vsel %vm467, %v692, 0
      %v698 = vsel %vm467, %v693, 0
      %700 = vmatprep.subr.bf16.mxu0 %v661
      %701 = vmatpush1.bf16.msra.mxu0 %v660
      %702 = vmatprep.subr.bf16.mxu0 %v663
      %703 = vmatpush1.bf16.msra.mxu0 %v662
      %704 = vmatprep.subr.bf16.mxu0 0
      %705 = vmatpush1.bf16.msra.mxu0 0
      %706 = vmatprep.subr.bf16.mxu0 0
      %707 = vmatpush1.bf16.msra.mxu0 0
      %708 = vmatprep.subr.bf16.mxu0 0
      %709 = vmatpush1.bf16.msra.mxu0 0
      %710 = vmatprep.subr.bf16.mxu0 0
      %711 = vmatpush1.bf16.msra.mxu0 0
      %712 = vmatprep.subr.bf16.mxu0 0
      %713 = vmatpush1.bf16.msra.mxu0 0
      %714 = vmatprep.subr.bf16.mxu0 0
      %715 = vmatpush1.bf16.msra.mxu0 0
      %716 = vmatprep.subr.bf16.mxu0 0
      %717 = vmatpush1.bf16.msra.mxu0 0
      %718 = vmatprep.subr.bf16.mxu0 0
      %719 = vmatpush1.bf16.msra.mxu0 0
      %720 = vmatprep.subr.bf16.mxu0 0
      %721 = vmatpush1.bf16.msra.mxu0 0
      %722 = vmatprep.subr.bf16.mxu0 0
      %723 = vmatpush1.bf16.msra.mxu0 0
      %724 = vmatprep.subr.bf16.mxu0 0
      %725 = vmatpush1.bf16.msra.mxu0 0
      %726 = vmatprep.subr.bf16.mxu0 0
      %727 = vmatpush1.bf16.msra.mxu0 0
      %728 = vmatprep.subr.bf16.mxu0 0
      %729 = vmatpush1.bf16.msra.mxu0 0
      %730 = vmatprep.subr.bf16.mxu0 0
      %731 = vmatpush1.bf16.msra.mxu0 0
      %732 = vmatprep.mubr.bf16.mxu0 0
      %733 = vmatmul.mubr.bf16.gmra.mrb[0].mxu0 %v695
      %v734 = vpop.f32.mrb[0].mxu0
      %v735 = vadd.f32 %v667, %v734
      %v736 = vpop.f32.mrb[0].mxu0
      %v737 = vadd.f32 %v667, %v736
      %v738 = vpop.f32.mrb[0].mxu0
      %v739 = vadd.f32 %v672, %v738
      %v740 = vpop.f32.mrb[0].mxu0
      %v741 = vadd.f32 %v672, %v740
      %742 = vmatprep.mubr.bf16.mxu0 0
      %743 = vmatmul.mubr.bf16.gmra.mrb[0].mxu0 %v698
      %v744 = vpop.f32.mrb[0].mxu0
      %v745 = vadd.f32 %v677, %v744
      %v746 = vpop.f32.mrb[0].mxu0
      %v747 = vadd.f32 %v677, %v746
      %v748 = vpop.f32.mrb[0].mxu0
      %v749 = vadd.f32 %v682, %v748
      %v750 = vpop.f32.mrb[0].mxu0
      %v751 = vadd.f32 %v682, %v750
      %752 = vdwg.mxu0
      %v753 = vmax.f32 %v735, 0.0
      %v754 = vmax.f32 %v737, 0.0
      %v755 = vmax.f32 %v739, 0.0
      %v756 = vmax.f32 %v741, 0.0
      %v757 = vmax.f32 %v745, 0.0
      %v758 = vmax.f32 %v747, 0.0
      %v759 = vmax.f32 %v749, 0.0
      %v760 = vmax.f32 %v751, 0.0
      %v761 = vpack.c.bf16 %v755, %v753
      %v762 = vpack.c.bf16 %v756, %v754
      %v763 = vpack.c.bf16 %v759, %v757
      %v764 = vpack.c.bf16 %v760, %v758
      %766 = vset.pattern.permute.xlu0 0
      %767 = vperm.xlu0 %766, %v648
      %v768 = vpop.permute.xlu0 %767
      %771 = vset.pattern.permute.xlu0 0
      %772 = vperm.xlu0 %771, %v649
      %v773 = vpop.permute.xlu0 %772
      %776 = vset.pattern.permute.xlu0 0
      %777 = vperm.xlu0 %776, %v650
      %v778 = vpop.permute.xlu0 %777
      %781 = vset.pattern.permute.xlu0 0
      %782 = vperm.xlu0 %781, %v651
      %v783 = vpop.permute.xlu0 %782
      %v789 = vunpack.c.l.b16 %v644
      %v790 = vunpack.c.l.b16 %v645
      %v791 = vunpack.c.l.b16 %v646
      %v792 = vunpack.c.l.b16 %v647
      %v793 = vpack.c.b16 %v790, %v789
      %v794 = vpack.c.b16 %v792, %v791
      %v796 = vsel %vm467, %v793, 0
      %v799 = vsel %vm467, %v794, 0
      %801 = vmatprep.subr.bf16.mxu0 %v762
      %802 = vmatpush1.bf16.msra.mxu0 %v761
      %803 = vmatprep.subr.bf16.mxu0 %v764
      %804 = vmatpush1.bf16.msra.mxu0 %v763
      %805 = vmatprep.subr.bf16.mxu0 0
      %806 = vmatpush1.bf16.msra.mxu0 0
      %807 = vmatprep.subr.bf16.mxu0 0
      %808 = vmatpush1.bf16.msra.mxu0 0
      %809 = vmatprep.subr.bf16.mxu0 0
      %810 = vmatpush1.bf16.msra.mxu0 0
      %811 = vmatprep.subr.bf16.mxu0 0
      %812 = vmatpush1.bf16.msra.mxu0 0
      %813 = vmatprep.subr.bf16.mxu0 0
      %814 = vmatpush1.bf16.msra.mxu0 0
      %815 = vmatprep.subr.bf16.mxu0 0
      %816 = vmatpush1.bf16.msra.mxu0 0
      %817 = vmatprep.subr.bf16.mxu0 0
      %818 = vmatpush1.bf16.msra.mxu0 0
      %819 = vmatprep.subr.bf16.mxu0 0
      %820 = vmatpush1.bf16.msra.mxu0 0
      %821 = vmatprep.subr.bf16.mxu0 0
      %822 = vmatpush1.bf16.msra.mxu0 0
      %823 = vmatprep.subr.bf16.mxu0 0
      %824 = vmatpush1.bf16.msra.mxu0 0
      %825 = vmatprep.subr.bf16.mxu0 0
      %826 = vmatpush1.bf16.msra.mxu0 0
      %827 = vmatprep.subr.bf16.mxu0 0
      %828 = vmatpush1.bf16.msra.mxu0 0
      %829 = vmatprep.subr.bf16.mxu0 0
      %830 = vmatpush1.bf16.msra.mxu0 0
      %831 = vmatprep.subr.bf16.mxu0 0
      %832 = vmatpush1.bf16.msra.mxu0 0
      %833 = vmatprep.mubr.bf16.mxu0 0
      %834 = vmatmul.mubr.bf16.gmra.mrb[0].mxu0 %v796
      %v835 = vpop.f32.mrb[0].mxu0
      %v836 = vadd.f32 %v768, %v835
      %v837 = vpop.f32.mrb[0].mxu0
      %v838 = vadd.f32 %v768, %v837
      %v839 = vpop.f32.mrb[0].mxu0
      %v840 = vadd.f32 %v773, %v839
      %v841 = vpop.f32.mrb[0].mxu0
      %v842 = vadd.f32 %v773, %v841
      %843 = vmatprep.mubr.bf16.mxu0 0
      %844 = vmatmul.mubr.bf16.gmra.mrb[0].mxu0 %v799
      %v845 = vpop.f32.mrb[0].mxu0
      %v846 = vadd.f32 %v778, %v845
      %v847 = vpop.f32.mrb[0].mxu0
      %v848 = vadd.f32 %v778, %v847
      %v849 = vpop.f32.mrb[0].mxu0
      %v850 = vadd.f32 %v783, %v849
      %v851 = vpop.f32.mrb[0].mxu0
      %v852 = vadd.f32 %v783, %v851
      %853 = vdwg.mxu0
      %v854 = vadd.f32 %v628, %v836
      %v855 = vadd.f32 %v629, %v838
      %v856 = vadd.f32 %v630, %v840
      %v857 = vadd.f32 %v631, %v842
      %v858 = vadd.f32 %v632, %v846
      %v859 = vadd.f32 %v633, %v848
      %v860 = vadd.f32 %v634, %v850
      %v861 = vadd.f32 %v635, %v852
      %v862 = vld [vmem:[%s3 + $0x40] sm:$0xf]
      %v863 = vld [vmem:[%s3 + $0x44] sm:$0xf]
      %v864 = vld [vmem:[%s3 + $0x48] sm:$0xf]
      %v865 = vld [vmem:[%s3 + $0x4c] sm:$0xf]
      %v866 = vpack.c.bf16 %v856, %v854
      %v867 = vpack.c.bf16 %v857, %v855
      %v868 = vpack.c.bf16 %v860, %v858
      %v869 = vpack.c.bf16 %v861, %v859
      %v870 = vld [vmem:[%s4 + $0x80] sm:$0xff]
      %v871 = vld [vmem:[%s4 + $0x88] sm:$0xff]
      %v872 = vld [vmem:[%s4 + $0x90] sm:$0xff]
      %v873 = vld [vmem:[%s4 + $0x98] sm:$0xff]
      %875 = vset.pattern.permute.xlu0 0
      %876 = vperm.xlu0 %875, %v870
      %v877 = vpop.permute.xlu0 %876
      %880 = vset.pattern.permute.xlu0 0
      %881 = vperm.xlu0 %880, %v871
      %v882 = vpop.permute.xlu0 %881
      %885 = vset.pattern.permute.xlu0 0
      %886 = vperm.xlu0 %885, %v872
      %v887 = vpop.permute.xlu0 %886
      %890 = vset.pattern.permute.xlu0 0
      %891 = vperm.xlu0 %890, %v873
      %v892 = vpop.permute.xlu0 %891
      %v898 = vunpack.c.l.b16 %v862
      %v899 = vunpack.c.l.b16 %v863
      %v900 = vunpack.c.l.b16 %v864
      %v901 = vunpack.c.l.b16 %v865
      %v902 = vpack.c.b16 %v899, %v898
      %v903 = vpack.c.b16 %v901, %v900
      %v905 = vsel %vm467, %v902, 0
      %v908 = vsel %vm467, %v903, 0
      %910 = vmatprep.subr.bf16.mxu0 %v867
      %911 = vmatpush1.bf16.msra.mxu0 %v866
      %912 = vmatprep.subr.bf16.mxu0 %v869
      %913 = vmatpush1.bf16.msra.mxu0 %v868
      %914 = vmatprep.subr.bf16.mxu0 0
      %915 = vmatpush1.bf16.msra.mxu0 0
      %916 = vmatprep.subr.bf16.mxu0 0
      %917 = vmatpush1.bf16.msra.mxu0 0
      %918 = vmatprep.subr.bf16.mxu0 0
      %919 = vmatpush1.bf16.msra.mxu0 0
      %920 = vmatprep.subr.bf16.mxu0 0
      %921 = vmatpush1.bf16.msra.mxu0 0
      %922 = vmatprep.subr.bf16.mxu0 0
      %923 = vmatpush1.bf16.msra.mxu0 0
      %924 = vmatprep.subr.bf16.mxu0 0
      %925 = vmatpush1.bf16.msra.mxu0 0
      %926 = vmatprep.subr.bf16.mxu0 0
      %927 = vmatpush1.bf16.msra.mxu0 0
      %928 = vmatprep.subr.bf16.mxu0 0
      %929 = vmatpush1.bf16.msra.mxu0 0
      %930 = vmatprep.subr.bf16.mxu0 0
      %931 = vmatpush1.bf16.msra.mxu0 0
      %932 = vmatprep.subr.bf16.mxu0 0
      %933 = vmatpush1.bf16.msra.mxu0 0
      %934 = vmatprep.subr.bf16.mxu0 0
      %935 = vmatpush1.bf16.msra.mxu0 0
      %936 = vmatprep.subr.bf16.mxu0 0
      %937 = vmatpush1.bf16.msra.mxu0 0
      %938 = vmatprep.subr.bf16.mxu0 0
      %939 = vmatpush1.bf16.msra.mxu0 0
      %940 = vmatprep.subr.bf16.mxu0 0
      %941 = vmatpush1.bf16.msra.mxu0 0
      %942 = vmatprep.mubr.bf16.mxu0 0
      %943 = vmatmul.mubr.bf16.gmra.mrb[0].mxu0 %v905
      %v944 = vpop.f32.mrb[0].mxu0
      %v945 = vadd.f32 %v877, %v944
      %v946 = vpop.f32.mrb[0].mxu0
      %v947 = vadd.f32 %v877, %v946
      %v948 = vpop.f32.mrb[0].mxu0
      %v949 = vadd.f32 %v882, %v948
      %v950 = vpop.f32.mrb[0].mxu0
      %v951 = vadd.f32 %v882, %v950
      %952 = vmatprep.mubr.bf16.mxu0 0
      %953 = vmatmul.mubr.bf16.gmra.mrb[0].mxu0 %v908
      %v954 = vpop.f32.mrb[0].mxu0
      %v955 = vadd.f32 %v887, %v954
      %v956 = vpop.f32.mrb[0].mxu0
      %v957 = vadd.f32 %v887, %v956
      %v958 = vpop.f32.mrb[0].mxu0
      %v959 = vadd.f32 %v892, %v958
      %v960 = vpop.f32.mrb[0].mxu0
      %v961 = vadd.f32 %v892, %v960
      %962 = vdwg.mxu0
      %v963 = vrcp.pop 1.101
      %v964 = vmul.f32 %v271, %v963
      %v965 = vadd.f32 %v964, 0.5
      %v966 = vmax.f32 %v965, 0.0
      %v967 = vmin.f32 %v966, 0.99999
      %v968 = vmul.f32 %v967, 16.0
      %v969 = vcvt.f32.s32.to.zero.pseudo %v968
      %vm970 = vcmp.gt.s32.totalorder %v969, 0
      %v971 = vsel %vm970, %v969, 0
      %vm972 = vcmp.lt.s32.totalorder %v971, 15
      %v973 = vsel %vm972, %v971, 15
      %v974 = vmul.u32 %v973, 16
      %v975 = vrot.slane %v974, 6
      %v976 = vrot.slane %v975, 4
      %v977 = vadd.s32 %v973, %v976
      %v978 = vlaneseq
      %v979 = vand.u32 %v978, 127
      %v980 = vadd.s32 %v979, 128
      %s981 = smul.u32 %s21, 256
      %v982 = vstv %s981
      %v983 = vadd.s32 %v982, %v979
      %v984 = vadd.s32 %v982, %v980
      %vm985 = vcmp.lt.s32.totalorder %v983, 256
      %vm986 = vcmp.lt.s32.totalorder %v984, 256
      %v987 = vsel %vm985, 1, 0
      %v988 = vsel %vm986, 1, 0
      %v989 = vcvt.s32.f32 %v987
      %v990 = vcvt.s32.f32 %v988
      %v991 = vlaneseq
      %v992 = vshrl.u32 %v991, 7
      %v993 = vadd.s32 %v992, 8
      %v994 = vadd.s32 %v992, 16
      %v995 = vadd.s32 %v992, 24
      %v996 = vadd.s32 %v992, 32
      %v997 = vadd.s32 %v992, 40
      %v998 = vadd.s32 %v992, 48
      %v999 = vadd.s32 %v992, 56
      %v1000 = vadd.s32 %v992, 64
      %v1001 = vadd.s32 %v992, 72
      %v1002 = vadd.s32 %v992, 80
      %v1003 = vadd.s32 %v992, 88
      %v1004 = vadd.s32 %v992, 96
      %v1005 = vadd.s32 %v992, 104
      %v1006 = vadd.s32 %v992, 112
      %v1007 = vadd.s32 %v992, 120
      %v1008 = vadd.s32 %v992, 128
      %v1009 = vadd.s32 %v992, 136
      %v1010 = vadd.s32 %v992, 144
      %v1011 = vadd.s32 %v992, 152
      %v1012 = vadd.s32 %v992, 160
      %v1013 = vadd.s32 %v992, 168
      %v1014 = vadd.s32 %v992, 176
      %v1015 = vadd.s32 %v992, 184
      %v1016 = vadd.s32 %v992, 192
      %v1017 = vadd.s32 %v992, 200
      %v1018 = vadd.s32 %v992, 208
      %v1019 = vadd.s32 %v992, 216
      %v1020 = vadd.s32 %v992, 224
      %v1021 = vadd.s32 %v992, 232
      %v1022 = vadd.s32 %v992, 240
      %v1023 = vadd.s32 %v992, 248
      %v1024 = vlaneseq
      %v1025 = vshrl.u32 %v1024, 7
      %v1026 = vsub.s32 0, %v1025
      %v1027 = vrot.slane %v977, %v1026
      %v1028 = vlaneseq
      %v1029 = vshrl.u32 %v1028, 7
      %v1030 = vsub.s32 4, %v1029
      %v1031 = vrot.slane %v977, %v1030
      %v1032 = vlaneseq
      %v1033 = vshrl.u32 %v1032, 7
      %v1034 = vsub.s32 0, %v1033
      %v1035 = vrot.slane %v1027, %v1034
      %v1036 = vlaneseq
      %v1037 = vshrl.u32 %v1036, 7
      %v1038 = vsub.s32 0, %v1037
      %v1039 = vrot.slane %v1031, %v1038
      %vm1040 = vcmp.eq.s32.totalorder %v992, %v1035
      %vm1041 = vcmp.eq.s32.totalorder %v992, %v1039
      %vm1042 = vcmp.eq.s32.totalorder %v993, %v1035
      %vm1043 = vcmp.eq.s32.totalorder %v993, %v1039
      %vm1044 = vcmp.eq.s32.totalorder %v994, %v1035
      %vm1045 = vcmp.eq.s32.totalorder %v994, %v1039
      %vm1046 = vcmp.eq.s32.totalorder %v995, %v1035
      %vm1047 = vcmp.eq.s32.totalorder %v995, %v1039
      %vm1048 = vcmp.eq.s32.totalorder %v996, %v1035
      %vm1049 = vcmp.eq.s32.totalorder %v996, %v1039
      %vm1050 = vcmp.eq.s32.totalorder %v997, %v1035
      %vm1051 = vcmp.eq.s32.totalorder %v997, %v1039
      %vm1052 = vcmp.eq.s32.totalorder %v998, %v1035
      %vm1053 = vcmp.eq.s32.totalorder %v998, %v1039
      %vm1054 = vcmp.eq.s32.totalorder %v999, %v1035
      %vm1055 = vcmp.eq.s32.totalorder %v999, %v1039
      %vm1056 = vcmp.eq.s32.totalorder %v1000, %v1035
      %vm1057 = vcmp.eq.s32.totalorder %v1000, %v1039
      %vm1058 = vcmp.eq.s32.totalorder %v1001, %v1035
      %vm1059 = vcmp.eq.s32.totalorder %v1001, %v1039
      %vm1060 = vcmp.eq.s32.totalorder %v1002, %v1035
      %vm1061 = vcmp.eq.s32.totalorder %v1002, %v1039
      %vm1062 = vcmp.eq.s32.totalorder %v1003, %v1035
      %vm1063 = vcmp.eq.s32.totalorder %v1003, %v1039
      %vm1064 = vcmp.eq.s32.totalorder %v1004, %v1035
      %vm1065 = vcmp.eq.s32.totalorder %v1004, %v1039
      %vm1066 = vcmp.eq.s32.totalorder %v1005, %v1035
      %vm1067 = vcmp.eq.s32.totalorder %v1005, %v1039
      %vm1068 = vcmp.eq.s32.totalorder %v1006, %v1035
      %vm1069 = vcmp.eq.s32.totalorder %v1006, %v1039
      %vm1070 = vcmp.eq.s32.totalorder %v1007, %v1035
      %vm1071 = vcmp.eq.s32.totalorder %v1007, %v1039
      %vm1072 = vcmp.eq.s32.totalorder %v1008, %v1035
      %vm1073 = vcmp.eq.s32.totalorder %v1008, %v1039
      %vm1074 = vcmp.eq.s32.totalorder %v1009, %v1035
      %vm1075 = vcmp.eq.s32.totalorder %v1009, %v1039
      %vm1076 = vcmp.eq.s32.totalorder %v1010, %v1035
      %vm1077 = vcmp.eq.s32.totalorder %v1010, %v1039
      %vm1078 = vcmp.eq.s32.totalorder %v1011, %v1035
      %vm1079 = vcmp.eq.s32.totalorder %v1011, %v1039
      %vm1080 = vcmp.eq.s32.totalorder %v1012, %v1035
      %vm1081 = vcmp.eq.s32.totalorder %v1012, %v1039
      %vm1082 = vcmp.eq.s32.totalorder %v1013, %v1035
      %vm1083 = vcmp.eq.s32.totalorder %v1013, %v1039
      %vm1084 = vcmp.eq.s32.totalorder %v1014, %v1035
      %vm1085 = vcmp.eq.s32.totalorder %v1014, %v1039
      %vm1086 = vcmp.eq.s32.totalorder %v1015, %v1035
      %vm1087 = vcmp.eq.s32.totalorder %v1015, %v1039
      %vm1088 = vcmp.eq.s32.totalorder %v1016, %v1035
      %vm1089 = vcmp.eq.s32.totalorder %v1016, %v1039
      %vm1090 = vcmp.eq.s32.totalorder %v1017, %v1035
      %vm1091 = vcmp.eq.s32.totalorder %v1017, %v1039
      %vm1092 = vcmp.eq.s32.totalorder %v1018, %v1035
      %vm1093 = vcmp.eq.s32.totalorder %v1018, %v1039
      %vm1094 = vcmp.eq.s32.totalorder %v1019, %v1035
      %vm1095 = vcmp.eq.s32.totalorder %v1019, %v1039
      %vm1096 = vcmp.eq.s32.totalorder %v1020, %v1035
      %vm1097 = vcmp.eq.s32.totalorder %v1020, %v1039
      %vm1098 = vcmp.eq.s32.totalorder %v1021, %v1035
      %vm1099 = vcmp.eq.s32.totalorder %v1021, %v1039
      %vm1100 = vcmp.eq.s32.totalorder %v1022, %v1035
      %vm1101 = vcmp.eq.s32.totalorder %v1022, %v1039
      %vm1102 = vcmp.eq.s32.totalorder %v1023, %v1035
      %vm1103 = vcmp.eq.s32.totalorder %v1023, %v1039
      %v1104 = vsel %vm1040, 1, 0
      %v1105 = vsel %vm1041, 1, 0
      %v1106 = vsel %vm1042, 1, 0
      %v1107 = vsel %vm1043, 1, 0
      %v1108 = vsel %vm1044, 1, 0
      %v1109 = vsel %vm1045, 1, 0
      %v1110 = vsel %vm1046, 1, 0
      %v1111 = vsel %vm1047, 1, 0
      %v1112 = vsel %vm1048, 1, 0
      %v1113 = vsel %vm1049, 1, 0
      %v1114 = vsel %vm1050, 1, 0
      %v1115 = vsel %vm1051, 1, 0
      %v1116 = vsel %vm1052, 1, 0
      %v1117 = vsel %vm1053, 1, 0
      %v1118 = vsel %vm1054, 1, 0
      %v1119 = vsel %vm1055, 1, 0
      %v1120 = vsel %vm1056, 1, 0
      %v1121 = vsel %vm1057, 1, 0
      %v1122 = vsel %vm1058, 1, 0
      %v1123 = vsel %vm1059, 1, 0
      %v1124 = vsel %vm1060, 1, 0
      %v1125 = vsel %vm1061, 1, 0
      %v1126 = vsel %vm1062, 1, 0
      %v1127 = vsel %vm1063, 1, 0
      %v1128 = vsel %vm1064, 1, 0
      %v1129 = vsel %vm1065, 1, 0
      %v1130 = vsel %vm1066, 1, 0
      %v1131 = vsel %vm1067, 1, 0
      %v1132 = vsel %vm1068, 1, 0
      %v1133 = vsel %vm1069, 1, 0
      %v1134 = vsel %vm1070, 1, 0
      %v1135 = vsel %vm1071, 1, 0
      %v1136 = vsel %vm1072, 1, 0
      %v1137 = vsel %vm1073, 1, 0
      %v1138 = vsel %vm1074, 1, 0
      %v1139 = vsel %vm1075, 1, 0
      %v1140 = vsel %vm1076, 1, 0
      %v1141 = vsel %vm1077, 1, 0
      %v1142 = vsel %vm1078, 1, 0
      %v1143 = vsel %vm1079, 1, 0
      %v1144 = vsel %vm1080, 1, 0
      %v1145 = vsel %vm1081, 1, 0
      %v1146 = vsel %vm1082, 1, 0
      %v1147 = vsel %vm1083, 1, 0
      %v1148 = vsel %vm1084, 1, 0
      %v1149 = vsel %vm1085, 1, 0
      %v1150 = vsel %vm1086, 1, 0
      %v1151 = vsel %vm1087, 1, 0
      %v1152 = vsel %vm1088, 1, 0
      %v1153 = vsel %vm1089, 1, 0
      %v1154 = vsel %vm1090, 1, 0
      %v1155 = vsel %vm1091, 1, 0
      %v1156 = vsel %vm1092, 1, 0
      %v1157 = vsel %vm1093, 1, 0
      %v1158 = vsel %vm1094, 1, 0
      %v1159 = vsel %vm1095, 1, 0
      %v1160 = vsel %vm1096, 1, 0
      %v1161 = vsel %vm1097, 1, 0
      %v1162 = vsel %vm1098, 1, 0
      %v1163 = vsel %vm1099, 1, 0
      %v1164 = vsel %vm1100, 1, 0
      %v1165 = vsel %vm1101, 1, 0
      %v1166 = vsel %vm1102, 1, 0
      %v1167 = vsel %vm1103, 1, 0
      %v1168 = vcvt.s32.f32 %v1104
      %v1169 = vcvt.s32.f32 %v1105
      %v1170 = vcvt.s32.f32 %v1106
      %v1171 = vcvt.s32.f32 %v1107
      %v1172 = vcvt.s32.f32 %v1108
      %v1173 = vcvt.s32.f32 %v1109
      %v1174 = vcvt.s32.f32 %v1110
      %v1175 = vcvt.s32.f32 %v1111
      %v1176 = vcvt.s32.f32 %v1112
      %v1177 = vcvt.s32.f32 %v1113
      %v1178 = vcvt.s32.f32 %v1114
      %v1179 = vcvt.s32.f32 %v1115
      %v1180 = vcvt.s32.f32 %v1116
      %v1181 = vcvt.s32.f32 %v1117
      %v1182 = vcvt.s32.f32 %v1118
      %v1183 = vcvt.s32.f32 %v1119
      %v1184 = vcvt.s32.f32 %v1120
      %v1185 = vcvt.s32.f32 %v1121
      %v1186 = vcvt.s32.f32 %v1122
      %v1187 = vcvt.s32.f32 %v1123
      %v1188 = vcvt.s32.f32 %v1124
      %v1189 = vcvt.s32.f32 %v1125
      %v1190 = vcvt.s32.f32 %v1126
      %v1191 = vcvt.s32.f32 %v1127
      %v1192 = vcvt.s32.f32 %v1128
      %v1193 = vcvt.s32.f32 %v1129
      %v1194 = vcvt.s32.f32 %v1130
      %v1195 = vcvt.s32.f32 %v1131
      %v1196 = vcvt.s32.f32 %v1132
      %v1197 = vcvt.s32.f32 %v1133
      %v1198 = vcvt.s32.f32 %v1134
      %v1199 = vcvt.s32.f32 %v1135
      %v1200 = vcvt.s32.f32 %v1136
      %v1201 = vcvt.s32.f32 %v1137
      %v1202 = vcvt.s32.f32 %v1138
      %v1203 = vcvt.s32.f32 %v1139
      %v1204 = vcvt.s32.f32 %v1140
      %v1205 = vcvt.s32.f32 %v1141
      %v1206 = vcvt.s32.f32 %v1142
      %v1207 = vcvt.s32.f32 %v1143
      %v1208 = vcvt.s32.f32 %v1144
      %v1209 = vcvt.s32.f32 %v1145
      %v1210 = vcvt.s32.f32 %v1146
      %v1211 = vcvt.s32.f32 %v1147
      %v1212 = vcvt.s32.f32 %v1148
      %v1213 = vcvt.s32.f32 %v1149
      %v1214 = vcvt.s32.f32 %v1150
      %v1215 = vcvt.s32.f32 %v1151
      %v1216 = vcvt.s32.f32 %v1152
      %v1217 = vcvt.s32.f32 %v1153
      %v1218 = vcvt.s32.f32 %v1154
      %v1219 = vcvt.s32.f32 %v1155
      %v1220 = vcvt.s32.f32 %v1156
      %v1221 = vcvt.s32.f32 %v1157
      %v1222 = vcvt.s32.f32 %v1158
      %v1223 = vcvt.s32.f32 %v1159
      %v1224 = vcvt.s32.f32 %v1160
      %v1225 = vcvt.s32.f32 %v1161
      %v1226 = vcvt.s32.f32 %v1162
      %v1227 = vcvt.s32.f32 %v1163
      %v1228 = vcvt.s32.f32 %v1164
      %v1229 = vcvt.s32.f32 %v1165
      %v1230 = vcvt.s32.f32 %v1166
      %v1231 = vcvt.s32.f32 %v1167
      %v1232 = vld [vmem:[#allocation2] sm:$0xff]
      %v1233 = vld [vmem:[#allocation2 + $0x8] sm:$0xff]
      %v1234 = vld [vmem:[#allocation2 + $0x10] sm:$0xff]
      %v1235 = vld [vmem:[#allocation2 + $0x18] sm:$0xff]
      %v1236 = vld [vmem:[#allocation2 + $0x20] sm:$0xff]
      %v1237 = vld [vmem:[#allocation2 + $0x28] sm:$0xff]
      %v1238 = vld [vmem:[#allocation2 + $0x30] sm:$0xff]
      %v1239 = vld [vmem:[#allocation2 + $0x38] sm:$0xff]
      %v1240 = vmul.f32 %v945, %v989
      %v1241 = vmul.f32 %v947, %v990
      %v1242 = vmul.f32 %v949, %v989
      %v1243 = vmul.f32 %v951, %v990
      %v1244 = vmul.f32 %v955, %v989
      %v1245 = vmul.f32 %v957, %v990
      %v1246 = vmul.f32 %v959, %v989
      %v1247 = vmul.f32 %v961, %v990
      %1248 = vmatprep.subr.mxu0 %v1169
      %1249 = vmatpush1.xpose.msra.mxu0 %v1168
      %1250 = vmatprep.subr.mxu0 %v1171
      %1251 = vmatpush1.xpose.msra.mxu0 %v1170
      %1252 = vmatprep.subr.mxu0 %v1173
      %1253 = vmatpush1.xpose.msra.mxu0 %v1172
      %1254 = vmatprep.subr.mxu0 %v1175
      %1255 = vmatpush1.xpose.msra.mxu0 %v1174
      %1256 = vmatprep.subr.mxu0 %v1177
      %1257 = vmatpush1.xpose.msra.mxu0 %v1176
      %1258 = vmatprep.subr.mxu0 %v1179
      %1259 = vmatpush1.xpose.msra.mxu0 %v1178
      %1260 = vmatprep.subr.mxu0 %v1181
      %1261 = vmatpush1.xpose.msra.mxu0 %v1180
      %1262 = vmatprep.subr.mxu0 %v1183
      %1263 = vmatpush1.xpose.msra.mxu0 %v1182
      %1264 = vmatprep.subr.mxu0 %v1185
      %1265 = vmatpush1.xpose.msra.mxu0 %v1184
      %1266 = vmatprep.subr.mxu0 %v1187
      %1267 = vmatpush1.xpose.msra.mxu0 %v1186
      %1268 = vmatprep.subr.mxu0 %v1189
      %1269 = vmatpush1.xpose.msra.mxu0 %v1188
      %1270 = vmatprep.subr.mxu0 %v1191
      %1271 = vmatpush1.xpose.msra.mxu0 %v1190
      %1272 = vmatprep.subr.mxu0 %v1193
      %1273 = vmatpush1.xpose.msra.mxu0 %v1192
      %1274 = vmatprep.subr.mxu0 %v1195
      %1275 = vmatpush1.xpose.msra.mxu0 %v1194
      %1276 = vmatprep.subr.mxu0 %v1197
      %1277 = vmatpush1.xpose.msra.mxu0 %v1196
      %1278 = vmatprep.subr.mxu0 %v1199
      %1279 = vmatpush1.xpose.msra.mxu0 %v1198
      %1280 = vmatprep.subr.mxu0 %v1201
      %1281 = vmatpush1.xpose.msra.mxu0 %v1200
      %1282 = vmatprep.subr.mxu0 %v1203
      %1283 = vmatpush1.xpose.msra.mxu0 %v1202
      %1284 = vmatprep.subr.mxu0 %v1205
      %1285 = vmatpush1.xpose.msra.mxu0 %v1204
      %1286 = vmatprep.subr.mxu0 %v1207
      %1287 = vmatpush1.xpose.msra.mxu0 %v1206
      %1288 = vmatprep.subr.mxu0 %v1209
      %1289 = vmatpush1.xpose.msra.mxu0 %v1208
      %1290 = vmatprep.subr.mxu0 %v1211
      %1291 = vmatpush1.xpose.msra.mxu0 %v1210
      %1292 = vmatprep.subr.mxu0 %v1213
      %1293 = vmatpush1.xpose.msra.mxu0 %v1212
      %1294 = vmatprep.subr.mxu0 %v1215
      %1295 = vmatpush1.xpose.msra.mxu0 %v1214
      %1296 = vmatprep.subr.mxu0 %v1217
      %1297 = vmatpush1.xpose.msra.mxu0 %v1216
      %1298 = vmatprep.subr.mxu0 %v1219
      %1299 = vmatpush1.xpose.msra.mxu0 %v1218
      %1300 = vmatprep.subr.mxu0 %v1221
      %1301 = vmatpush1.xpose.msra.mxu0 %v1220
      %1302 = vmatprep.subr.mxu0 %v1223
      %1303 = vmatpush1.xpose.msra.mxu0 %v1222
      %1304 = vmatprep.subr.mxu0 %v1225
      %1305 = vmatpush1.xpose.msra.mxu0 %v1224
      %1306 = vmatprep.subr.mxu0 %v1227
      %1307 = vmatpush1.xpose.msra.mxu0 %v1226
      %1308 = vmatprep.subr.mxu0 %v1229
      %1309 = vmatpush1.xpose.msra.mxu0 %v1228
      %1310 = vmatprep.subr.mxu0 %v1231
      %1311 = vmatpush1.xpose.msra.mxu0 %v1230
      %1312 = vmatprep.mubr.f32.mxu0 %v1241
      %1313 = vmatmul.mubr.f32.gmra.mrb[0].mxu0 %v1240
      %v1314 = vpop.f32.mrb[0].mxu0
      %v1315 = vadd.f32 0.0, %v1314
      %v1316 = vpop.f32.mrb[0].mxu0
      %v1317 = vadd.f32 0.0, %v1316
      %1318 = vmatprep.mubr.f32.mxu0 %v1243
      %1319 = vmatmul.mubr.f32.gmra.mrb[0].mxu0 %v1242
      %v1320 = vpop.f32.mrb[0].mxu0
      %v1321 = vadd.f32 0.0, %v1320
      %v1322 = vpop.f32.mrb[0].mxu0
      %v1323 = vadd.f32 0.0, %v1322
      %1324 = vmatprep.mubr.f32.mxu0 %v1245
      %1325 = vmatmul.mubr.f32.gmra.mrb[0].mxu0 %v1244
      %v1326 = vpop.f32.mrb[0].mxu0
      %v1327 = vadd.f32 0.0, %v1326
      %v1328 = vpop.f32.mrb[0].mxu0
      %v1329 = vadd.f32 0.0, %v1328
      %1330 = vmatprep.mubr.f32.mxu0 %v1247
      %1331 = vmatmul.mubr.f32.gmra.mrb[0].mxu0 %v1246
      %v1332 = vpop.f32.mrb[0].mxu0
      %v1333 = vadd.f32 0.0, %v1332
      %v1334 = vpop.f32.mrb[0].mxu0
      %v1335 = vadd.f32 0.0, %v1334
      %1336 = vdwg.mxu0
      %v1337 = vadd.f32 %v1232, %v1315
      %v1338 = vadd.f32 %v1233, %v1317
      %v1339 = vadd.f32 %v1234, %v1321
      %v1340 = vadd.f32 %v1235, %v1323
      %v1341 = vadd.f32 %v1236, %v1327
      %v1342 = vadd.f32 %v1237, %v1329
      %v1343 = vadd.f32 %v1238, %v1333
      %v1344 = vadd.f32 %v1239, %v1335
      %1345 = vst [vmem:[#allocation2] sm:$0xff] %v1337
      %1346 = vst [vmem:[#allocation2 + $0x8] sm:$0xff] %v1338
      %1347 = vst [vmem:[#allocation2 + $0x10] sm:$0xff] %v1339
      %1348 = vst [vmem:[#allocation2 + $0x18] sm:$0xff] %v1340
      %1349 = vst [vmem:[#allocation2 + $0x20] sm:$0xff] %v1341
      %1350 = vst [vmem:[#allocation2 + $0x28] sm:$0xff] %v1342
      %1351 = vst [vmem:[#allocation2 + $0x30] sm:$0xff] %v1343
      %1352 = vst [vmem:[#allocation2 + $0x38] sm:$0xff] %v1344
      %v1353 = vld [vmem:[#allocation3] sm:$0x3]
      %1354 = vmatprep.subr.mxu0 %v1169
      %1355 = vmatpush1.xpose.msra.mxu0 %v1168
      %1356 = vmatprep.subr.mxu0 %v1171
      %1357 = vmatpush1.xpose.msra.mxu0 %v1170
      %1358 = vmatprep.subr.mxu0 %v1173
      %1359 = vmatpush1.xpose.msra.mxu0 %v1172
      %1360 = vmatprep.subr.mxu0 %v1175
      %1361 = vmatpush1.xpose.msra.mxu0 %v1174
      %1362 = vmatprep.subr.mxu0 %v1177
      %1363 = vmatpush1.xpose.msra.mxu0 %v1176
      %1364 = vmatprep.subr.mxu0 %v1179
      %1365 = vmatpush1.xpose.msra.mxu0 %v1178
      %1366 = vmatprep.subr.mxu0 %v1181
      %1367 = vmatpush1.xpose.msra.mxu0 %v1180
      %1368 = vmatprep.subr.mxu0 %v1183
      %1369 = vmatpush1.xpose.msra.mxu0 %v1182
      %1370 = vmatprep.subr.mxu0 %v1185
      %1371 = vmatpush1.xpose.msra.mxu0 %v1184
      %1372 = vmatprep.subr.mxu0 %v1187
      %1373 = vmatpush1.xpose.msra.mxu0 %v1186
      %1374 = vmatprep.subr.mxu0 %v1189
      %1375 = vmatpush1.xpose.msra.mxu0 %v1188
      %1376 = vmatprep.subr.mxu0 %v1191
      %1377 = vmatpush1.xpose.msra.mxu0 %v1190
      %1378 = vmatprep.subr.mxu0 %v1193
      %1379 = vmatpush1.xpose.msra.mxu0 %v1192
      %1380 = vmatprep.subr.mxu0 %v1195
      %1381 = vmatpush1.xpose.msra.mxu0 %v1194
      %1382 = vmatprep.subr.mxu0 %v1197
      %1383 = vmatpush1.xpose.msra.mxu0 %v1196
      %1384 = vmatprep.subr.mxu0 %v1199
      %1385 = vmatpush1.xpose.msra.mxu0 %v1198
      %1386 = vmatprep.subr.mxu0 %v1201
      %1387 = vmatpush1.xpose.msra.mxu0 %v1200
      %1388 = vmatprep.subr.mxu0 %v1203
      %1389 = vmatpush1.xpose.msra.mxu0 %v1202
      %1390 = vmatprep.subr.mxu0 %v1205
      %1391 = vmatpush1.xpose.msra.mxu0 %v1204
      %1392 = vmatprep.subr.mxu0 %v1207
      %1393 = vmatpush1.xpose.msra.mxu0 %v1206
      %1394 = vmatprep.subr.mxu0 %v1209
      %1395 = vmatpush1.xpose.msra.mxu0 %v1208
      %1396 = vmatprep.subr.mxu0 %v1211
      %1397 = vmatpush1.xpose.msra.mxu0 %v1210
      %1398 = vmatprep.subr.mxu0 %v1213
      %1399 = vmatpush1.xpose.msra.mxu0 %v1212
      %1400 = vmatprep.subr.mxu0 %v1215
      %1401 = vmatpush1.xpose.msra.mxu0 %v1214
      %1402 = vmatprep.subr.mxu0 %v1217
      %1403 = vmatpush1.xpose.msra.mxu0 %v1216
      %1404 = vmatprep.subr.mxu0 %v1219
      %1405 = vmatpush1.xpose.msra.mxu0 %v1218
      %1406 = vmatprep.subr.mxu0 %v1221
      %1407 = vmatpush1.xpose.msra.mxu0 %v1220
      %1408 = vmatprep.subr.mxu0 %v1223
      %1409 = vmatpush1.xpose.msra.mxu0 %v1222
      %1410 = vmatprep.subr.mxu0 %v1225
      %1411 = vmatpush1.xpose.msra.mxu0 %v1224
      %1412 = vmatprep.subr.mxu0 %v1227
      %1413 = vmatpush1.xpose.msra.mxu0 %v1226
      %1414 = vmatprep.subr.mxu0 %v1229
      %1415 = vmatpush1.xpose.msra.mxu0 %v1228
      %1416 = vmatprep.subr.mxu0 %v1231
      %1417 = vmatpush1.xpose.msra.mxu0 %v1230
      %1418 = vmatprep.mubr.f32.mxu0 %v990
      %1419 = vmatmul.mubr.f32.gmra.mrb[0].mxu0 %v989
      %v1420 = vpop.f32.mrb[0].mxu0
      %v1421 = vadd.f32 0.0, %v1420
      %v1422 = vpop.f32.mrb[0].mxu0
      %v1423 = vadd.f32 0.0, %v1422
      %1424 = vdwg.mxu0
      %v1427 = vcombine.low %v1421, %v1423
      %v1429 = vunpack.c.l.s4 1966171168
      %v1430 = vunpack.c.0.s8 %v1429
      %v1431 = vlaneseq
      %v1432 = vshrl.u32 %v1431, 7
      %v1433 = vsub.s32 %v1430, %v1432
      %v1434 = vrot.slane %v1427, %v1433
      %v1436 = vunpack.c.l.s4 1966171168
      %v1437 = vunpack.c.0.s8 %v1436
      %v1438 = vlaneseq
      %v1439 = vshrl.u32 %v1438, 7
      %v1440 = vsub.s32 %v1437, %v1439
      %v1441 = vrot.slane %v1434, %v1440
      %v1443 = vadd.f32 %v1353, %v1441
      %v1444 = vlaneseq
      %vm1445 = vcmp.ge.s32.totalorder %v1444, 0
      %vm1446 = vcmp.lt.s32.totalorder %v1444, 256
      %vm1447 = vmand %vm1445, %vm1446
      %1448 = vst.msk [vmem:[#allocation3] sm:$0x3] %vm1447, %v1443
      // Predicated region
      $region45: #{conv_onet_forward.2} parent=39 // pred_check
        %p1449 = pneg %p254
      $region46: #{conv_onet_forward.2} parent=39 // pred_check_branch
        %1451 = sbr.rel (%p1449) target = $region48
      $region47: #{conv_onet_forward.2} parent=39 // pred_region
        %v1452 = vld [vmem:[#allocation2] sm:$0xff]
        %v1453 = vld [vmem:[#allocation2 + $0x8] sm:$0xff]
        %v1454 = vld [vmem:[#allocation2 + $0x10] sm:$0xff]
        %v1455 = vld [vmem:[#allocation2 + $0x18] sm:$0xff]
        %v1456 = vld [vmem:[#allocation2 + $0x20] sm:$0xff]
        %v1457 = vld [vmem:[#allocation2 + $0x28] sm:$0xff]
        %v1458 = vld [vmem:[#allocation2 + $0x30] sm:$0xff]
        %v1459 = vld [vmem:[#allocation2 + $0x38] sm:$0xff]
        %v1460 = vld [vmem:[#allocation3] sm:$0x3]
        %v1461 = vmax.f32 %v1460, 1.0
        %v1463 = vlaneseq
        %v1464 = vshrl.u32 %v1463, 7
        %v1465 = vsub.s32 0, %v1464
        %v1466 = vrot.slane %v1461, %v1465
        %v1467 = vlaneseq
        %v1468 = vshrl.u32 %v1467, 7
        %v1469 = vsub.s32 1, %v1468
        %v1470 = vrot.slane %v1461, %v1469
        %v1473 = vrcp.pop %v1466
        %v1474 = vmul.f32 %v1452, %v1473
        %v1475 = vrcp.pop %v1470
        %v1476 = vmul.f32 %v1453, %v1475
        %v1477 = vmul.f32 %v1454, %v1473
        %v1478 = vmul.f32 %v1455, %v1475
        %v1479 = vmul.f32 %v1456, %v1473
        %v1480 = vmul.f32 %v1457, %v1475
        %v1481 = vmul.f32 %v1458, %v1473
        %v1482 = vmul.f32 %v1459, %v1475
        %1483 = vst [vmem:[%s252] sm:$0xff] %v1474
        %1484 = vst [vmem:[%s252 + $0x8] sm:$0xff] %v1476
        %1485 = vst [vmem:[%s252 + $0x10] sm:$0xff] %v1477
        %1486 = vst [vmem:[%s252 + $0x18] sm:$0xff] %v1478
        %1487 = vst [vmem:[%s252 + $0x20] sm:$0xff] %v1479
        %1488 = vst [vmem:[%s252 + $0x28] sm:$0xff] %v1480
        %1489 = vst [vmem:[%s252 + $0x30] sm:$0xff] %v1481
        %1490 = vst [vmem:[%s252 + $0x38] sm:$0xff] %v1482
      $region48: #{conv_onet_forward.2} parent=39 // pred_fallthru
        _
      %p1491 = scmp.lt.s32.totalorder %s20, 1
      %s1492 = scalar_select %p1491, %s20, 1
      %s1493 = smul.addr %s1492, 8
      %s1494 = smul.addr %s1493, 8
      %s1495 = scalar_lea.vmem %s5, %s1494
      // Predicated region
      $region49: #{conv_onet_forward.2} parent=39 // pred_check
        %p1496 = pneg %p158
      $region50: #{conv_onet_forward.2} parent=39 // pred_check_branch
        %1498 = sbr.rel (%p1496) target = $region52
      $region51: #{conv_onet_forward.2} parent=39 // pred_region
        _
      $region52: #{conv_onet_forward.2} parent=39 // pred_fallthru
        _
    $region40: #{conv_onet_forward.2} parent=5 // pred_fallthru
      _
    %p1499 = scmp.le.s32.totalorder 2, %s11
    // Predicated region
    $region53: #{conv_onet_forward.2} parent=5 // pred_check
      %p1500 = pneg %p1499
    $region54: #{conv_onet_forward.2} parent=5 // pred_check_branch
      %1502 = sbr.rel (%p1500) target = $region56
    $region55: #{conv_onet_forward.2} parent=5 // pred_region
      %s1503 = ssub.s32 %s11, 2
      // Predicated region
      $region57: #{conv_onet_forward.2} parent=55 // pred_check
        %p1504 = pneg %p164
      $region58: #{conv_onet_forward.2} parent=55 // pred_check_branch
        %1506 = sbr.rel (%p1504) target = $region60
      $region59: #{conv_onet_forward.2} parent=55 // pred_region
        %p1507 = scmp.lt.s32.totalorder %s22, 1
        %s1508 = scalar_select %p1507, %s22, 1
        %s1509 = smul.addr %s1508, 8
        %s1510 = smul.addr %s1509, 8
        %s1511 = scalar_lea.vmem %s5, %s1510
      $region60: #{conv_onet_forward.2} parent=55 // pred_fallthru
        _
    $region56: #{conv_onet_forward.2} parent=5 // pred_fallthru
      _
  $region6: #{conv_onet_forward.2} parent=0 // loop_footer
    %s15 = sadd.s32 1, %s11
  $region7: #{conv_onet_forward.2} parent=0 // loop_footer_branch
    %10 = sbr.rel target = $region3
  $region8: #{conv_onet_forward.2} parent=0 // loop_exit
    _

// kernel: conv_onet_forward.3
$region0: #{conv_onet_forward.3}
  #allocation0 [shape = 'u32[]', space=smem, size = 0x4, offset = 0x4, fixed_abs, tag = 'smem constant byte address 0x4 - core index']
  #allocation1 [shape = 'u32[144,128]{1,0:T(1,128)}', space=vmem, size = 0x12000, scoped, tag = 'internal scratch']
  #allocation2 [shape = 'f32[1,1]{1,0:T(1,128)S(1)}', space=vmem, size = 0x200, scoped, tag = 'scoped memory for conv_onet_forward.3']
  %s0 = inlined_call_operand.vmem [shape: f32[2,3,256], index: 0, kind: input, shape index: {}]
  %s1 = inlined_call_operand.vmem [shape: f32[2,32,256], index: 1, kind: input, shape index: {}]
  %s2 = inlined_call_operand.vmem [shape: f32[64,3], index: 2, kind: input, shape index: {}]
  %s3 = inlined_call_operand.vmem [shape: bf16[64,32], index: 3, kind: input, shape index: {}]
  %s4 = inlined_call_operand.vmem [shape: f32[64,1], index: 4, kind: input, shape index: {}]
  %s5 = inlined_call_operand.vmem [shape: bf16[128,32], index: 5, kind: input, shape index: {}]
  %s6 = inlined_call_operand.vmem [shape: f32[128,1], index: 6, kind: input, shape index: {}]
  %s7 = inlined_call_operand.vmem [shape: f32[32,1], index: 7, kind: input, shape index: {}]
  %s8 = inlined_call_operand.<no memory space> [shape: f32[1,1], index: 8, kind: input, shape index: {}]
  %s9 = inlined_call_operand.vmem [shape: f32[2,1,256], index: 9, kind: output, shape index: {}]
  %s10 = sld [smem:[#allocation0]]
  $region69: #{conv_onet_forward.3} parent=0
    _
  %s12 = ssub.s32 1, %s10
  %s13 = scalar_select 0, %s12, %s10
  %v14 = vstv %s8
  %15 = vst [vmem:[#allocation2] sm:$0x1] %v14
  loop: start=0, step=1, limit=4
  $region2: #{conv_onet_forward.3} parent=0 // loop_pre_header
    _
  $region3: #{conv_onet_forward.3} parent=0 // loop_header
    %s17 = sphi 0, %s21
    %p18 = scmp.ge.s32.totalorder %s17, 4
    %s24 = sphi 0, %s36
    %s25 = sphi 0, %s32
    %s26 = sphi 0, %s24
    %s27 = sphi 0, %s25
    %s28 = sphi 0, %s26
    %s29 = sphi 0, %s27
    %s41 = sphi 0, %s43
    %s44 = sphi 0, %s41
    %s45 = sphi 0, %s44
    %s61 = sphi 0, %s45
    %s67 = sphi 0, %s69
    %s70 = sphi 0, %s67
    %s71 = sphi 0, %s70
    %s87 = sphi 0, %s71
    %s91 = sphi 0, %s91
    %s93 = sphi 0, %s91
    %s94 = sphi 0, %s93
    %s108 = sphi 0, %s94
    %s112 = sphi 0, %s112
    %s114 = sphi 0, %s112
    %s115 = sphi 0, %s114
    %s129 = sphi 0, %s115
    %s133 = sphi 0, %s133
    %s135 = sphi 0, %s133
    %s136 = sphi 0, %s135
    %s150 = sphi 0, %s136
    %s154 = sphi 0, %s154
    %s156 = sphi 0, %s154
    %s157 = sphi 0, %s156
    %s171 = sphi 0, %s157
    %s175 = sphi 0, %s175
    %s177 = sphi 0, %s175
    %s178 = sphi 0, %s177
    %s192 = sphi 0, %s178
    %s196 = sphi 0, %s196
    %s198 = sphi 0, %s196
    %s199 = sphi 0, %s198
    %s213 = sphi 0, %s199
    %s217 = sphi 0, %s217
    %s219 = sphi 0, %s217
    %s220 = sphi 0, %s219
    %s234 = sphi 0, %s220
    %s242 = sphi 0, %s244
    %s245 = sphi 0, %s242
    %s246 = sphi 0, %s245
    %s262 = sphi 0, %s246
  $region4: #{conv_onet_forward.3} parent=0 // loop_header_branch
    %20 = sbr.rel (%p18) target = $region8
  $region5: #{conv_onet_forward.3} parent=0 // loop_body
    %s22 = ssub.s32 %s17, 1
    %s23 = ssub.s32 %s17, 2
    %s30 = sadd.s32 1, %s25
    %p31 = scmp.ge.s32.totalorder %s30, 1
    %s32 = scalar_select %p31, 0, %s30
    %s33 = sadd.s32 1, %s24
    %s34 = scalar_select %p31, %s33, %s24
    %p35 = scmp.ge.s32.totalorder %s34, 2
    %s36 = scalar_select %p35, 0, %s34
    %s37 = ssub.s32 %s24, %s36
    %s38 = ssub.s32 %s25, %s32
    %s39 = sor.u32 %s37, %s38
    %p40 = scmp.eq.s32.totalorder %s39, 0
    %s42 = sadd.s32 %s41, 1
    %s43 = scalar_select %p40, %s41, %s42
    %p46 = pneg %p40
    %p47 = scmp.eq.s32.totalorder %s17, 1
    %p48 = por %p46, %p47
    %p49 = scmp.ne.s32.totalorder %s41, %s44
    %p50 = scmp.eq.s32.totalorder %s17, 0
    %p51 = por %p49, %p50
    %p52 = scmp.ne.s32.totalorder %s41, %s44
    %p53 = scmp.eq.s32.totalorder %s22, 1
    %p54 = por %p52, %p53
    %p55 = scmp.ne.s32.totalorder %s44, %s45
    %p56 = scmp.eq.s32.totalorder %s22, 0
    %p57 = por %p55, %p56
    %p58 = scmp.ne.s32.totalorder %s44, %s45
    %p59 = scmp.eq.s32.totalorder %s23, 1
    %p60 = por %p58, %p59
    %p62 = scmp.ne.s32.totalorder %s45, %s61
    %p63 = scmp.eq.s32.totalorder %s23, 0
    %p64 = por %p62, %p63
    %s65 = ssub.s32 %s24, %s36
    %p66 = scmp.eq.s32.totalorder %s65, 0
    %s68 = sadd.s32 %s67, 1
    %s69 = scalar_select %p66, %s67, %s68
    %p72 = pneg %p66
    %p73 = scmp.eq.s32.totalorder %s17, 1
    %p74 = por %p72, %p73
    %p75 = scmp.ne.s32.totalorder %s67, %s70
    %p76 = scmp.eq.s32.totalorder %s17, 0
    %p77 = por %p75, %p76
    %p78 = scmp.ne.s32.totalorder %s67, %s70
    %p79 = scmp.eq.s32.totalorder %s22, 1
    %p80 = por %p78, %p79
    %p81 = scmp.ne.s32.totalorder %s70, %s71
    %p82 = scmp.eq.s32.totalorder %s22, 0
    %p83 = por %p81, %p82
    %p84 = scmp.ne.s32.totalorder %s70, %s71
    %p85 = scmp.eq.s32.totalorder %s23, 1
    %p86 = por %p84, %p85
    %p88 = scmp.ne.s32.totalorder %s71, %s87
    %p89 = scmp.eq.s32.totalorder %s23, 0
    %p90 = por %p88, %p89
    %s92 = sadd.s32 %s91, 1
    %p95 = scmp.eq.s32.totalorder %s17, 1
    %p96 = scmp.ne.s32.totalorder %s91, %s93
    %p97 = scmp.eq.s32.totalorder %s17, 0
    %p98 = por %p96, %p97
    %p99 = scmp.ne.s32.totalorder %s91, %s93
    %p100 = scmp.eq.s32.totalorder %s22, 1
    %p101 = por %p99, %p100
    %p102 = scmp.ne.s32.totalorder %s93, %s94
    %p103 = scmp.eq.s32.totalorder %s22, 0
    %p104 = por %p102, %p103
    %p105 = scmp.ne.s32.totalorder %s93, %s94
    %p106 = scmp.eq.s32.totalorder %s23, 1
    %p107 = por %p105, %p106
    %p109 = scmp.ne.s32.totalorder %s94, %s108
    %p110 = scmp.eq.s32.totalorder %s23, 0
    %p111 = por %p109, %p110
    %s113 = sadd.s32 %s112, 1
    %p116 = scmp.eq.s32.totalorder %s17, 1
    %p117 = scmp.ne.s32.totalorder %s112, %s114
    %p118 = scmp.eq.s32.totalorder %s17, 0
    %p119 = por %p117, %p118
    %p120 = scmp.ne.s32.totalorder %s112, %s114
    %p121 = scmp.eq.s32.totalorder %s22, 1
    %p122 = por %p120, %p121
    %p123 = scmp.ne.s32.totalorder %s114, %s115
    %p124 = scmp.eq.s32.totalorder %s22, 0
    %p125 = por %p123, %p124
    %p126 = scmp.ne.s32.totalorder %s114, %s115
    %p127 = scmp.eq.s32.totalorder %s23, 1
    %p128 = por %p126, %p127
    %p130 = scmp.ne.s32.totalorder %s115, %s129
    %p131 = scmp.eq.s32.totalorder %s23, 0
    %p132 = por %p130, %p131
    %s134 = sadd.s32 %s133, 1
    %p137 = scmp.eq.s32.totalorder %s17, 1
    %p138 = scmp.ne.s32.totalorder %s133, %s135
    %p139 = scmp.eq.s32.totalorder %s17, 0
    %p140 = por %p138, %p139
    %p141 = scmp.ne.s32.totalorder %s133, %s135
    %p142 = scmp.eq.s32.totalorder %s22, 1
    %p143 = por %p141, %p142
    %p144 = scmp.ne.s32.totalorder %s135, %s136
    %p145 = scmp.eq.s32.totalorder %s22, 0
    %p146 = por %p144, %p145
    %p147 = scmp.ne.s32.totalorder %s135, %s136
    %p148 = scmp.eq.s32.totalorder %s23, 1
    %p149 = por %p147, %p148
    %p151 = scmp.ne.s32.totalorder %s136, %s150
    %p152 = scmp.eq.s32.totalorder %s23, 0
    %p153 = por %p151, %p152
    %s155 = sadd.s32 %s154, 1
    %p158 = scmp.eq.s32.totalorder %s17, 1
    %p159 = scmp.ne.s32.totalorder %s154, %s156
    %p160 = scmp.eq.s32.totalorder %s17, 0
    %p161 = por %p159, %p160
    %p162 = scmp.ne.s32.totalorder %s154, %s156
    %p163 = scmp.eq.s32.totalorder %s22, 1
    %p164 = por %p162, %p163
    %p165 = scmp.ne.s32.totalorder %s156, %s157
    %p166 = scmp.eq.s32.totalorder %s22, 0
    %p167 = por %p165, %p166
    %p168 = scmp.ne.s32.totalorder %s156, %s157
    %p169 = scmp.eq.s32.totalorder %s23, 1
    %p170 = por %p168, %p169
    %p172 = scmp.ne.s32.totalorder %s157, %s171
    %p173 = scmp.eq.s32.totalorder %s23, 0
    %p174 = por %p172, %p173
    %s176 = sadd.s32 %s175, 1
    %p179 = scmp.eq.s32.totalorder %s17, 1
    %p180 = scmp.ne.s32.totalorder %s175, %s177
    %p181 = scmp.eq.s32.totalorder %s17, 0
    %p182 = por %p180, %p181
    %p183 = scmp.ne.s32.totalorder %s175, %s177
    %p184 = scmp.eq.s32.totalorder %s22, 1
    %p185 = por %p183, %p184
    %p186 = scmp.ne.s32.totalorder %s177, %s178
    %p187 = scmp.eq.s32.totalorder %s22, 0
    %p188 = por %p186, %p187
    %p189 = scmp.ne.s32.totalorder %s177, %s178
    %p190 = scmp.eq.s32.totalorder %s23, 1
    %p191 = por %p189, %p190
    %p193 = scmp.ne.s32.totalorder %s178, %s192
    %p194 = scmp.eq.s32.totalorder %s23, 0
    %p195 = por %p193, %p194
    %s197 = sadd.s32 %s196, 1
    %p200 = scmp.eq.s32.totalorder %s17, 1
    %p201 = scmp.ne.s32.totalorder %s196, %s198
    %p202 = scmp.eq.s32.totalorder %s17, 0
    %p203 = por %p201, %p202
    %p204 = scmp.ne.s32.totalorder %s196, %s198
    %p205 = scmp.eq.s32.totalorder %s22, 1
    %p206 = por %p204, %p205
    %p207 = scmp.ne.s32.totalorder %s198, %s199
    %p208 = scmp.eq.s32.totalorder %s22, 0
    %p209 = por %p207, %p208
    %p210 = scmp.ne.s32.totalorder %s198, %s199
    %p211 = scmp.eq.s32.totalorder %s23, 1
    %p212 = por %p210, %p211
    %p214 = scmp.ne.s32.totalorder %s199, %s213
    %p215 = scmp.eq.s32.totalorder %s23, 0
    %p216 = por %p214, %p215
    %s218 = sadd.s32 %s217, 1
    %p221 = scmp.eq.s32.totalorder %s17, 1
    %p222 = scmp.ne.s32.totalorder %s217, %s219
    %p223 = scmp.eq.s32.totalorder %s17, 0
    %p224 = por %p222, %p223
    %p225 = scmp.ne.s32.totalorder %s217, %s219
    %p226 = scmp.eq.s32.totalorder %s22, 1
    %p227 = por %p225, %p226
    %p228 = scmp.ne.s32.totalorder %s219, %s220
    %p229 = scmp.eq.s32.totalorder %s22, 0
    %p230 = por %p228, %p229
    %p231 = scmp.ne.s32.totalorder %s219, %s220
    %p232 = scmp.eq.s32.totalorder %s23, 1
    %p233 = por %p231, %p232
    %p235 = scmp.ne.s32.totalorder %s220, %s234
    %p236 = scmp.eq.s32.totalorder %s23, 0
    %p237 = por %p235, %p236
    %s238 = ssub.s32 %s24, %s36
    %s239 = ssub.s32 %s25, %s32
    %s240 = sor.u32 %s238, %s239
    %p241 = scmp.eq.s32.totalorder %s240, 0
    %s243 = sadd.s32 %s242, 1
    %s244 = scalar_select %p241, %s242, %s243
    %p247 = pneg %p241
    %p248 = scmp.eq.s32.totalorder %s17, 1
    %p249 = por %p247, %p248
    %p250 = scmp.ne.s32.totalorder %s242, %s245
    %p251 = scmp.eq.s32.totalorder %s17, 0
    %p252 = por %p250, %p251
    %p253 = scmp.ne.s32.totalorder %s242, %s245
    %p254 = scmp.eq.s32.totalorder %s22, 1
    %p255 = por %p253, %p254
    %p256 = scmp.ne.s32.totalorder %s245, %s246
    %p257 = scmp.eq.s32.totalorder %s22, 0
    %p258 = por %p256, %p257
    %p259 = scmp.ne.s32.totalorder %s245, %s246
    %p260 = scmp.eq.s32.totalorder %s23, 1
    %p261 = por %p259, %p260
    %p263 = scmp.ne.s32.totalorder %s246, %s262
    %p264 = scmp.eq.s32.totalorder %s23, 0
    %p265 = por %p263, %p264
    %p266 = scmp.le.s32.totalorder 1, %s17
    %p267 = scmp.lt.s32.totalorder %s17, 3
    %p268 = pnand %p266, %p267
    %p269 = pneg %p268
    // Predicated region
    $region9: #{conv_onet_forward.3} parent=5 // pred_check
      _
    $region10: #{conv_onet_forward.3} parent=5 // pred_check_branch
      %271 = sbr.rel (%p268) target = $region12
    $region11: #{conv_onet_forward.3} parent=5 // pred_region
      %s272 = ssub.s32 %s17, 1
      // Predicated region
      $region13: #{conv_onet_forward.3} parent=11 // pred_check
        %p273 = pneg %p104
      $region14: #{conv_onet_forward.3} parent=11 // pred_check_branch
        %275 = sbr.rel (%p273) target = $region16
      $region15: #{conv_onet_forward.3} parent=11 // pred_region
        _
      $region16: #{conv_onet_forward.3} parent=11 // pred_fallthru
        _
      // Predicated region
      $region17: #{conv_onet_forward.3} parent=11 // pred_check
        %p276 = pneg %p125
      $region18: #{conv_onet_forward.3} parent=11 // pred_check_branch
        %278 = sbr.rel (%p276) target = $region20
      $region19: #{conv_onet_forward.3} parent=11 // pred_region
        _
      $region20: #{conv_onet_forward.3} parent=11 // pred_fallthru
        _
      // Predicated region
      $region21: #{conv_onet_forward.3} parent=11 // pred_check
        %p279 = pneg %p146
      $region22: #{conv_onet_forward.3} parent=11 // pred_check_branch
        %281 = sbr.rel (%p279) target = $region24
      $region23: #{conv_onet_forward.3} parent=11 // pred_region
        _
      $region24: #{conv_onet_forward.3} parent=11 // pred_fallthru
        _
      // Predicated region
      $region25: #{conv_onet_forward.3} parent=11 // pred_check
        %p282 = pneg %p167
      $region26: #{conv_onet_forward.3} parent=11 // pred_check_branch
        %284 = sbr.rel (%p282) target = $region28
      $region27: #{conv_onet_forward.3} parent=11 // pred_region
        _
      $region28: #{conv_onet_forward.3} parent=11 // pred_fallthru
        _
      // Predicated region
      $region29: #{conv_onet_forward.3} parent=11 // pred_check
        %p285 = pneg %p188
      $region30: #{conv_onet_forward.3} parent=11 // pred_check_branch
        %287 = sbr.rel (%p285) target = $region32
      $region31: #{conv_onet_forward.3} parent=11 // pred_region
        _
      $region32: #{conv_onet_forward.3} parent=11 // pred_fallthru
        _
      // Predicated region
      $region33: #{conv_onet_forward.3} parent=11 // pred_check
        %p288 = pneg %p209
      $region34: #{conv_onet_forward.3} parent=11 // pred_check_branch
        %290 = sbr.rel (%p288) target = $region36
      $region35: #{conv_onet_forward.3} parent=11 // pred_region
        _
      $region36: #{conv_onet_forward.3} parent=11 // pred_fallthru
        _
      // Predicated region
      $region37: #{conv_onet_forward.3} parent=11 // pred_check
        %p291 = pneg %p230
      $region38: #{conv_onet_forward.3} parent=11 // pred_check_branch
        %293 = sbr.rel (%p291) target = $region40
      $region39: #{conv_onet_forward.3} parent=11 // pred_region
        _
      $region40: #{conv_onet_forward.3} parent=11 // pred_fallthru
        _
    $region12: #{conv_onet_forward.3} parent=5 // pred_fallthru
      _
    %p294 = scmp.lt.s32.totalorder %s17, 2
    // Predicated region
    $region41: #{conv_onet_forward.3} parent=5 // pred_check
      %p295 = pneg %p294
    $region42: #{conv_onet_forward.3} parent=5 // pred_check_branch
      %297 = sbr.rel (%p295) target = $region44
    $region43: #{conv_onet_forward.3} parent=5 // pred_region
      // Predicated region
      $region45: #{conv_onet_forward.3} parent=43 // pred_check
        %p298 = pneg %p51
      $region46: #{conv_onet_forward.3} parent=43 // pred_check_branch
        %300 = sbr.rel (%p298) target = $region48
      $region47: #{conv_onet_forward.3} parent=43 // pred_region
        %s301 = smul.u32 2, %s25
        %p302 = scmp.lt.s32.totalorder %s24, 1
        %s303 = scalar_select %p302, %s24, 1
        %p304 = scmp.lt.s32.totalorder %s301, 1
        %s305 = scalar_select %p304, %s301, 1
        %s306 = smul.addr %s303, 2
        %s307 = sadd.s32 %s305, %s306
        %s308 = smul.addr %s307, 4
        %s309 = scalar_lea.vmem %s0, %s308
        %s310 = smul.u32 2, %s25
      $region48: #{conv_onet_forward.3} parent=43 // pred_fallthru
        _
      // Predicated region
      $region49: #{conv_onet_forward.3} parent=43 // pred_check
        %p311 = pneg %p77
      $region50: #{conv_onet_forward.3} parent=43 // pred_check_branch
        %313 = sbr.rel (%p311) target = $region52
      $region51: #{conv_onet_forward.3} parent=43 // pred_region
        %p314 = scmp.lt.s32.totalorder %s24, 1
        %s315 = scalar_select %p314, %s24, 1
        %s316 = smul.addr %s315, 8
        %s317 = smul.addr %s316, 8
        %s318 = scalar_lea.vmem %s1, %s317
      $region52: #{conv_onet_forward.3} parent=43 // pred_fallthru
        _
    $region44: #{conv_onet_forward.3} parent=5 // pred_fallthru
      _
    %p319 = scmp.le.s32.totalorder 1, %s17
    %p320 = scmp.lt.s32.totalorder %s17, 3
    %p321 = pnand %p319, %p320
    %p322 = pneg %p321
    // Predicated region
    $region53: #{conv_onet_forward.3} parent=5 // pred_check
      _
    $region54: #{conv_onet_forward.3} parent=5 // pred_check_branch
      %324 = sbr.rel (%p321) target = $region56
    $region55: #{conv_onet_forward.3} parent=5 // pred_region
      %s325 = ssub.s32 %s17, 1
      %s326 = smul.u32 2, %s27
      %p327 = scmp.lt.s32.totalorder %s26, 1
      %s328 = scalar_select %p327, %s26, 1
      %p329 = scmp.lt.s32.totalorder %s326, 1
      %s330 = scalar_select %p329, %s326, 1
      %s331 = smul.addr %s328, 2
      %s332 = sadd.s32 %s330, %s331
      %s333 = smul.addr %s332, 4
      %s334 = scalar_lea.vmem %s0, %s333
      %p335 = pneg %p57
      %p336 = pneg %p54
      %p337 = scmp.lt.s32.totalorder %s26, 1
      %s338 = scalar_select %p337, %s26, 1
      %s339 = smul.addr %s338, 8
      %s340 = smul.addr %s339, 8
      %s341 = scalar_lea.vmem %s1, %s340
      %p342 = pneg %p83
      %p343 = pneg %p80
      %p344 = pneg %p104
      %p345 = pneg %p101
      %p346 = pneg %p125
      %p347 = pneg %p122
      %p348 = pneg %p146
      %p349 = pneg %p143
      %p350 = pneg %p167
      %p351 = pneg %p164
      %p352 = pneg %p188
      %p353 = pneg %p185
      %p354 = pneg %p209
      %p355 = pneg %p206
      %p356 = pneg %p230
      %p357 = pneg %p227
      %p358 = pneg %p258
      %p359 = pneg %p255
      %s360 = smul.u32 2, %s27
      %p361 = scmp.lt.s32.totalorder %s26, 1
      %s362 = scalar_select %p361, %s26, 1
      %p363 = scmp.lt.s32.totalorder %s360, 1
      %s364 = scalar_select %p363, %s360, 1
      %s365 = smul.addr %s362, 2
      %s366 = sadd.s32 %s364, %s365
      %s367 = scalar_lea.vmem %s9, %s366
      %s368 = smul.u32 2, %s27
      %p369 = scmp.lt.s32.totalorder %s26, 1
      %s370 = scalar_select %p369, %s26, 1
      %p371 = scmp.lt.s32.totalorder %s368, 1
      %s372 = scalar_select %p371, %s368, 1
      %s373 = smul.addr %s370, 2
      %s374 = sadd.s32 %s372, %s373
      %s375 = smul.addr %s374, 4
      %s376 = scalar_lea.vmem %s0, %s375
      %s377 = smul.u32 2, %s27
      %p378 = scmp.lt.s32.totalorder %s26, 1
      %s379 = scalar_select %p378, %s26, 1
      %s380 = smul.addr %s379, 8
      %s381 = smul.addr %s380, 8
      %s382 = scalar_lea.vmem %s1, %s381
      %s383 = smul.u32 2, %s27
      %p384 = scmp.lt.s32.totalorder %s26, 1
      %s385 = scalar_select %p384, %s26, 1
      %p386 = scmp.lt.s32.totalorder %s383, 1
      %s387 = scalar_select %p386, %s383, 1
      %s388 = smul.addr %s385, 2
      %s389 = sadd.s32 %s387, %s388
      %s390 = scalar_lea.vmem %s9, %s389
      %s391 = smul.u32 2, %s27
      %v393 = vld [vmem:[%s376] sm:$0x77]
      %v394 = vld [vmem:[%s382] sm:$0xff]
      %v395 = vld [vmem:[%s382 + $0x8] sm:$0xff]
      %v396 = vld [vmem:[%s382 + $0x10] sm:$0xff]
      %v397 = vld [vmem:[%s382 + $0x18] sm:$0xff]
      %v398 = vld [vmem:[%s382 + $0x20] sm:$0xff]
      %v399 = vld [vmem:[%s382 + $0x28] sm:$0xff]
      %v400 = vld [vmem:[%s382 + $0x30] sm:$0xff]
      %v401 = vld [vmem:[%s382 + $0x38] sm:$0xff]
      %v402 = vrcp.pop 1.101
      %v403 = vmul.f32 %v393, %v402
      %v404 = vadd.f32 %v403, 0.5
      %v405 = vmax.f32 %v404, 0.0
      %v406 = vmin.f32 %v405, 0.99999
      %v407 = vmul.f32 %v406, 15.0
      %v408 = vfloor.f32 %v407
      %v409 = vsub.f32 %v407, %v408
      %v410 = vmax.f32 %v408, 0.0
      %v411 = vmin.f32 %v410, 15.0
      %v412 = vcvt.f32.s32.to.zero.pseudo %v411
      %v413 = vadd.f32 %v408, 1.0
      %v414 = vmax.f32 %v413, 0.0
      %v415 = vmin.f32 %v414, 15.0
      %v416 = vcvt.f32.s32.to.zero.pseudo %v415
      %v417 = vlaneseq
      %v418 = vshrl.u32 %v417, 7
      %v419 = vadd.s32 %v418, 8
      %v420 = vadd.s32 %v418, 16
      %v421 = vadd.s32 %v418, 24
      %v422 = vadd.s32 %v418, 32
      %v423 = vadd.s32 %v418, 40
      %v424 = vadd.s32 %v418, 48
      %v425 = vadd.s32 %v418, 56
      %v426 = vadd.s32 %v418, 64
      %v427 = vadd.s32 %v418, 72
      %v428 = vadd.s32 %v418, 80
      %v429 = vadd.s32 %v418, 88
      %v430 = vadd.s32 %v418, 96
      %v431 = vadd.s32 %v418, 104
      %v432 = vadd.s32 %v418, 112
      %v433 = vadd.s32 %v418, 120
      %v434 = vadd.s32 %v418, 128
      %v435 = vadd.s32 %v418, 136
      %v436 = vadd.s32 %v418, 144
      %v437 = vadd.s32 %v418, 152
      %v438 = vadd.s32 %v418, 160
      %v439 = vadd.s32 %v418, 168
      %v440 = vadd.s32 %v418, 176
      %v441 = vadd.s32 %v418, 184
      %v442 = vadd.s32 %v418, 192
      %v443 = vadd.s32 %v418, 200
      %v444 = vadd.s32 %v418, 208
      %v445 = vadd.s32 %v418, 216
      %v446 = vadd.s32 %v418, 224
      %v447 = vadd.s32 %v418, 232
      %v448 = vadd.s32 %v418, 240
      %v449 = vadd.s32 %v418, 248
      %v450 = vsub.f32 1.0, %v409
      %v452 = vrot.slane %v450, 6
      %v453 = vrot.slane %v452, 4
      %v455 = vmul.f32 %v450, %v453
      %v456 = vmul.u32 %v412, 16
      %v457 = vrot.slane %v456, 6
      %v458 = vrot.slane %v457, 4
      %v459 = vadd.s32 %v412, %v458
      %v460 = vlaneseq
      %v461 = vshrl.u32 %v460, 7
      %v462 = vsub.s32 0, %v461
      %v463 = vrot.slane %v459, %v462
      %v464 = vlaneseq
      %v465 = vshrl.u32 %v464, 7
      %v466 = vsub.s32 4, %v465
      %v467 = vrot.slane %v459, %v466
      %v468 = vlaneseq
      %v469 = vshrl.u32 %v468, 7
      %v470 = vsub.s32 0, %v469
      %v471 = vrot.slane %v463, %v470
      %v472 = vlaneseq
      %v473 = vshrl.u32 %v472, 7
      %v474 = vsub.s32 0, %v473
      %v475 = vrot.slane %v467, %v474
      %vm476 = vcmp.eq.s32.totalorder %v418, %v471
      %vm477 = vcmp.eq.s32.totalorder %v418, %v475
      %vm478 = vcmp.eq.s32.totalorder %v419, %v471
      %vm479 = vcmp.eq.s32.totalorder %v419, %v475
      %vm480 = vcmp.eq.s32.totalorder %v420, %v471
      %vm481 = vcmp.eq.s32.totalorder %v420, %v475
      %vm482 = vcmp.eq.s32.totalorder %v421, %v471
      %vm483 = vcmp.eq.s32.totalorder %v421, %v475
      %vm484 = vcmp.eq.s32.totalorder %v422, %v471
      %vm485 = vcmp.eq.s32.totalorder %v422, %v475
      %vm486 = vcmp.eq.s32.totalorder %v423, %v471
      %vm487 = vcmp.eq.s32.totalorder %v423, %v475
      %vm488 = vcmp.eq.s32.totalorder %v424, %v471
      %vm489 = vcmp.eq.s32.totalorder %v424, %v475
      %vm490 = vcmp.eq.s32.totalorder %v425, %v471
      %vm491 = vcmp.eq.s32.totalorder %v425, %v475
      %vm492 = vcmp.eq.s32.totalorder %v426, %v471
      %vm493 = vcmp.eq.s32.totalorder %v426, %v475
      %vm494 = vcmp.eq.s32.totalorder %v427, %v471
      %vm495 = vcmp.eq.s32.totalorder %v427, %v475
      %vm496 = vcmp.eq.s32.totalorder %v428, %v471
      %vm497 = vcmp.eq.s32.totalorder %v428, %v475
      %vm498 = vcmp.eq.s32.totalorder %v429, %v471
      %vm499 = vcmp.eq.s32.totalorder %v429, %v475
      %vm500 = vcmp.eq.s32.totalorder %v430, %v471
      %vm501 = vcmp.eq.s32.totalorder %v430, %v475
      %vm502 = vcmp.eq.s32.totalorder %v431, %v471
      %vm503 = vcmp.eq.s32.totalorder %v431, %v475
      %vm504 = vcmp.eq.s32.totalorder %v432, %v471
      %vm505 = vcmp.eq.s32.totalorder %v432, %v475
      %vm506 = vcmp.eq.s32.totalorder %v433, %v471
      %vm507 = vcmp.eq.s32.totalorder %v433, %v475
      %vm508 = vcmp.eq.s32.totalorder %v434, %v471
      %vm509 = vcmp.eq.s32.totalorder %v434, %v475
      %vm510 = vcmp.eq.s32.totalorder %v435, %v471
      %vm511 = vcmp.eq.s32.totalorder %v435, %v475
      %vm512 = vcmp.eq.s32.totalorder %v436, %v471
      %vm513 = vcmp.eq.s32.totalorder %v436, %v475
      %vm514 = vcmp.eq.s32.totalorder %v437, %v471
      %vm515 = vcmp.eq.s32.totalorder %v437, %v475
      %vm516 = vcmp.eq.s32.totalorder %v438, %v471
      %vm517 = vcmp.eq.s32.totalorder %v438, %v475
      %vm518 = vcmp.eq.s32.totalorder %v439, %v471
      %vm519 = vcmp.eq.s32.totalorder %v439, %v475
      %vm520 = vcmp.eq.s32.totalorder %v440, %v471
      %vm521 = vcmp.eq.s32.totalorder %v440, %v475
      %vm522 = vcmp.eq.s32.totalorder %v441, %v471
      %vm523 = vcmp.eq.s32.totalorder %v441, %v475
      %vm524 = vcmp.eq.s32.totalorder %v442, %v471
      %vm525 = vcmp.eq.s32.totalorder %v442, %v475
      %vm526 = vcmp.eq.s32.totalorder %v443, %v471
      %vm527 = vcmp.eq.s32.totalorder %v443, %v475
      %vm528 = vcmp.eq.s32.totalorder %v444, %v471
      %vm529 = vcmp.eq.s32.totalorder %v444, %v475
      %vm530 = vcmp.eq.s32.totalorder %v445, %v471
      %vm531 = vcmp.eq.s32.totalorder %v445, %v475
      %vm532 = vcmp.eq.s32.totalorder %v446, %v471
      %vm533 = vcmp.eq.s32.totalorder %v446, %v475
      %vm534 = vcmp.eq.s32.totalorder %v447, %v471
      %vm535 = vcmp.eq.s32.totalorder %v447, %v475
      %vm536 = vcmp.eq.s32.totalorder %v448, %v471
      %vm537 = vcmp.eq.s32.totalorder %v448, %v475
      %vm538 = vcmp.eq.s32.totalorder %v449, %v471
      %vm539 = vcmp.eq.s32.totalorder %v449, %v475
      %v540 = vsel %vm476, 1, 0
      %v541 = vsel %vm477, 1, 0
      %v542 = vsel %vm478, 1, 0
      %v543 = vsel %vm479, 1, 0
      %v544 = vsel %vm480, 1, 0
      %v545 = vsel %vm481, 1, 0
      %v546 = vsel %vm482, 1, 0
      %v547 = vsel %vm483, 1, 0
      %v548 = vsel %vm484, 1, 0
      %v549 = vsel %vm485, 1, 0
      %v550 = vsel %vm486, 1, 0
      %v551 = vsel %vm487, 1, 0
      %v552 = vsel %vm488, 1, 0
      %v553 = vsel %vm489, 1, 0
      %v554 = vsel %vm490, 1, 0
      %v555 = vsel %vm491, 1, 0
      %v556 = vsel %vm492, 1, 0
      %v557 = vsel %vm493, 1, 0
      %v558 = vsel %vm494, 1, 0
      %v559 = vsel %vm495, 1, 0
      %v560 = vsel %vm496, 1, 0
      %v561 = vsel %vm497, 1, 0
      %v562 = vsel %vm498, 1, 0
      %v563 = vsel %vm499, 1, 0
      %v564 = vsel %vm500, 1, 0
      %v565 = vsel %vm501, 1, 0
      %v566 = vsel %vm502, 1, 0
      %v567 = vsel %vm503, 1, 0
      %v568 = vsel %vm504, 1, 0
      %v569 = vsel %vm505, 1, 0
      %v570 = vsel %vm506, 1, 0
      %v571 = vsel %vm507, 1, 0
      %v572 = vsel %vm508, 1, 0
      %v573 = vsel %vm509, 1, 0
      %v574 = vsel %vm510, 1, 0
      %v575 = vsel %vm511, 1, 0
      %v576 = vsel %vm512, 1, 0
      %v577 = vsel %vm513, 1, 0
      %v578 = vsel %vm514, 1, 0
      %v579 = vsel %vm515, 1, 0
      %v580 = vsel %vm516, 1, 0
      %v581 = vsel %vm517, 1, 0
      %v582 = vsel %vm518, 1, 0
      %v583 = vsel %vm519, 1, 0
      %v584 = vsel %vm520, 1, 0
      %v585 = vsel %vm521, 1, 0
      %v586 = vsel %vm522, 1, 0
      %v587 = vsel %vm523, 1, 0
      %v588 = vsel %vm524, 1, 0
      %v589 = vsel %vm525, 1, 0
      %v590 = vsel %vm526, 1, 0
      %v591 = vsel %vm527, 1, 0
      %v592 = vsel %vm528, 1, 0
      %v593 = vsel %vm529, 1, 0
      %v594 = vsel %vm530, 1, 0
      %v595 = vsel %vm531, 1, 0
      %v596 = vsel %vm532, 1, 0
      %v597 = vsel %vm533, 1, 0
      %v598 = vsel %vm534, 1, 0
      %v599 = vsel %vm535, 1, 0
      %v600 = vsel %vm536, 1, 0
      %v601 = vsel %vm537, 1, 0
      %v602 = vsel %vm538, 1, 0
      %v603 = vsel %vm539, 1, 0
      %v604 = vcvt.s32.f32 %v540
      %v605 = vcvt.s32.f32 %v541
      %v606 = vcvt.s32.f32 %v542
      %v607 = vcvt.s32.f32 %v543
      %v608 = vcvt.s32.f32 %v544
      %v609 = vcvt.s32.f32 %v545
      %v610 = vcvt.s32.f32 %v546
      %v611 = vcvt.s32.f32 %v547
      %v612 = vcvt.s32.f32 %v548
      %v613 = vcvt.s32.f32 %v549
      %v614 = vcvt.s32.f32 %v550
      %v615 = vcvt.s32.f32 %v551
      %v616 = vcvt.s32.f32 %v552
      %v617 = vcvt.s32.f32 %v553
      %v618 = vcvt.s32.f32 %v554
      %v619 = vcvt.s32.f32 %v555
      %v620 = vcvt.s32.f32 %v556
      %v621 = vcvt.s32.f32 %v557
      %v622 = vcvt.s32.f32 %v558
      %v623 = vcvt.s32.f32 %v559
      %v624 = vcvt.s32.f32 %v560
      %v625 = vcvt.s32.f32 %v561
      %v626 = vcvt.s32.f32 %v562
      %v627 = vcvt.s32.f32 %v563
      %v628 = vcvt.s32.f32 %v564
      %v629 = vcvt.s32.f32 %v565
      %v630 = vcvt.s32.f32 %v566
      %v631 = vcvt.s32.f32 %v567
      %v632 = vcvt.s32.f32 %v568
      %v633 = vcvt.s32.f32 %v569
      %v634 = vcvt.s32.f32 %v570
      %v635 = vcvt.s32.f32 %v571
      %v636 = vcvt.s32.f32 %v572
      %v637 = vcvt.s32.f32 %v573
      %v638 = vcvt.s32.f32 %v574
      %v639 = vcvt.s32.f32 %v575
      %v640 = vcvt.s32.f32 %v576
      %v641 = vcvt.s32.f32 %v577
      %v642 = vcvt.s32.f32 %v578
      %v643 = vcvt.s32.f32 %v579
      %v644 = vcvt.s32.f32 %v580
      %v645 = vcvt.s32.f32 %v581
      %v646 = vcvt.s32.f32 %v582
      %v647 = vcvt.s32.f32 %v583
      %v648 = vcvt.s32.f32 %v584
      %v649 = vcvt.s32.f32 %v585
      %v650 = vcvt.s32.f32 %v586
      %v651 = vcvt.s32.f32 %v587
      %v652 = vcvt.s32.f32 %v588
      %v653 = vcvt.s32.f32 %v589
      %v654 = vcvt.s32.f32 %v590
      %v655 = vcvt.s32.f32 %v591
      %v656 = vcvt.s32.f32 %v592
      %v657 = vcvt.s32.f32 %v593
      %v658 = vcvt.s32.f32 %v594
      %v659 = vcvt.s32.f32 %v595
      %v660 = vcvt.s32.f32 %v596
      %v661 = vcvt.s32.f32 %v597
      %v662 = vcvt.s32.f32 %v598
      %v663 = vcvt.s32.f32 %v599
      %v664 = vcvt.s32.f32 %v600
      %v665 = vcvt.s32.f32 %v601
      %v666 = vcvt.s32.f32 %v602
      %v667 = vcvt.s32.f32 %v603
      %v669 = vlaneseq
      %v670 = vshrl.u32 %v669, 7
      %v671 = vsub.s32 0, %v670
      %v672 = vrot.slane %v455, %v671
      %v673 = vlaneseq
      %v674 = vshrl.u32 %v673, 7
      %v675 = vsub.s32 4, %v674
      %v676 = vrot.slane %v455, %v675
      %v679 = vlaneseq
      %v680 = vshrl.u32 %v679, 7
      %v681 = vsub.s32 0, %v680
      %v682 = vrot.slane %v672, %v681
      %v683 = vlaneseq
      %v684 = vshrl.u32 %v683, 7
      %v685 = vsub.s32 0, %v684
      %v686 = vrot.slane %v676, %v685
      %v687 = vmul.f32 %v604, %v682
      %v688 = vmul.f32 %v605, %v686
      %v689 = vmul.f32 %v606, %v682
      %v690 = vmul.f32 %v607, %v686
      %v691 = vmul.f32 %v608, %v682
      %v692 = vmul.f32 %v609, %v686
      %v693 = vmul.f32 %v610, %v682
      %v694 = vmul.f32 %v611, %v686
      %v695 = vmul.f32 %v612, %v682
      %v696 = vmul.f32 %v613, %v686
      %v697 = vmul.f32 %v614, %v682
      %v698 = vmul.f32 %v615, %v686
      %v699 = vmul.f32 %v616, %v682
      %v700 = vmul.f32 %v617, %v686
      %v701 = vmul.f32 %v618, %v682
      %v702 = vmul.f32 %v619, %v686
      %v703 = vmul.f32 %v620, %v682
      %v704 = vmul.f32 %v621, %v686
      %v705 = vmul.f32 %v622, %v682
      %v706 = vmul.f32 %v623, %v686
      %v707 = vmul.f32 %v624, %v682
      %v708 = vmul.f32 %v625, %v686
      %v709 = vmul.f32 %v626, %v682
      %v710 = vmul.f32 %v627, %v686
      %v711 = vmul.f32 %v628, %v682
      %v712 = vmul.f32 %v629, %v686
      %v713 = vmul.f32 %v630, %v682
      %v714 = vmul.f32 %v631, %v686
      %v715 = vmul.f32 %v632, %v682
      %v716 = vmul.f32 %v633, %v686
      %v717 = vmul.f32 %v634, %v682
      %v718 = vmul.f32 %v635, %v686
      %v719 = vmul.f32 %v636, %v682
      %v720 = vmul.f32 %v637, %v686
      %v721 = vmul.f32 %v638, %v682
      %v722 = vmul.f32 %v639, %v686
      %v723 = vmul.f32 %v640, %v682
      %v724 = vmul.f32 %v641, %v686
      %v725 = vmul.f32 %v642, %v682
      %v726 = vmul.f32 %v643, %v686
      %v727 = vmul.f32 %v644, %v682
      %v728 = vmul.f32 %v645, %v686
      %v729 = vmul.f32 %v646, %v682
      %v730 = vmul.f32 %v647, %v686
      %v731 = vmul.f32 %v648, %v682
      %v732 = vmul.f32 %v649, %v686
      %v733 = vmul.f32 %v650, %v682
      %v734 = vmul.f32 %v651, %v686
      %v735 = vmul.f32 %v652, %v682
      %v736 = vmul.f32 %v653, %v686
      %v737 = vmul.f32 %v654, %v682
      %v738 = vmul.f32 %v655, %v686
      %v739 = vmul.f32 %v656, %v682
      %v740 = vmul.f32 %v657, %v686
      %v741 = vmul.f32 %v658, %v682
      %v742 = vmul.f32 %v659, %v686
      %v743 = vmul.f32 %v660, %v682
      %v744 = vmul.f32 %v661, %v686
      %v745 = vmul.f32 %v662, %v682
      %v746 = vmul.f32 %v663, %v686
      %v747 = vmul.f32 %v664, %v682
      %v748 = vmul.f32 %v665, %v686
      %v749 = vmul.f32 %v666, %v682
      %v750 = vmul.f32 %v667, %v686
      %v751 = vmul.f32 %v409, %v453
      %v752 = vadd.s32 %v416, %v458
      %v753 = vlaneseq
      %v754 = vshrl.u32 %v753, 7
      %v755 = vsub.s32 0, %v754
      %v756 = vrot.slane %v752, %v755
      %v757 = vlaneseq
      %v758 = vshrl.u32 %v757, 7
      %v759 = vsub.s32 4, %v758
      %v760 = vrot.slane %v752, %v759
      %v761 = vlaneseq
      %v762 = vshrl.u32 %v761, 7
      %v763 = vsub.s32 0, %v762
      %v764 = vrot.slane %v756, %v763
      %v765 = vlaneseq
      %v766 = vshrl.u32 %v765, 7
      %v767 = vsub.s32 0, %v766
      %v768 = vrot.slane %v760, %v767
      %vm769 = vcmp.eq.s32.totalorder %v418, %v764
      %vm770 = vcmp.eq.s32.totalorder %v418, %v768
      %vm771 = vcmp.eq.s32.totalorder %v419, %v764
      %vm772 = vcmp.eq.s32.totalorder %v419, %v768
      %vm773 = vcmp.eq.s32.totalorder %v420, %v764
      %vm774 = vcmp.eq.s32.totalorder %v420, %v768
      %vm775 = vcmp.eq.s32.totalorder %v421, %v764
      %vm776 = vcmp.eq.s32.totalorder %v421, %v768
      %vm777 = vcmp.eq.s32.totalorder %v422, %v764
      %vm778 = vcmp.eq.s32.totalorder %v422, %v768
      %vm779 = vcmp.eq.s32.totalorder %v423, %v764
      %vm780 = vcmp.eq.s32.totalorder %v423, %v768
      %vm781 = vcmp.eq.s32.totalorder %v424, %v764
      %vm782 = vcmp.eq.s32.totalorder %v424, %v768
      %vm783 = vcmp.eq.s32.totalorder %v425, %v764
      %vm784 = vcmp.eq.s32.totalorder %v425, %v768
      %vm785 = vcmp.eq.s32.totalorder %v426, %v764
      %vm786 = vcmp.eq.s32.totalorder %v426, %v768
      %vm787 = vcmp.eq.s32.totalorder %v427, %v764
      %vm788 = vcmp.eq.s32.totalorder %v427, %v768
      %vm789 = vcmp.eq.s32.totalorder %v428, %v764
      %vm790 = vcmp.eq.s32.totalorder %v428, %v768
      %vm791 = vcmp.eq.s32.totalorder %v429, %v764
      %vm792 = vcmp.eq.s32.totalorder %v429, %v768
      %vm793 = vcmp.eq.s32.totalorder %v430, %v764
      %vm794 = vcmp.eq.s32.totalorder %v430, %v768
      %vm795 = vcmp.eq.s32.totalorder %v431, %v764
      %vm796 = vcmp.eq.s32.totalorder %v431, %v768
      %vm797 = vcmp.eq.s32.totalorder %v432, %v764
      %vm798 = vcmp.eq.s32.totalorder %v432, %v768
      %vm799 = vcmp.eq.s32.totalorder %v433, %v764
      %vm800 = vcmp.eq.s32.totalorder %v433, %v768
      %vm801 = vcmp.eq.s32.totalorder %v434, %v764
      %vm802 = vcmp.eq.s32.totalorder %v434, %v768
      %vm803 = vcmp.eq.s32.totalorder %v435, %v764
      %vm804 = vcmp.eq.s32.totalorder %v435, %v768
      %vm805 = vcmp.eq.s32.totalorder %v436, %v764
      %vm806 = vcmp.eq.s32.totalorder %v436, %v768
      %vm807 = vcmp.eq.s32.totalorder %v437, %v764
      %vm808 = vcmp.eq.s32.totalorder %v437, %v768
      %vm809 = vcmp.eq.s32.totalorder %v438, %v764
      %vm810 = vcmp.eq.s32.totalorder %v438, %v768
      %vm811 = vcmp.eq.s32.totalorder %v439, %v764
      %vm812 = vcmp.eq.s32.totalorder %v439, %v768
      %vm813 = vcmp.eq.s32.totalorder %v440, %v764
      %vm814 = vcmp.eq.s32.totalorder %v440, %v768
      %vm815 = vcmp.eq.s32.totalorder %v441, %v764
      %vm816 = vcmp.eq.s32.totalorder %v441, %v768
      %vm817 = vcmp.eq.s32.totalorder %v442, %v764
      %vm818 = vcmp.eq.s32.totalorder %v442, %v768
      %vm819 = vcmp.eq.s32.totalorder %v443, %v764
      %vm820 = vcmp.eq.s32.totalorder %v443, %v768
      %vm821 = vcmp.eq.s32.totalorder %v444, %v764
      %vm822 = vcmp.eq.s32.totalorder %v444, %v768
      %vm823 = vcmp.eq.s32.totalorder %v445, %v764
      %vm824 = vcmp.eq.s32.totalorder %v445, %v768
      %vm825 = vcmp.eq.s32.totalorder %v446, %v764
      %vm826 = vcmp.eq.s32.totalorder %v446, %v768
      %vm827 = vcmp.eq.s32.totalorder %v447, %v764
      %vm828 = vcmp.eq.s32.totalorder %v447, %v768
      %vm829 = vcmp.eq.s32.totalorder %v448, %v764
      %vm830 = vcmp.eq.s32.totalorder %v448, %v768
      %vm831 = vcmp.eq.s32.totalorder %v449, %v764
      %vm832 = vcmp.eq.s32.totalorder %v449, %v768
      %v833 = vsel %vm769, 1, 0
      %v834 = vsel %vm770, 1, 0
      %v835 = vsel %vm771, 1, 0
      %v836 = vsel %vm772, 1, 0
      %v837 = vsel %vm773, 1, 0
      %v838 = vsel %vm774, 1, 0
      %v839 = vsel %vm775, 1, 0
      %v840 = vsel %vm776, 1, 0
      %v841 = vsel %vm777, 1, 0
      %v842 = vsel %vm778, 1, 0
      %v843 = vsel %vm779, 1, 0
      %v844 = vsel %vm780, 1, 0
      %v845 = vsel %vm781, 1, 0
      %v846 = vsel %vm782, 1, 0
      %v847 = vsel %vm783, 1, 0
      %v848 = vsel %vm784, 1, 0
      %v849 = vsel %vm785, 1, 0
      %v850 = vsel %vm786, 1, 0
      %v851 = vsel %vm787, 1, 0
      %v852 = vsel %vm788, 1, 0
      %v853 = vsel %vm789, 1, 0
      %v854 = vsel %vm790, 1, 0
      %v855 = vsel %vm791, 1, 0
      %v856 = vsel %vm792, 1, 0
      %v857 = vsel %vm793, 1, 0
      %v858 = vsel %vm794, 1, 0
      %v859 = vsel %vm795, 1, 0
      %v860 = vsel %vm796, 1, 0
      %v861 = vsel %vm797, 1, 0
      %v862 = vsel %vm798, 1, 0
      %v863 = vsel %vm799, 1, 0
      %v864 = vsel %vm800, 1, 0
      %v865 = vsel %vm801, 1, 0
      %v866 = vsel %vm802, 1, 0
      %v867 = vsel %vm803, 1, 0
      %v868 = vsel %vm804, 1, 0
      %v869 = vsel %vm805, 1, 0
      %v870 = vsel %vm806, 1, 0
      %v871 = vsel %vm807, 1, 0
      %v872 = vsel %vm808, 1, 0
      %v873 = vsel %vm809, 1, 0
      %v874 = vsel %vm810, 1, 0
      %v875 = vsel %vm811, 1, 0
      %v876 = vsel %vm812, 1, 0
      %v877 = vsel %vm813, 1, 0
      %v878 = vsel %vm814, 1, 0
      %v879 = vsel %vm815, 1, 0
      %v880 = vsel %vm816, 1, 0
      %v881 = vsel %vm817, 1, 0
      %v882 = vsel %vm818, 1, 0
      %v883 = vsel %vm819, 1, 0
      %v884 = vsel %vm820, 1, 0
      %v885 = vsel %vm821, 1, 0
      %v886 = vsel %vm822, 1, 0
      %v887 = vsel %vm823, 1, 0
      %v888 = vsel %vm824, 1, 0
      %v889 = vsel %vm825, 1, 0
      %v890 = vsel %vm826, 1, 0
      %v891 = vsel %vm827, 1, 0
      %v892 = vsel %vm828, 1, 0
      %v893 = vsel %vm829, 1, 0
      %v894 = vsel %vm830, 1, 0
      %v895 = vsel %vm831, 1, 0
      %v896 = vsel %vm832, 1, 0
      %v897 = vcvt.s32.f32 %v833
      %v898 = vcvt.s32.f32 %v834
      %v899 = vcvt.s32.f32 %v835
      %v900 = vcvt.s32.f32 %v836
      %v901 = vcvt.s32.f32 %v837
      %v902 = vcvt.s32.f32 %v838
      %v903 = vcvt.s32.f32 %v839
      %v904 = vcvt.s32.f32 %v840
      %v905 = vcvt.s32.f32 %v841
      %v906 = vcvt.s32.f32 %v842
      %v907 = vcvt.s32.f32 %v843
      %v908 = vcvt.s32.f32 %v844
      %v909 = vcvt.s32.f32 %v845
      %v910 = vcvt.s32.f32 %v846
      %v911 = vcvt.s32.f32 %v847
      %v912 = vcvt.s32.f32 %v848
      %v913 = vcvt.s32.f32 %v849
      %v914 = vcvt.s32.f32 %v850
      %v915 = vcvt.s32.f32 %v851
      %v916 = vcvt.s32.f32 %v852
      %v917 = vcvt.s32.f32 %v853
      %v918 = vcvt.s32.f32 %v854
      %v919 = vcvt.s32.f32 %v855
      %v920 = vcvt.s32.f32 %v856
      %v921 = vcvt.s32.f32 %v857
      %v922 = vcvt.s32.f32 %v858
      %v923 = vcvt.s32.f32 %v859
      %v924 = vcvt.s32.f32 %v860
      %v925 = vcvt.s32.f32 %v861
      %v926 = vcvt.s32.f32 %v862
      %v927 = vcvt.s32.f32 %v863
      %v928 = vcvt.s32.f32 %v864
      %v929 = vcvt.s32.f32 %v865
      %v930 = vcvt.s32.f32 %v866
      %v931 = vcvt.s32.f32 %v867
      %v932 = vcvt.s32.f32 %v868
      %v933 = vcvt.s32.f32 %v869
      %v934 = vcvt.s32.f32 %v870
      %v935 = vcvt.s32.f32 %v871
      %v936 = vcvt.s32.f32 %v872
      %v937 = vcvt.s32.f32 %v873
      %v938 = vcvt.s32.f32 %v874
      %v939 = vcvt.s32.f32 %v875
      %v940 = vcvt.s32.f32 %v876
      %v941 = vcvt.s32.f32 %v877
      %v942 = vcvt.s32.f32 %v878
      %v943 = vcvt.s32.f32 %v879
      %v944 = vcvt.s32.f32 %v880
      %v945 = vcvt.s32.f32 %v881
      %v946 = vcvt.s32.f32 %v882
      %v947 = vcvt.s32.f32 %v883
      %v948 = vcvt.s32.f32 %v884
      %v949 = vcvt.s32.f32 %v885
      %v950 = vcvt.s32.f32 %v886
      %v951 = vcvt.s32.f32 %v887
      %v952 = vcvt.s32.f32 %v888
      %v953 = vcvt.s32.f32 %v889
      %v954 = vcvt.s32.f32 %v890
      %v955 = vcvt.s32.f32 %v891
      %v956 = vcvt.s32.f32 %v892
      %v957 = vcvt.s32.f32 %v893
      %v958 = vcvt.s32.f32 %v894
      %v959 = vcvt.s32.f32 %v895
      %v960 = vcvt.s32.f32 %v896
      %v962 = vlaneseq
      %v963 = vshrl.u32 %v962, 7
      %v964 = vsub.s32 0, %v963
      %v965 = vrot.slane %v751, %v964
      %v966 = vlaneseq
      %v967 = vshrl.u32 %v966, 7
      %v968 = vsub.s32 4, %v967
      %v969 = vrot.slane %v751, %v968
      %v972 = vlaneseq
      %v973 = vshrl.u32 %v972, 7
      %v974 = vsub.s32 0, %v973
      %v975 = vrot.slane %v965, %v974
      %v976 = vlaneseq
      %v977 = vshrl.u32 %v976, 7
      %v978 = vsub.s32 0, %v977
      %v979 = vrot.slane %v969, %v978
      %v980 = vmul.f32 %v897, %v975
      %v981 = vmul.f32 %v898, %v979
      %v982 = vmul.f32 %v899, %v975
      %v983 = vmul.f32 %v900, %v979
      %v984 = vmul.f32 %v901, %v975
      %v985 = vmul.f32 %v902, %v979
      %v986 = vmul.f32 %v903, %v975
      %v987 = vmul.f32 %v904, %v979
      %v988 = vmul.f32 %v905, %v975
      %v989 = vmul.f32 %v906, %v979
      %v990 = vmul.f32 %v907, %v975
      %v991 = vmul.f32 %v908, %v979
      %v992 = vmul.f32 %v909, %v975
      %v993 = vmul.f32 %v910, %v979
      %v994 = vmul.f32 %v911, %v975
      %v995 = vmul.f32 %v912, %v979
      %v996 = vmul.f32 %v913, %v975
      %v997 = vmul.f32 %v914, %v979
      %v998 = vmul.f32 %v915, %v975
      %v999 = vmul.f32 %v916, %v979
      %v1000 = vmul.f32 %v917, %v975
      %v1001 = vmul.f32 %v918, %v979
      %v1002 = vmul.f32 %v919, %v975
      %v1003 = vmul.f32 %v920, %v979
      %v1004 = vmul.f32 %v921, %v975
      %v1005 = vmul.f32 %v922, %v979
      %v1006 = vmul.f32 %v923, %v975
      %v1007 = vmul.f32 %v924, %v979
      %v1008 = vmul.f32 %v925, %v975
      %v1009 = vmul.f32 %v926, %v979
      %v1010 = vmul.f32 %v927, %v975
      %v1011 = vmul.f32 %v928, %v979
      %v1012 = vmul.f32 %v929, %v975
      %v1013 = vmul.f32 %v930, %v979
      %v1014 = vmul.f32 %v931, %v975
      %v1015 = vmul.f32 %v932, %v979
      %v1016 = vmul.f32 %v933, %v975
      %v1017 = vmul.f32 %v934, %v979
      %v1018 = vmul.f32 %v935, %v975
      %v1019 = vmul.f32 %v936, %v979
      %v1020 = vmul.f32 %v937, %v975
      %v1021 = vmul.f32 %v938, %v979
      %v1022 = vmul.f32 %v939, %v975
      %v1023 = vmul.f32 %v940, %v979
      %v1024 = vmul.f32 %v941, %v975
      %v1025 = vmul.f32 %v942, %v979
      %v1026 = vmul.f32 %v943, %v975
      %v1027 = vmul.f32 %v944, %v979
      %v1028 = vmul.f32 %v945, %v975
      %v1029 = vmul.f32 %v946, %v979
      %v1030 = vmul.f32 %v947, %v975
      %v1031 = vmul.f32 %v948, %v979
      %v1032 = vmul.f32 %v949, %v975
      %v1033 = vmul.f32 %v950, %v979
      %v1034 = vmul.f32 %v951, %v975
      %v1035 = vmul.f32 %v952, %v979
      %v1036 = vmul.f32 %v953, %v975
      %v1037 = vmul.f32 %v954, %v979
      %v1038 = vmul.f32 %v955, %v975
      %v1039 = vmul.f32 %v956, %v979
      %v1040 = vmul.f32 %v957, %v975
      %v1041 = vmul.f32 %v958, %v979
      %v1042 = vmul.f32 %v959, %v975
      %v1043 = vmul.f32 %v960, %v979
      %v1044 = vadd.f32 %v687, %v980
      %v1045 = vadd.f32 %v688, %v981
      %v1046 = vadd.f32 %v689, %v982
      %v1047 = vadd.f32 %v690, %v983
      %v1048 = vadd.f32 %v691, %v984
      %v1049 = vadd.f32 %v692, %v985
      %v1050 = vadd.f32 %v693, %v986
      %v1051 = vadd.f32 %v694, %v987
      %v1052 = vadd.f32 %v695, %v988
      %v1053 = vadd.f32 %v696, %v989
      %v1054 = vadd.f32 %v697, %v990
      %v1055 = vadd.f32 %v698, %v991
      %v1056 = vadd.f32 %v699, %v992
      %v1057 = vadd.f32 %v700, %v993
      %v1058 = vadd.f32 %v701, %v994
      %v1059 = vadd.f32 %v702, %v995
      %v1060 = vadd.f32 %v703, %v996
      %v1061 = vadd.f32 %v704, %v997
      %v1062 = vadd.f32 %v705, %v998
      %v1063 = vadd.f32 %v706, %v999
      %v1064 = vadd.f32 %v707, %v1000
      %v1065 = vadd.f32 %v708, %v1001
      %v1066 = vadd.f32 %v709, %v1002
      %v1067 = vadd.f32 %v710, %v1003
      %v1068 = vadd.f32 %v711, %v1004
      %v1069 = vadd.f32 %v712, %v1005
      %v1070 = vadd.f32 %v713, %v1006
      %v1071 = vadd.f32 %v714, %v1007
      %v1072 = vadd.f32 %v715, %v1008
      %v1073 = vadd.f32 %v716, %v1009
      %v1074 = vadd.f32 %v717, %v1010
      %v1075 = vadd.f32 %v718, %v1011
      %v1076 = vadd.f32 %v719, %v1012
      %v1077 = vadd.f32 %v720, %v1013
      %v1078 = vadd.f32 %v721, %v1014
      %v1079 = vadd.f32 %v722, %v1015
      %v1080 = vadd.f32 %v723, %v1016
      %v1081 = vadd.f32 %v724, %v1017
      %v1082 = vadd.f32 %v725, %v1018
      %v1083 = vadd.f32 %v726, %v1019
      %v1084 = vadd.f32 %v727, %v1020
      %v1085 = vadd.f32 %v728, %v1021
      %v1086 = vadd.f32 %v729, %v1022
      %v1087 = vadd.f32 %v730, %v1023
      %v1088 = vadd.f32 %v731, %v1024
      %v1089 = vadd.f32 %v732, %v1025
      %v1090 = vadd.f32 %v733, %v1026
      %v1091 = vadd.f32 %v734, %v1027
      %v1092 = vadd.f32 %v735, %v1028
      %v1093 = vadd.f32 %v736, %v1029
      %v1094 = vadd.f32 %v737, %v1030
      %v1095 = vadd.f32 %v738, %v1031
      %v1096 = vadd.f32 %v739, %v1032
      %v1097 = vadd.f32 %v740, %v1033
      %v1098 = vadd.f32 %v741, %v1034
      %v1099 = vadd.f32 %v742, %v1035
      %v1100 = vadd.f32 %v743, %v1036
      %v1101 = vadd.f32 %v744, %v1037
      %v1102 = vadd.f32 %v745, %v1038
      %v1103 = vadd.f32 %v746, %v1039
      %v1104 = vadd.f32 %v747, %v1040
      %v1105 = vadd.f32 %v748, %v1041
      %v1106 = vadd.f32 %v749, %v1042
      %v1107 = vadd.f32 %v750, %v1043
      %v1109 = vrot.slane %v409, 6
      %v1110 = vrot.slane %v1109, 4
      %v1112 = vmul.f32 %v450, %v1110
      %v1113 = vmul.u32 %v416, 16
      %v1114 = vrot.slane %v1113, 6
      %v1115 = vrot.slane %v1114, 4
      %v1116 = vadd.s32 %v412, %v1115
      %v1117 = vlaneseq
      %v1118 = vshrl.u32 %v1117, 7
      %v1119 = vsub.s32 0, %v1118
      %v1120 = vrot.slane %v1116, %v1119
      %v1121 = vlaneseq
      %v1122 = vshrl.u32 %v1121, 7
      %v1123 = vsub.s32 4, %v1122
      %v1124 = vrot.slane %v1116, %v1123
      %v1125 = vlaneseq
      %v1126 = vshrl.u32 %v1125, 7
      %v1127 = vsub.s32 0, %v1126
      %v1128 = vrot.slane %v1120, %v1127
      %v1129 = vlaneseq
      %v1130 = vshrl.u32 %v1129, 7
      %v1131 = vsub.s32 0, %v1130
      %v1132 = vrot.slane %v1124, %v1131
      %vm1133 = vcmp.eq.s32.totalorder %v418, %v1128
      %vm1134 = vcmp.eq.s32.totalorder %v418, %v1132
      %vm1135 = vcmp.eq.s32.totalorder %v419, %v1128
      %vm1136 = vcmp.eq.s32.totalorder %v419, %v1132
      %vm1137 = vcmp.eq.s32.totalorder %v420, %v1128
      %vm1138 = vcmp.eq.s32.totalorder %v420, %v1132
      %vm1139 = vcmp.eq.s32.totalorder %v421, %v1128
      %vm1140 = vcmp.eq.s32.totalorder %v421, %v1132
      %vm1141 = vcmp.eq.s32.totalorder %v422, %v1128
      %vm1142 = vcmp.eq.s32.totalorder %v422, %v1132
      %vm1143 = vcmp.eq.s32.totalorder %v423, %v1128
      %vm1144 = vcmp.eq.s32.totalorder %v423, %v1132
      %vm1145 = vcmp.eq.s32.totalorder %v424, %v1128
      %vm1146 = vcmp.eq.s32.totalorder %v424, %v1132
      %vm1147 = vcmp.eq.s32.totalorder %v425, %v1128
      %vm1148 = vcmp.eq.s32.totalorder %v425, %v1132
      %vm1149 = vcmp.eq.s32.totalorder %v426, %v1128
      %vm1150 = vcmp.eq.s32.totalorder %v426, %v1132
      %vm1151 = vcmp.eq.s32.totalorder %v427, %v1128
      %vm1152 = vcmp.eq.s32.totalorder %v427, %v1132
      %vm1153 = vcmp.eq.s32.totalorder %v428, %v1128
      %vm1154 = vcmp.eq.s32.totalorder %v428, %v1132
      %vm1155 = vcmp.eq.s32.totalorder %v429, %v1128
      %vm1156 = vcmp.eq.s32.totalorder %v429, %v1132
      %vm1157 = vcmp.eq.s32.totalorder %v430, %v1128
      %vm1158 = vcmp.eq.s32.totalorder %v430, %v1132
      %vm1159 = vcmp.eq.s32.totalorder %v431, %v1128
      %vm1160 = vcmp.eq.s32.totalorder %v431, %v1132
      %vm1161 = vcmp.eq.s32.totalorder %v432, %v1128
      %vm1162 = vcmp.eq.s32.totalorder %v432, %v1132
      %vm1163 = vcmp.eq.s32.totalorder %v433, %v1128
      %vm1164 = vcmp.eq.s32.totalorder %v433, %v1132
      %vm1165 = vcmp.eq.s32.totalorder %v434, %v1128
      %vm1166 = vcmp.eq.s32.totalorder %v434, %v1132
      %vm1167 = vcmp.eq.s32.totalorder %v435, %v1128
      %vm1168 = vcmp.eq.s32.totalorder %v435, %v1132
      %vm1169 = vcmp.eq.s32.totalorder %v436, %v1128
      %vm1170 = vcmp.eq.s32.totalorder %v436, %v1132
      %vm1171 = vcmp.eq.s32.totalorder %v437, %v1128
      %vm1172 = vcmp.eq.s32.totalorder %v437, %v1132
      %vm1173 = vcmp.eq.s32.totalorder %v438, %v1128
      %vm1174 = vcmp.eq.s32.totalorder %v438, %v1132
      %vm1175 = vcmp.eq.s32.totalorder %v439, %v1128
      %vm1176 = vcmp.eq.s32.totalorder %v439, %v1132
      %vm1177 = vcmp.eq.s32.totalorder %v440, %v1128
      %vm1178 = vcmp.eq.s32.totalorder %v440, %v1132
      %vm1179 = vcmp.eq.s32.totalorder %v441, %v1128
      %vm1180 = vcmp.eq.s32.totalorder %v441, %v1132
      %vm1181 = vcmp.eq.s32.totalorder %v442, %v1128
      %vm1182 = vcmp.eq.s32.totalorder %v442, %v1132
      %vm1183 = vcmp.eq.s32.totalorder %v443, %v1128
      %vm1184 = vcmp.eq.s32.totalorder %v443, %v1132
      %vm1185 = vcmp.eq.s32.totalorder %v444, %v1128
      %vm1186 = vcmp.eq.s32.totalorder %v444, %v1132
      %vm1187 = vcmp.eq.s32.totalorder %v445, %v1128
      %vm1188 = vcmp.eq.s32.totalorder %v445, %v1132
      %vm1189 = vcmp.eq.s32.totalorder %v446, %v1128
      %vm1190 = vcmp.eq.s32.totalorder %v446, %v1132
      %vm1191 = vcmp.eq.s32.totalorder %v447, %v1128
      %vm1192 = vcmp.eq.s32.totalorder %v447, %v1132
      %vm1193 = vcmp.eq.s32.totalorder %v448, %v1128
      %vm1194 = vcmp.eq.s32.totalorder %v448, %v1132
      %vm1195 = vcmp.eq.s32.totalorder %v449, %v1128
      %vm1196 = vcmp.eq.s32.totalorder %v449, %v1132
      %v1197 = vsel %vm1133, 1, 0
      %v1198 = vsel %vm1134, 1, 0
      %v1199 = vsel %vm1135, 1, 0
      %v1200 = vsel %vm1136, 1, 0
      %v1201 = vsel %vm1137, 1, 0
      %v1202 = vsel %vm1138, 1, 0
      %v1203 = vsel %vm1139, 1, 0
      %v1204 = vsel %vm1140, 1, 0
      %v1205 = vsel %vm1141, 1, 0
      %v1206 = vsel %vm1142, 1, 0
      %v1207 = vsel %vm1143, 1, 0
      %v1208 = vsel %vm1144, 1, 0
      %v1209 = vsel %vm1145, 1, 0
      %v1210 = vsel %vm1146, 1, 0
      %v1211 = vsel %vm1147, 1, 0
      %v1212 = vsel %vm1148, 1, 0
      %v1213 = vsel %vm1149, 1, 0
      %v1214 = vsel %vm1150, 1, 0
      %v1215 = vsel %vm1151, 1, 0
      %v1216 = vsel %vm1152, 1, 0
      %v1217 = vsel %vm1153, 1, 0
      %v1218 = vsel %vm1154, 1, 0
      %v1219 = vsel %vm1155, 1, 0
      %v1220 = vsel %vm1156, 1, 0
      %v1221 = vsel %vm1157, 1, 0
      %v1222 = vsel %vm1158, 1, 0
      %v1223 = vsel %vm1159, 1, 0
      %v1224 = vsel %vm1160, 1, 0
      %v1225 = vsel %vm1161, 1, 0
      %v1226 = vsel %vm1162, 1, 0
      %v1227 = vsel %vm1163, 1, 0
      %v1228 = vsel %vm1164, 1, 0
      %v1229 = vsel %vm1165, 1, 0
      %v1230 = vsel %vm1166, 1, 0
      %v1231 = vsel %vm1167, 1, 0
      %v1232 = vsel %vm1168, 1, 0
      %v1233 = vsel %vm1169, 1, 0
      %v1234 = vsel %vm1170, 1, 0
      %v1235 = vsel %vm1171, 1, 0
      %v1236 = vsel %vm1172, 1, 0
      %v1237 = vsel %vm1173, 1, 0
      %v1238 = vsel %vm1174, 1, 0
      %v1239 = vsel %vm1175, 1, 0
      %v1240 = vsel %vm1176, 1, 0
      %v1241 = vsel %vm1177, 1, 0
      %v1242 = vsel %vm1178, 1, 0
      %v1243 = vsel %vm1179, 1, 0
      %v1244 = vsel %vm1180, 1, 0
      %v1245 = vsel %vm1181, 1, 0
      %v1246 = vsel %vm1182, 1, 0
      %v1247 = vsel %vm1183, 1, 0
      %v1248 = vsel %vm1184, 1, 0
      %v1249 = vsel %vm1185, 1, 0
      %v1250 = vsel %vm1186, 1, 0
      %v1251 = vsel %vm1187, 1, 0
      %v1252 = vsel %vm1188, 1, 0
      %v1253 = vsel %vm1189, 1, 0
      %v1254 = vsel %vm1190, 1, 0
      %v1255 = vsel %vm1191, 1, 0
      %v1256 = vsel %vm1192, 1, 0
      %v1257 = vsel %vm1193, 1, 0
      %v1258 = vsel %vm1194, 1, 0
      %v1259 = vsel %vm1195, 1, 0
      %v1260 = vsel %vm1196, 1, 0
      %v1261 = vcvt.s32.f32 %v1197
      %v1262 = vcvt.s32.f32 %v1198
      %v1263 = vcvt.s32.f32 %v1199
      %v1264 = vcvt.s32.f32 %v1200
      %v1265 = vcvt.s32.f32 %v1201
      %v1266 = vcvt.s32.f32 %v1202
      %v1267 = vcvt.s32.f32 %v1203
      %v1268 = vcvt.s32.f32 %v1204
      %v1269 = vcvt.s32.f32 %v1205
      %v1270 = vcvt.s32.f32 %v1206
      %v1271 = vcvt.s32.f32 %v1207
      %v1272 = vcvt.s32.f32 %v1208
      %v1273 = vcvt.s32.f32 %v1209
      %v1274 = vcvt.s32.f32 %v1210
      %v1275 = vcvt.s32.f32 %v1211
      %v1276 = vcvt.s32.f32 %v1212
      %v1277 = vcvt.s32.f32 %v1213
      %v1278 = vcvt.s32.f32 %v1214
      %v1279 = vcvt.s32.f32 %v1215
      %v1280 = vcvt.s32.f32 %v1216
      %v1281 = vcvt.s32.f32 %v1217
      %v1282 = vcvt.s32.f32 %v1218
      %v1283 = vcvt.s32.f32 %v1219
      %v1284 = vcvt.s32.f32 %v1220
      %v1285 = vcvt.s32.f32 %v1221
      %v1286 = vcvt.s32.f32 %v1222
      %v1287 = vcvt.s32.f32 %v1223
      %v1288 = vcvt.s32.f32 %v1224
      %v1289 = vcvt.s32.f32 %v1225
      %v1290 = vcvt.s32.f32 %v1226
      %v1291 = vcvt.s32.f32 %v1227
      %v1292 = vcvt.s32.f32 %v1228
      %v1293 = vcvt.s32.f32 %v1229
      %v1294 = vcvt.s32.f32 %v1230
      %v1295 = vcvt.s32.f32 %v1231
      %v1296 = vcvt.s32.f32 %v1232
      %v1297 = vcvt.s32.f32 %v1233
      %v1298 = vcvt.s32.f32 %v1234
      %v1299 = vcvt.s32.f32 %v1235
      %v1300 = vcvt.s32.f32 %v1236
      %v1301 = vcvt.s32.f32 %v1237
      %v1302 = vcvt.s32.f32 %v1238
      %v1303 = vcvt.s32.f32 %v1239
      %v1304 = vcvt.s32.f32 %v1240
      %v1305 = vcvt.s32.f32 %v1241
      %v1306 = vcvt.s32.f32 %v1242
      %v1307 = vcvt.s32.f32 %v1243
      %v1308 = vcvt.s32.f32 %v1244
      %v1309 = vcvt.s32.f32 %v1245
      %v1310 = vcvt.s32.f32 %v1246
      %v1311 = vcvt.s32.f32 %v1247
      %v1312 = vcvt.s32.f32 %v1248
      %v1313 = vcvt.s32.f32 %v1249
      %v1314 = vcvt.s32.f32 %v1250
      %v1315 = vcvt.s32.f32 %v1251
      %v1316 = vcvt.s32.f32 %v1252
      %v1317 = vcvt.s32.f32 %v1253
      %v1318 = vcvt.s32.f32 %v1254
      %v1319 = vcvt.s32.f32 %v1255
      %v1320 = vcvt.s32.f32 %v1256
      %v1321 = vcvt.s32.f32 %v1257
      %v1322 = vcvt.s32.f32 %v1258
      %v1323 = vcvt.s32.f32 %v1259
      %v1324 = vcvt.s32.f32 %v1260
      %v1326 = vlaneseq
      %v1327 = vshrl.u32 %v1326, 7
      %v1328 = vsub.s32 0, %v1327
      %v1329 = vrot.slane %v1112, %v1328
      %v1330 = vlaneseq
      %v1331 = vshrl.u32 %v1330, 7
      %v1332 = vsub.s32 4, %v1331
      %v1333 = vrot.slane %v1112, %v1332
      %v1336 = vlaneseq
      %v1337 = vshrl.u32 %v1336, 7
      %v1338 = vsub.s32 0, %v1337
      %v1339 = vrot.slane %v1329, %v1338
      %v1340 = vlaneseq
      %v1341 = vshrl.u32 %v1340, 7
      %v1342 = vsub.s32 0, %v1341
      %v1343 = vrot.slane %v1333, %v1342
      %v1344 = vmul.f32 %v1261, %v1339
      %v1345 = vmul.f32 %v1262, %v1343
      %v1346 = vmul.f32 %v1263, %v1339
      %v1347 = vmul.f32 %v1264, %v1343
      %v1348 = vmul.f32 %v1265, %v1339
      %v1349 = vmul.f32 %v1266, %v1343
      %v1350 = vmul.f32 %v1267, %v1339
      %v1351 = vmul.f32 %v1268, %v1343
      %v1352 = vmul.f32 %v1269, %v1339
      %v1353 = vmul.f32 %v1270, %v1343
      %v1354 = vmul.f32 %v1271, %v1339
      %v1355 = vmul.f32 %v1272, %v1343
      %v1356 = vmul.f32 %v1273, %v1339
      %v1357 = vmul.f32 %v1274, %v1343
      %v1358 = vmul.f32 %v1275, %v1339
      %v1359 = vmul.f32 %v1276, %v1343
      %v1360 = vmul.f32 %v1277, %v1339
      %v1361 = vmul.f32 %v1278, %v1343
      %v1362 = vmul.f32 %v1279, %v1339
      %v1363 = vmul.f32 %v1280, %v1343
      %v1364 = vmul.f32 %v1281, %v1339
      %v1365 = vmul.f32 %v1282, %v1343
      %v1366 = vmul.f32 %v1283, %v1339
      %v1367 = vmul.f32 %v1284, %v1343
      %v1368 = vmul.f32 %v1285, %v1339
      %v1369 = vmul.f32 %v1286, %v1343
      %v1370 = vmul.f32 %v1287, %v1339
      %v1371 = vmul.f32 %v1288, %v1343
      %v1372 = vmul.f32 %v1289, %v1339
      %v1373 = vmul.f32 %v1290, %v1343
      %v1374 = vmul.f32 %v1291, %v1339
      %v1375 = vmul.f32 %v1292, %v1343
      %v1376 = vmul.f32 %v1293, %v1339
      %v1377 = vmul.f32 %v1294, %v1343
      %v1378 = vmul.f32 %v1295, %v1339
      %v1379 = vmul.f32 %v1296, %v1343
      %v1380 = vmul.f32 %v1297, %v1339
      %v1381 = vmul.f32 %v1298, %v1343
      %v1382 = vmul.f32 %v1299, %v1339
      %v1383 = vmul.f32 %v1300, %v1343
      %v1384 = vmul.f32 %v1301, %v1339
      %v1385 = vmul.f32 %v1302, %v1343
      %v1386 = vmul.f32 %v1303, %v1339
      %v1387 = vmul.f32 %v1304, %v1343
      %v1388 = vmul.f32 %v1305, %v1339
      %v1389 = vmul.f32 %v1306, %v1343
      %v1390 = vmul.f32 %v1307, %v1339
      %v1391 = vmul.f32 %v1308, %v1343
      %v1392 = vmul.f32 %v1309, %v1339
      %v1393 = vmul.f32 %v1310, %v1343
      %v1394 = vmul.f32 %v1311, %v1339
      %v1395 = vmul.f32 %v1312, %v1343
      %v1396 = vmul.f32 %v1313, %v1339
      %v1397 = vmul.f32 %v1314, %v1343
      %v1398 = vmul.f32 %v1315, %v1339
      %v1399 = vmul.f32 %v1316, %v1343
      %v1400 = vmul.f32 %v1317, %v1339
      %v1401 = vmul.f32 %v1318, %v1343
      %v1402 = vmul.f32 %v1319, %v1339
      %v1403 = vmul.f32 %v1320, %v1343
      %v1404 = vmul.f32 %v1321, %v1339
      %v1405 = vmul.f32 %v1322, %v1343
      %v1406 = vmul.f32 %v1323, %v1339
      %v1407 = vmul.f32 %v1324, %v1343
      %v1408 = vadd.f32 %v1044, %v1344
      %v1409 = vadd.f32 %v1045, %v1345
      %v1410 = vadd.f32 %v1046, %v1346
      %v1411 = vadd.f32 %v1047, %v1347
      %v1412 = vadd.f32 %v1048, %v1348
      %v1413 = vadd.f32 %v1049, %v1349
      %v1414 = vadd.f32 %v1050, %v1350
      %v1415 = vadd.f32 %v1051, %v1351
      %v1416 = vadd.f32 %v1052, %v1352
      %v1417 = vadd.f32 %v1053, %v1353
      %v1418 = vadd.f32 %v1054, %v1354
      %v1419 = vadd.f32 %v1055, %v1355
      %v1420 = vadd.f32 %v1056, %v1356
      %v1421 = vadd.f32 %v1057, %v1357
      %v1422 = vadd.f32 %v1058, %v1358
      %v1423 = vadd.f32 %v1059, %v1359
      %v1424 = vadd.f32 %v1060, %v1360
      %v1425 = vadd.f32 %v1061, %v1361
      %v1426 = vadd.f32 %v1062, %v1362
      %v1427 = vadd.f32 %v1063, %v1363
      %v1428 = vadd.f32 %v1064, %v1364
      %v1429 = vadd.f32 %v1065, %v1365
      %v1430 = vadd.f32 %v1066, %v1366
      %v1431 = vadd.f32 %v1067, %v1367
      %v1432 = vadd.f32 %v1068, %v1368
      %v1433 = vadd.f32 %v1069, %v1369
      %v1434 = vadd.f32 %v1070, %v1370
      %v1435 = vadd.f32 %v1071, %v1371
      %v1436 = vadd.f32 %v1072, %v1372
      %v1437 = vadd.f32 %v1073, %v1373
      %v1438 = vadd.f32 %v1074, %v1374
      %v1439 = vadd.f32 %v1075, %v1375
      %v1440 = vadd.f32 %v1076, %v1376
      %v1441 = vadd.f32 %v1077, %v1377
      %v1442 = vadd.f32 %v1078, %v1378
      %v1443 = vadd.f32 %v1079, %v1379
      %v1444 = vadd.f32 %v1080, %v1380
      %v1445 = vadd.f32 %v1081, %v1381
      %v1446 = vadd.f32 %v1082, %v1382
      %v1447 = vadd.f32 %v1083, %v1383
      %v1448 = vadd.f32 %v1084, %v1384
      %v1449 = vadd.f32 %v1085, %v1385
      %v1450 = vadd.f32 %v1086, %v1386
      %v1451 = vadd.f32 %v1087, %v1387
      %v1452 = vadd.f32 %v1088, %v1388
      %v1453 = vadd.f32 %v1089, %v1389
      %v1454 = vadd.f32 %v1090, %v1390
      %v1455 = vadd.f32 %v1091, %v1391
      %v1456 = vadd.f32 %v1092, %v1392
      %v1457 = vadd.f32 %v1093, %v1393
      %v1458 = vadd.f32 %v1094, %v1394
      %v1459 = vadd.f32 %v1095, %v1395
      %v1460 = vadd.f32 %v1096, %v1396
      %v1461 = vadd.f32 %v1097, %v1397
      %v1462 = vadd.f32 %v1098, %v1398
      %v1463 = vadd.f32 %v1099, %v1399
      %v1464 = vadd.f32 %v1100, %v1400
      %v1465 = vadd.f32 %v1101, %v1401
      %v1466 = vadd.f32 %v1102, %v1402
      %v1467 = vadd.f32 %v1103, %v1403
      %v1468 = vadd.f32 %v1104, %v1404
      %v1469 = vadd.f32 %v1105, %v1405
      %v1470 = vadd.f32 %v1106, %v1406
      %v1471 = vadd.f32 %v1107, %v1407
      %v1472 = vmul.f32 %v409, %v1110
      %v1473 = vadd.s32 %v416, %v1115
      %v1474 = vlaneseq
      %v1475 = vshrl.u32 %v1474, 7
      %v1476 = vsub.s32 0, %v1475
      %v1477 = vrot.slane %v1473, %v1476
      %v1478 = vlaneseq
      %v1479 = vshrl.u32 %v1478, 7
      %v1480 = vsub.s32 4, %v1479
      %v1481 = vrot.slane %v1473, %v1480
      %v1482 = vlaneseq
      %v1483 = vshrl.u32 %v1482, 7
      %v1484 = vsub.s32 0, %v1483
      %v1485 = vrot.slane %v1477, %v1484
      %v1486 = vlaneseq
      %v1487 = vshrl.u32 %v1486, 7
      %v1488 = vsub.s32 0, %v1487
      %v1489 = vrot.slane %v1481, %v1488
      %vm1490 = vcmp.eq.s32.totalorder %v418, %v1485
      %vm1491 = vcmp.eq.s32.totalorder %v418, %v1489
      %vm1492 = vcmp.eq.s32.totalorder %v419, %v1485
      %vm1493 = vcmp.eq.s32.totalorder %v419, %v1489
      %vm1494 = vcmp.eq.s32.totalorder %v420, %v1485
      %vm1495 = vcmp.eq.s32.totalorder %v420, %v1489
      %vm1496 = vcmp.eq.s32.totalorder %v421, %v1485
      %vm1497 = vcmp.eq.s32.totalorder %v421, %v1489
      %vm1498 = vcmp.eq.s32.totalorder %v422, %v1485
      %vm1499 = vcmp.eq.s32.totalorder %v422, %v1489
      %vm1500 = vcmp.eq.s32.totalorder %v423, %v1485
      %vm1501 = vcmp.eq.s32.totalorder %v423, %v1489
      %vm1502 = vcmp.eq.s32.totalorder %v424, %v1485
      %vm1503 = vcmp.eq.s32.totalorder %v424, %v1489
      %vm1504 = vcmp.eq.s32.totalorder %v425, %v1485
      %vm1505 = vcmp.eq.s32.totalorder %v425, %v1489
      %vm1506 = vcmp.eq.s32.totalorder %v426, %v1485
      %vm1507 = vcmp.eq.s32.totalorder %v426, %v1489
      %vm1508 = vcmp.eq.s32.totalorder %v427, %v1485
      %vm1509 = vcmp.eq.s32.totalorder %v427, %v1489
      %vm1510 = vcmp.eq.s32.totalorder %v428, %v1485
      %vm1511 = vcmp.eq.s32.totalorder %v428, %v1489
      %vm1512 = vcmp.eq.s32.totalorder %v429, %v1485
      %vm1513 = vcmp.eq.s32.totalorder %v429, %v1489
      %vm1514 = vcmp.eq.s32.totalorder %v430, %v1485
      %vm1515 = vcmp.eq.s32.totalorder %v430, %v1489
      %vm1516 = vcmp.eq.s32.totalorder %v431, %v1485
      %vm1517 = vcmp.eq.s32.totalorder %v431, %v1489
      %vm1518 = vcmp.eq.s32.totalorder %v432, %v1485
      %vm1519 = vcmp.eq.s32.totalorder %v432, %v1489
      %vm1520 = vcmp.eq.s32.totalorder %v433, %v1485
      %vm1521 = vcmp.eq.s32.totalorder %v433, %v1489
      %vm1522 = vcmp.eq.s32.totalorder %v434, %v1485
      %vm1523 = vcmp.eq.s32.totalorder %v434, %v1489
      %vm1524 = vcmp.eq.s32.totalorder %v435, %v1485
      %vm1525 = vcmp.eq.s32.totalorder %v435, %v1489
      %vm1526 = vcmp.eq.s32.totalorder %v436, %v1485
      %vm1527 = vcmp.eq.s32.totalorder %v436, %v1489
      %vm1528 = vcmp.eq.s32.totalorder %v437, %v1485
      %vm1529 = vcmp.eq.s32.totalorder %v437, %v1489
      %vm1530 = vcmp.eq.s32.totalorder %v438, %v1485
      %vm1531 = vcmp.eq.s32.totalorder %v438, %v1489
      %vm1532 = vcmp.eq.s32.totalorder %v439, %v1485
      %vm1533 = vcmp.eq.s32.totalorder %v439, %v1489
      %vm1534 = vcmp.eq.s32.totalorder %v440, %v1485
      %vm1535 = vcmp.eq.s32.totalorder %v440, %v1489
      %vm1536 = vcmp.eq.s32.totalorder %v441, %v1485
      %vm1537 = vcmp.eq.s32.totalorder %v441, %v1489
      %vm1538 = vcmp.eq.s32.totalorder %v442, %v1485
      %vm1539 = vcmp.eq.s32.totalorder %v442, %v1489
      %vm1540 = vcmp.eq.s32.totalorder %v443, %v1485
      %vm1541 = vcmp.eq.s32.totalorder %v443, %v1489
      %vm1542 = vcmp.eq.s32.totalorder %v444, %v1485
      %vm1543 = vcmp.eq.s32.totalorder %v444, %v1489
      %vm1544 = vcmp.eq.s32.totalorder %v445, %v1485
      %vm1545 = vcmp.eq.s32.totalorder %v445, %v1489
      %vm1546 = vcmp.eq.s32.totalorder %v446, %v1485
      %vm1547 = vcmp.eq.s32.totalorder %v446, %v1489
      %vm1548 = vcmp.eq.s32.totalorder %v447, %v1485
      %vm1549 = vcmp.eq.s32.totalorder %v447, %v1489
      %vm1550 = vcmp.eq.s32.totalorder %v448, %v1485
      %vm1551 = vcmp.eq.s32.totalorder %v448, %v1489
      %vm1552 = vcmp.eq.s32.totalorder %v449, %v1485
      %vm1553 = vcmp.eq.s32.totalorder %v449, %v1489
      %v1554 = vsel %vm1490, 1, 0
      %v1555 = vsel %vm1491, 1, 0
      %v1556 = vsel %vm1492, 1, 0
      %v1557 = vsel %vm1493, 1, 0
      %v1558 = vsel %vm1494, 1, 0
      %v1559 = vsel %vm1495, 1, 0
      %v1560 = vsel %vm1496, 1, 0
      %v1561 = vsel %vm1497, 1, 0
      %v1562 = vsel %vm1498, 1, 0
      %v1563 = vsel %vm1499, 1, 0
      %v1564 = vsel %vm1500, 1, 0
      %v1565 = vsel %vm1501, 1, 0
      %v1566 = vsel %vm1502, 1, 0
      %v1567 = vsel %vm1503, 1, 0
      %v1568 = vsel %vm1504, 1, 0
      %v1569 = vsel %vm1505, 1, 0
      %v1570 = vsel %vm1506, 1, 0
      %v1571 = vsel %vm1507, 1, 0
      %v1572 = vsel %vm1508, 1, 0
      %v1573 = vsel %vm1509, 1, 0
      %v1574 = vsel %vm1510, 1, 0
      %v1575 = vsel %vm1511, 1, 0
      %v1576 = vsel %vm1512, 1, 0
      %v1577 = vsel %vm1513, 1, 0
      %v1578 = vsel %vm1514, 1, 0
      %v1579 = vsel %vm1515, 1, 0
      %v1580 = vsel %vm1516, 1, 0
      %v1581 = vsel %vm1517, 1, 0
      %v1582 = vsel %vm1518, 1, 0
      %v1583 = vsel %vm1519, 1, 0
      %v1584 = vsel %vm1520, 1, 0
      %v1585 = vsel %vm1521, 1, 0
      %v1586 = vsel %vm1522, 1, 0
      %v1587 = vsel %vm1523, 1, 0
      %v1588 = vsel %vm1524, 1, 0
      %v1589 = vsel %vm1525, 1, 0
      %v1590 = vsel %vm1526, 1, 0
      %v1591 = vsel %vm1527, 1, 0
      %v1592 = vsel %vm1528, 1, 0
      %v1593 = vsel %vm1529, 1, 0
      %v1594 = vsel %vm1530, 1, 0
      %v1595 = vsel %vm1531, 1, 0
      %v1596 = vsel %vm1532, 1, 0
      %v1597 = vsel %vm1533, 1, 0
      %v1598 = vsel %vm1534, 1, 0
      %v1599 = vsel %vm1535, 1, 0
      %v1600 = vsel %vm1536, 1, 0
      %v1601 = vsel %vm1537, 1, 0
      %v1602 = vsel %vm1538, 1, 0
      %v1603 = vsel %vm1539, 1, 0
      %v1604 = vsel %vm1540, 1, 0
      %v1605 = vsel %vm1541, 1, 0
      %v1606 = vsel %vm1542, 1, 0
      %v1607 = vsel %vm1543, 1, 0
      %v1608 = vsel %vm1544, 1, 0
      %v1609 = vsel %vm1545, 1, 0
      %v1610 = vsel %vm1546, 1, 0
      %v1611 = vsel %vm1547, 1, 0
      %v1612 = vsel %vm1548, 1, 0
      %v1613 = vsel %vm1549, 1, 0
      %v1614 = vsel %vm1550, 1, 0
      %v1615 = vsel %vm1551, 1, 0
      %v1616 = vsel %vm1552, 1, 0
      %v1617 = vsel %vm1553, 1, 0
      %v1618 = vcvt.s32.f32 %v1554
      %v1619 = vcvt.s32.f32 %v1555
      %v1620 = vcvt.s32.f32 %v1556
      %v1621 = vcvt.s32.f32 %v1557
      %v1622 = vcvt.s32.f32 %v1558
      %v1623 = vcvt.s32.f32 %v1559
      %v1624 = vcvt.s32.f32 %v1560
      %v1625 = vcvt.s32.f32 %v1561
      %v1626 = vcvt.s32.f32 %v1562
      %v1627 = vcvt.s32.f32 %v1563
      %v1628 = vcvt.s32.f32 %v1564
      %v1629 = vcvt.s32.f32 %v1565
      %v1630 = vcvt.s32.f32 %v1566
      %v1631 = vcvt.s32.f32 %v1567
      %v1632 = vcvt.s32.f32 %v1568
      %v1633 = vcvt.s32.f32 %v1569
      %v1634 = vcvt.s32.f32 %v1570
      %v1635 = vcvt.s32.f32 %v1571
      %v1636 = vcvt.s32.f32 %v1572
      %v1637 = vcvt.s32.f32 %v1573
      %v1638 = vcvt.s32.f32 %v1574
      %v1639 = vcvt.s32.f32 %v1575
      %v1640 = vcvt.s32.f32 %v1576
      %v1641 = vcvt.s32.f32 %v1577
      %v1642 = vcvt.s32.f32 %v1578
      %v1643 = vcvt.s32.f32 %v1579
      %v1644 = vcvt.s32.f32 %v1580
      %v1645 = vcvt.s32.f32 %v1581
      %v1646 = vcvt.s32.f32 %v1582
      %v1647 = vcvt.s32.f32 %v1583
      %v1648 = vcvt.s32.f32 %v1584
      %v1649 = vcvt.s32.f32 %v1585
      %v1650 = vcvt.s32.f32 %v1586
      %v1651 = vcvt.s32.f32 %v1587
      %v1652 = vcvt.s32.f32 %v1588
      %v1653 = vcvt.s32.f32 %v1589
      %v1654 = vcvt.s32.f32 %v1590
      %v1655 = vcvt.s32.f32 %v1591
      %v1656 = vcvt.s32.f32 %v1592
      %v1657 = vcvt.s32.f32 %v1593
      %v1658 = vcvt.s32.f32 %v1594
      %v1659 = vcvt.s32.f32 %v1595
      %v1660 = vcvt.s32.f32 %v1596
      %v1661 = vcvt.s32.f32 %v1597
      %v1662 = vcvt.s32.f32 %v1598
      %v1663 = vcvt.s32.f32 %v1599
      %v1664 = vcvt.s32.f32 %v1600
      %v1665 = vcvt.s32.f32 %v1601
      %v1666 = vcvt.s32.f32 %v1602
      %v1667 = vcvt.s32.f32 %v1603
      %v1668 = vcvt.s32.f32 %v1604
      %v1669 = vcvt.s32.f32 %v1605
      %v1670 = vcvt.s32.f32 %v1606
      %v1671 = vcvt.s32.f32 %v1607
      %v1672 = vcvt.s32.f32 %v1608
      %v1673 = vcvt.s32.f32 %v1609
      %v1674 = vcvt.s32.f32 %v1610
      %v1675 = vcvt.s32.f32 %v1611
      %v1676 = vcvt.s32.f32 %v1612
      %v1677 = vcvt.s32.f32 %v1613
      %v1678 = vcvt.s32.f32 %v1614
      %v1679 = vcvt.s32.f32 %v1615
      %v1680 = vcvt.s32.f32 %v1616
      %v1681 = vcvt.s32.f32 %v1617
      %v1683 = vlaneseq
      %v1684 = vshrl.u32 %v1683, 7
      %v1685 = vsub.s32 0, %v1684
      %v1686 = vrot.slane %v1472, %v1685
      %v1687 = vlaneseq
      %v1688 = vshrl.u32 %v1687, 7
      %v1689 = vsub.s32 4, %v1688
      %v1690 = vrot.slane %v1472, %v1689
      %v1693 = vlaneseq
      %v1694 = vshrl.u32 %v1693, 7
      %v1695 = vsub.s32 0, %v1694
      %v1696 = vrot.slane %v1686, %v1695
      %v1697 = vlaneseq
      %v1698 = vshrl.u32 %v1697, 7
      %v1699 = vsub.s32 0, %v1698
      %v1700 = vrot.slane %v1690, %v1699
      %v1701 = vmul.f32 %v1618, %v1696
      %v1702 = vmul.f32 %v1619, %v1700
      %v1703 = vmul.f32 %v1620, %v1696
      %v1704 = vmul.f32 %v1621, %v1700
      %v1705 = vmul.f32 %v1622, %v1696
      %v1706 = vmul.f32 %v1623, %v1700
      %v1707 = vmul.f32 %v1624, %v1696
      %v1708 = vmul.f32 %v1625, %v1700
      %v1709 = vmul.f32 %v1626, %v1696
      %v1710 = vmul.f32 %v1627, %v1700
      %v1711 = vmul.f32 %v1628, %v1696
      %v1712 = vmul.f32 %v1629, %v1700
      %v1713 = vmul.f32 %v1630, %v1696
      %v1714 = vmul.f32 %v1631, %v1700
      %v1715 = vmul.f32 %v1632, %v1696
      %v1716 = vmul.f32 %v1633, %v1700
      %v1717 = vmul.f32 %v1634, %v1696
      %v1718 = vmul.f32 %v1635, %v1700
      %v1719 = vmul.f32 %v1636, %v1696
      %v1720 = vmul.f32 %v1637, %v1700
      %v1721 = vmul.f32 %v1638, %v1696
      %v1722 = vmul.f32 %v1639, %v1700
      %v1723 = vmul.f32 %v1640, %v1696
      %v1724 = vmul.f32 %v1641, %v1700
      %v1725 = vmul.f32 %v1642, %v1696
      %v1726 = vmul.f32 %v1643, %v1700
      %v1727 = vmul.f32 %v1644, %v1696
      %v1728 = vmul.f32 %v1645, %v1700
      %v1729 = vmul.f32 %v1646, %v1696
      %v1730 = vmul.f32 %v1647, %v1700
      %v1731 = vmul.f32 %v1648, %v1696
      %v1732 = vmul.f32 %v1649, %v1700
      %v1733 = vmul.f32 %v1650, %v1696
      %v1734 = vmul.f32 %v1651, %v1700
      %v1735 = vmul.f32 %v1652, %v1696
      %v1736 = vmul.f32 %v1653, %v1700
      %v1737 = vmul.f32 %v1654, %v1696
      %v1738 = vmul.f32 %v1655, %v1700
      %v1739 = vmul.f32 %v1656, %v1696
      %v1740 = vmul.f32 %v1657, %v1700
      %v1741 = vmul.f32 %v1658, %v1696
      %v1742 = vmul.f32 %v1659, %v1700
      %v1743 = vmul.f32 %v1660, %v1696
      %v1744 = vmul.f32 %v1661, %v1700
      %v1745 = vmul.f32 %v1662, %v1696
      %v1746 = vmul.f32 %v1663, %v1700
      %v1747 = vmul.f32 %v1664, %v1696
      %v1748 = vmul.f32 %v1665, %v1700
      %v1749 = vmul.f32 %v1666, %v1696
      %v1750 = vmul.f32 %v1667, %v1700
      %v1751 = vmul.f32 %v1668, %v1696
      %v1752 = vmul.f32 %v1669, %v1700
      %v1753 = vmul.f32 %v1670, %v1696
      %v1754 = vmul.f32 %v1671, %v1700
      %v1755 = vmul.f32 %v1672, %v1696
      %v1756 = vmul.f32 %v1673, %v1700
      %v1757 = vmul.f32 %v1674, %v1696
      %v1758 = vmul.f32 %v1675, %v1700
      %v1759 = vmul.f32 %v1676, %v1696
      %v1760 = vmul.f32 %v1677, %v1700
      %v1761 = vmul.f32 %v1678, %v1696
      %v1762 = vmul.f32 %v1679, %v1700
      %v1763 = vmul.f32 %v1680, %v1696
      %v1764 = vmul.f32 %v1681, %v1700
      %v1765 = vadd.f32 %v1408, %v1701
      %v1766 = vadd.f32 %v1409, %v1702
      %v1767 = vadd.f32 %v1410, %v1703
      %v1768 = vadd.f32 %v1411, %v1704
      %v1769 = vadd.f32 %v1412, %v1705
      %v1770 = vadd.f32 %v1413, %v1706
      %v1771 = vadd.f32 %v1414, %v1707
      %v1772 = vadd.f32 %v1415, %v1708
      %v1773 = vadd.f32 %v1416, %v1709
      %v1774 = vadd.f32 %v1417, %v1710
      %v1775 = vadd.f32 %v1418, %v1711
      %v1776 = vadd.f32 %v1419, %v1712
      %v1777 = vadd.f32 %v1420, %v1713
      %v1778 = vadd.f32 %v1421, %v1714
      %v1779 = vadd.f32 %v1422, %v1715
      %v1780 = vadd.f32 %v1423, %v1716
      %v1781 = vadd.f32 %v1424, %v1717
      %v1782 = vadd.f32 %v1425, %v1718
      %v1783 = vadd.f32 %v1426, %v1719
      %v1784 = vadd.f32 %v1427, %v1720
      %v1785 = vadd.f32 %v1428, %v1721
      %v1786 = vadd.f32 %v1429, %v1722
      %v1787 = vadd.f32 %v1430, %v1723
      %v1788 = vadd.f32 %v1431, %v1724
      %v1789 = vadd.f32 %v1432, %v1725
      %v1790 = vadd.f32 %v1433, %v1726
      %v1791 = vadd.f32 %v1434, %v1727
      %v1792 = vadd.f32 %v1435, %v1728
      %v1793 = vadd.f32 %v1436, %v1729
      %v1794 = vadd.f32 %v1437, %v1730
      %v1795 = vadd.f32 %v1438, %v1731
      %v1796 = vadd.f32 %v1439, %v1732
      %v1797 = vadd.f32 %v1440, %v1733
      %v1798 = vadd.f32 %v1441, %v1734
      %v1799 = vadd.f32 %v1442, %v1735
      %v1800 = vadd.f32 %v1443, %v1736
      %v1801 = vadd.f32 %v1444, %v1737
      %v1802 = vadd.f32 %v1445, %v1738
      %v1803 = vadd.f32 %v1446, %v1739
      %v1804 = vadd.f32 %v1447, %v1740
      %v1805 = vadd.f32 %v1448, %v1741
      %v1806 = vadd.f32 %v1449, %v1742
      %v1807 = vadd.f32 %v1450, %v1743
      %v1808 = vadd.f32 %v1451, %v1744
      %v1809 = vadd.f32 %v1452, %v1745
      %v1810 = vadd.f32 %v1453, %v1746
      %v1811 = vadd.f32 %v1454, %v1747
      %v1812 = vadd.f32 %v1455, %v1748
      %v1813 = vadd.f32 %v1456, %v1749
      %v1814 = vadd.f32 %v1457, %v1750
      %v1815 = vadd.f32 %v1458, %v1751
      %v1816 = vadd.f32 %v1459, %v1752
      %v1817 = vadd.f32 %v1460, %v1753
      %v1818 = vadd.f32 %v1461, %v1754
      %v1819 = vadd.f32 %v1462, %v1755
      %v1820 = vadd.f32 %v1463, %v1756
      %v1821 = vadd.f32 %v1464, %v1757
      %v1822 = vadd.f32 %v1465, %v1758
      %v1823 = vadd.f32 %v1466, %v1759
      %v1824 = vadd.f32 %v1467, %v1760
      %v1825 = vadd.f32 %v1468, %v1761
      %v1826 = vadd.f32 %v1469, %v1762
      %v1827 = vadd.f32 %v1470, %v1763
      %v1828 = vadd.f32 %v1471, %v1764
      %1829 = vmatprep.subr.mxu0 %v1766
      %1830 = vmatpush1.msra.mxu0 %v1765
      %1831 = vmatprep.subr.mxu0 %v1768
      %1832 = vmatpush1.msra.mxu0 %v1767
      %1833 = vmatprep.subr.mxu0 %v1770
      %1834 = vmatpush1.msra.mxu0 %v1769
      %1835 = vmatprep.subr.mxu0 %v1772
      %1836 = vmatpush1.msra.mxu0 %v1771
      %1837 = vmatprep.subr.mxu0 %v1774
      %1838 = vmatpush1.msra.mxu0 %v1773
      %1839 = vmatprep.subr.mxu0 %v1776
      %1840 = vmatpush1.msra.mxu0 %v1775
      %1841 = vmatprep.subr.mxu0 %v1778
      %1842 = vmatpush1.msra.mxu0 %v1777
      %1843 = vmatprep.subr.mxu0 %v1780
      %1844 = vmatpush1.msra.mxu0 %v1779
      %1845 = vmatprep.subr.mxu0 %v1782
      %1846 = vmatpush1.msra.mxu0 %v1781
      %1847 = vmatprep.subr.mxu0 %v1784
      %1848 = vmatpush1.msra.mxu0 %v1783
      %1849 = vmatprep.subr.mxu0 %v1786
      %1850 = vmatpush1.msra.mxu0 %v1785
      %1851 = vmatprep.subr.mxu0 %v1788
      %1852 = vmatpush1.msra.mxu0 %v1787
      %1853 = vmatprep.subr.mxu0 %v1790
      %1854 = vmatpush1.msra.mxu0 %v1789
      %1855 = vmatprep.subr.mxu0 %v1792
      %1856 = vmatpush1.msra.mxu0 %v1791
      %1857 = vmatprep.subr.mxu0 %v1794
      %1858 = vmatpush1.msra.mxu0 %v1793
      %1859 = vmatprep.subr.mxu0 %v1796
      %1860 = vmatpush1.msra.mxu0 %v1795
      %1861 = vmatprep.subr.mxu0 %v1798
      %1862 = vmatpush1.msra.mxu0 %v1797
      %1863 = vmatprep.subr.mxu0 %v1800
      %1864 = vmatpush1.msra.mxu0 %v1799
      %1865 = vmatprep.subr.mxu0 %v1802
      %1866 = vmatpush1.msra.mxu0 %v1801
      %1867 = vmatprep.subr.mxu0 %v1804
      %1868 = vmatpush1.msra.mxu0 %v1803
      %1869 = vmatprep.subr.mxu0 %v1806
      %1870 = vmatpush1.msra.mxu0 %v1805
      %1871 = vmatprep.subr.mxu0 %v1808
      %1872 = vmatpush1.msra.mxu0 %v1807
      %1873 = vmatprep.subr.mxu0 %v1810
      %1874 = vmatpush1.msra.mxu0 %v1809
      %1875 = vmatprep.subr.mxu0 %v1812
      %1876 = vmatpush1.msra.mxu0 %v1811
      %1877 = vmatprep.subr.mxu0 %v1814
      %1878 = vmatpush1.msra.mxu0 %v1813
      %1879 = vmatprep.subr.mxu0 %v1816
      %1880 = vmatpush1.msra.mxu0 %v1815
      %1881 = vmatprep.subr.mxu0 %v1818
      %1882 = vmatpush1.msra.mxu0 %v1817
      %1883 = vmatprep.subr.mxu0 %v1820
      %1884 = vmatpush1.msra.mxu0 %v1819
      %1885 = vmatprep.subr.mxu0 %v1822
      %1886 = vmatpush1.msra.mxu0 %v1821
      %1887 = vmatprep.subr.mxu0 %v1824
      %1888 = vmatpush1.msra.mxu0 %v1823
      %1889 = vmatprep.subr.mxu0 %v1826
      %1890 = vmatpush1.msra.mxu0 %v1825
      %1891 = vmatprep.subr.mxu0 %v1828
      %1892 = vmatpush1.msra.mxu0 %v1827
      %1893 = vmatprep.mubr.f32.mxu0 %v395
      %1894 = vmatmul.mubr.f32.gmra.mrb[0].mxu0 %v394
      %v1895 = vpop.f32.mrb[0].mxu0
      %v1896 = vadd.f32 0.0, %v1895
      %v1897 = vpop.f32.mrb[0].mxu0
      %v1898 = vadd.f32 0.0, %v1897
      %1899 = vmatprep.mubr.f32.mxu0 %v397
      %1900 = vmatmul.mubr.f32.gmra.mrb[0].mxu0 %v396
      %v1901 = vpop.f32.mrb[0].mxu0
      %v1902 = vadd.f32 0.0, %v1901
      %v1903 = vpop.f32.mrb[0].mxu0
      %v1904 = vadd.f32 0.0, %v1903
      %1905 = vmatprep.mubr.f32.mxu0 %v399
      %1906 = vmatmul.mubr.f32.gmra.mrb[0].mxu0 %v398
      %v1907 = vpop.f32.mrb[0].mxu0
      %v1908 = vadd.f32 0.0, %v1907
      %v1909 = vpop.f32.mrb[0].mxu0
      %v1910 = vadd.f32 0.0, %v1909
      %1911 = vmatprep.mubr.f32.mxu0 %v401
      %1912 = vmatmul.mubr.f32.gmra.mrb[0].mxu0 %v400
      %v1913 = vpop.f32.mrb[0].mxu0
      %v1914 = vadd.f32 0.0, %v1913
      %v1915 = vpop.f32.mrb[0].mxu0
      %v1916 = vadd.f32 0.0, %v1915
      %1917 = vdwg.mxu0
      %v1918 = vld [vmem:[%s2] sm:$0xff]
      %v1919 = vld [vmem:[%s2 + $0x8] sm:$0xff]
      %v1920 = vld [vmem:[%s2 + $0x10] sm:$0xff]
      %v1921 = vld [vmem:[%s2 + $0x18] sm:$0xff]
      %v1922 = vld [vmem:[%s2 + $0x20] sm:$0xff]
      %v1923 = vld [vmem:[%s2 + $0x28] sm:$0xff]
      %v1924 = vld [vmem:[%s2 + $0x30] sm:$0xff]
      %v1925 = vld [vmem:[%s2 + $0x38] sm:$0xff]
      %v1926 = vld [vmem:[%s3] sm:$0xf]
      %v1927 = vld [vmem:[%s3 + $0x4] sm:$0xf]
      %v1928 = vld [vmem:[%s3 + $0x8] sm:$0xf]
      %v1929 = vld [vmem:[%s3 + $0xc] sm:$0xf]
      %v1930 = vld [vmem:[%s3 + $0x10] sm:$0xf]
      %v1931 = vld [vmem:[%s3 + $0x14] sm:$0xf]
      %v1932 = vld [vmem:[%s3 + $0x18] sm:$0xf]
      %v1933 = vld [vmem:[%s3 + $0x1c] sm:$0xf]
      %v1934 = vpack.c.bf16 %v1902, %v1896
      %v1935 = vpack.c.bf16 %v1904, %v1898
      %v1936 = vpack.c.bf16 %v1914, %v1908
      %v1937 = vpack.c.bf16 %v1916, %v1910
      %v1946 = vunpack.c.l.b16 %v1926
      %v1947 = vunpack.c.l.b16 %v1927
      %v1948 = vunpack.c.l.b16 %v1928
      %v1949 = vunpack.c.l.b16 %v1929
      %v1950 = vunpack.c.l.b16 %v1930
      %v1951 = vunpack.c.l.b16 %v1931
      %v1952 = vunpack.c.l.b16 %v1932
      %v1953 = vunpack.c.l.b16 %v1933
      %v1954 = vpack.c.b16 %v1947, %v1946
      %v1955 = vpack.c.b16 %v1949, %v1948
      %v1956 = vpack.c.b16 %v1951, %v1950
      %v1957 = vpack.c.b16 %v1953, %v1952
      %vm1958 = vcmask 261120
      %v1960 = vsel %vm1958, %v1954, 0
      %v1963 = vsel %vm1958, %v1955, 0
      %v1966 = vsel %vm1958, %v1956, 0
      %v1969 = vsel %vm1958, %v1957, 0
      %1971 = vmatprep.subr.bf16.mxu0 %v1935
      %1972 = vmatpush1.bf16.msra.mxu0 %v1934
      %1973 = vmatprep.subr.bf16.mxu0 %v1937
      %1974 = vmatpush1.bf16.msra.mxu0 %v1936
      %1975 = vmatprep.subr.bf16.mxu0 0
      %1976 = vmatpush1.bf16.msra.mxu0 0
      %1977 = vmatprep.subr.bf16.mxu0 0
      %1978 = vmatpush1.bf16.msra.mxu0 0
      %1979 = vmatprep.subr.bf16.mxu0 0
      %1980 = vmatpush1.bf16.msra.mxu0 0
      %1981 = vmatprep.subr.bf16.mxu0 0
      %1982 = vmatpush1.bf16.msra.mxu0 0
      %1983 = vmatprep.subr.bf16.mxu0 0
      %1984 = vmatpush1.bf16.msra.mxu0 0
      %1985 = vmatprep.subr.bf16.mxu0 0
      %1986 = vmatpush1.bf16.msra.mxu0 0
      %1987 = vmatprep.subr.bf16.mxu0 0
      %1988 = vmatpush1.bf16.msra.mxu0 0
      %1989 = vmatprep.subr.bf16.mxu0 0
      %1990 = vmatpush1.bf16.msra.mxu0 0
      %1991 = vmatprep.subr.bf16.mxu0 0
      %1992 = vmatpush1.bf16.msra.mxu0 0
      %1993 = vmatprep.subr.bf16.mxu0 0
      %1994 = vmatpush1.bf16.msra.mxu0 0
      %1995 = vmatprep.subr.bf16.mxu0 0
      %1996 = vmatpush1.bf16.msra.mxu0 0
      %1997 = vmatprep.subr.bf16.mxu0 0
      %1998 = vmatpush1.bf16.msra.mxu0 0
      %1999 = vmatprep.subr.bf16.mxu0 0
      %2000 = vmatpush1.bf16.msra.mxu0 0
      %2001 = vmatprep.subr.bf16.mxu0 0
      %2002 = vmatpush1.bf16.msra.mxu0 0
      %2003 = vmatprep.mubr.bf16.mxu0 0
      %2004 = vmatmul.mubr.bf16.gmra.mrb[0].mxu0 %v1960
      %v2005 = vpop.f32.mrb[0].mxu0
      %v2006 = vadd.f32 0.0, %v2005
      %v2007 = vpop.f32.mrb[0].mxu0
      %v2008 = vadd.f32 0.0, %v2007
      %v2009 = vpop.f32.mrb[0].mxu0
      %v2010 = vadd.f32 0.0, %v2009
      %v2011 = vpop.f32.mrb[0].mxu0
      %v2012 = vadd.f32 0.0, %v2011
      %2013 = vmatprep.mubr.bf16.mxu0 0
      %2014 = vmatmul.mubr.bf16.gmra.mrb[0].mxu0 %v1963
      %v2015 = vpop.f32.mrb[0].mxu0
      %v2016 = vadd.f32 0.0, %v2015
      %v2017 = vpop.f32.mrb[0].mxu0
      %v2018 = vadd.f32 0.0, %v2017
      %v2019 = vpop.f32.mrb[0].mxu0
      %v2020 = vadd.f32 0.0, %v2019
      %v2021 = vpop.f32.mrb[0].mxu0
      %v2022 = vadd.f32 0.0, %v2021
      %2023 = vmatprep.mubr.bf16.mxu0 0
      %2024 = vmatmul.mubr.bf16.gmra.mrb[0].mxu0 %v1966
      %v2025 = vpop.f32.mrb[0].mxu0
      %v2026 = vadd.f32 0.0, %v2025
      %v2027 = vpop.f32.mrb[0].mxu0
      %v2028 = vadd.f32 0.0, %v2027
      %v2029 = vpop.f32.mrb[0].mxu0
      %v2030 = vadd.f32 0.0, %v2029
      %v2031 = vpop.f32.mrb[0].mxu0
      %v2032 = vadd.f32 0.0, %v2031
      %2033 = vmatprep.mubr.bf16.mxu0 0
      %2034 = vmatmul.mubr.bf16.gmra.mrb[0].mxu0 %v1969
      %v2035 = vpop.f32.mrb[0].mxu0
      %v2036 = vadd.f32 0.0, %v2035
      %v2037 = vpop.f32.mrb[0].mxu0
      %v2038 = vadd.f32 0.0, %v2037
      %v2039 = vpop.f32.mrb[0].mxu0
      %v2040 = vadd.f32 0.0, %v2039
      %v2041 = vpop.f32.mrb[0].mxu0
      %v2042 = vadd.f32 0.0, %v2041
      %2043 = vdwg.mxu0
      %v2045 = vcombine.high %v393, %v393
      %vm2046 = vcmask 23552
      %v2048 = vsel %vm2046, %v1918, 0
      %v2051 = vsel %vm2046, %v1919, 0
      %v2054 = vsel %vm2046, %v1920, 0
      %v2057 = vsel %vm2046, %v1921, 0
      %v2060 = vsel %vm2046, %v1922, 0
      %v2063 = vsel %vm2046, %v1923, 0
      %v2066 = vsel %vm2046, %v1924, 0
      %v2069 = vsel %vm2046, %v1925, 0
      %vm2071 = vcmask 1042432
      %v2072 = vsel %vm2071, %v393, 0
      %v2074 = vsel %vm2071, %v2045, 0
      %2076 = vmatprep.subr.mxu0 %v2074
      %2077 = vmatpush1.msra.mxu0 %v2072
      %2078 = vmatprep.subr.mxu0 0.0
      %2079 = vmatpush1.msra.mxu0 0.0
      %2080 = vmatprep.subr.mxu0 0.0
      %2081 = vmatpush1.msra.mxu0 0.0
      %2082 = vmatprep.subr.mxu0 0.0
      %2083 = vmatpush1.msra.mxu0 0.0
      %2084 = vmatprep.subr.mxu0 0.0
      %2085 = vmatpush1.msra.mxu0 0.0
      %2086 = vmatprep.subr.mxu0 0.0
      %2087 = vmatpush1.msra.mxu0 0.0
      %2088 = vmatprep.subr.mxu0 0.0
      %2089 = vmatpush1.msra.mxu0 0.0
      %2090 = vmatprep.subr.mxu0 0.0
      %2091 = vmatpush1.msra.mxu0 0.0
      %2092 = vmatprep.subr.mxu0 0.0
      %2093 = vmatpush1.msra.mxu0 0.0
      %2094 = vmatprep.subr.mxu0 0.0
      %2095 = vmatpush1.msra.mxu0 0.0
      %2096 = vmatprep.subr.mxu0 0.0
      %2097 = vmatpush1.msra.mxu0 0.0
      %2098 = vmatprep.subr.mxu0 0.0
      %2099 = vmatpush1.msra.mxu0 0.0
      %2100 = vmatprep.subr.mxu0 0.0
      %2101 = vmatpush1.msra.mxu0 0.0
      %2102 = vmatprep.subr.mxu0 0.0
      %2103 = vmatpush1.msra.mxu0 0.0
      %2104 = vmatprep.subr.mxu0 0.0
      %2105 = vmatpush1.msra.mxu0 0.0
      %2106 = vmatprep.subr.mxu0 0.0
      %2107 = vmatpush1.msra.mxu0 0.0
      %2108 = vmatprep.subr.mxu0 0.0
      %2109 = vmatpush1.msra.mxu0 0.0
      %2110 = vmatprep.subr.mxu0 0.0
      %2111 = vmatpush1.msra.mxu0 0.0
      %2112 = vmatprep.subr.mxu0 0.0
      %2113 = vmatpush1.msra.mxu0 0.0
      %2114 = vmatprep.subr.mxu0 0.0
      %2115 = vmatpush1.msra.mxu0 0.0
      %2116 = vmatprep.subr.mxu0 0.0
      %2117 = vmatpush1.msra.mxu0 0.0
      %2118 = vmatprep.subr.mxu0 0.0
      %2119 = vmatpush1.msra.mxu0 0.0
      %2120 = vmatprep.subr.mxu0 0.0
      %2121 = vmatpush1.msra.mxu0 0.0
      %2122 = vmatprep.subr.mxu0 0.0
      %2123 = vmatpush1.msra.mxu0 0.0
      %2124 = vmatprep.subr.mxu0 0.0
      %2125 = vmatpush1.msra.mxu0 0.0
      %2126 = vmatprep.subr.mxu0 0.0
      %2127 = vmatpush1.msra.mxu0 0.0
      %2128 = vmatprep.subr.mxu0 0.0
      %2129 = vmatpush1.msra.mxu0 0.0
      %2130 = vmatprep.subr.mxu0 0.0
      %2131 = vmatpush1.msra.mxu0 0.0
      %2132 = vmatprep.subr.mxu0 0.0
      %2133 = vmatpush1.msra.mxu0 0.0
      %2134 = vmatprep.subr.mxu0 0.0
      %2135 = vmatpush1.msra.mxu0 0.0
      %2136 = vmatprep.subr.mxu0 0.0
      %2137 = vmatpush1.msra.mxu0 0.0
      %2138 = vmatprep.subr.mxu0 0.0
      %2139 = vmatpush1.msra.mxu0 0.0
      %2140 = vmatprep.mubr.f32.mxu0 0.0
      %2141 = vmatmul.mubr.f32.gmra.mrb[0].mxu0 %v2048
      %v2142 = vpop.f32.mrb[0].mxu0
      %v2143 = vadd.f32 %v2006, %v2142
      %v2144 = vpop.f32.mrb[0].mxu0
      %v2145 = vadd.f32 %v2008, %v2144
      %2146 = vmatprep.mubr.f32.mxu0 0.0
      %2147 = vmatmul.mubr.f32.gmra.mrb[0].mxu0 %v2051
      %v2148 = vpop.f32.mrb[0].mxu0
      %v2149 = vadd.f32 %v2010, %v2148
      %v2150 = vpop.f32.mrb[0].mxu0
      %v2151 = vadd.f32 %v2012, %v2150
      %2152 = vmatprep.mubr.f32.mxu0 0.0
      %2153 = vmatmul.mubr.f32.gmra.mrb[0].mxu0 %v2054
      %v2154 = vpop.f32.mrb[0].mxu0
      %v2155 = vadd.f32 %v2016, %v2154
      %v2156 = vpop.f32.mrb[0].mxu0
      %v2157 = vadd.f32 %v2018, %v2156
      %2158 = vmatprep.mubr.f32.mxu0 0.0
      %2159 = vmatmul.mubr.f32.gmra.mrb[0].mxu0 %v2057
      %v2160 = vpop.f32.mrb[0].mxu0
      %v2161 = vadd.f32 %v2020, %v2160
      %v2162 = vpop.f32.mrb[0].mxu0
      %v2163 = vadd.f32 %v2022, %v2162
      %2164 = vmatprep.mubr.f32.mxu0 0.0
      %2165 = vmatmul.mubr.f32.gmra.mrb[0].mxu0 %v2060
      %v2166 = vpop.f32.mrb[0].mxu0
      %v2167 = vadd.f32 %v2026, %v2166
      %v2168 = vpop.f32.mrb[0].mxu0
      %v2169 = vadd.f32 %v2028, %v2168
      %2170 = vmatprep.mubr.f32.mxu0 0.0
      %2171 = vmatmul.mubr.f32.gmra.mrb[0].mxu0 %v2063
      %v2172 = vpop.f32.mrb[0].mxu0
      %v2173 = vadd.f32 %v2030, %v2172
      %v2174 = vpop.f32.mrb[0].mxu0
      %v2175 = vadd.f32 %v2032, %v2174
      %2176 = vmatprep.mubr.f32.mxu0 0.0
      %2177 = vmatmul.mubr.f32.gmra.mrb[0].mxu0 %v2066
      %v2178 = vpop.f32.mrb[0].mxu0
      %v2179 = vadd.f32 %v2036, %v2178
      %v2180 = vpop.f32.mrb[0].mxu0
      %v2181 = vadd.f32 %v2038, %v2180
      %2182 = vmatprep.mubr.f32.mxu0 0.0
      %2183 = vmatmul.mubr.f32.gmra.mrb[0].mxu0 %v2069
      %v2184 = vpop.f32.mrb[0].mxu0
      %v2185 = vadd.f32 %v2040, %v2184
      %v2186 = vpop.f32.mrb[0].mxu0
      %v2187 = vadd.f32 %v2042, %v2186
      %2188 = vdwg.mxu0
      %v2189 = vld [vmem:[%s4] sm:$0xff]
      %v2190 = vld [vmem:[%s4 + $0x8] sm:$0xff]
      %v2191 = vld [vmem:[%s4 + $0x10] sm:$0xff]
      %v2192 = vld [vmem:[%s4 + $0x18] sm:$0xff]
      %v2193 = vld [vmem:[%s4 + $0x20] sm:$0xff]
      %v2194 = vld [vmem:[%s4 + $0x28] sm:$0xff]
      %v2195 = vld [vmem:[%s4 + $0x30] sm:$0xff]
      %v2196 = vld [vmem:[%s4 + $0x38] sm:$0xff]
      %2198 = vset.pattern.permute.xlu0 0
      %2199 = vperm.xlu0 %2198, %v2189
      %v2200 = vpop.permute.xlu0 %2199
      %2203 = vset.pattern.permute.xlu0 0
      %2204 = vperm.xlu0 %2203, %v2190
      %v2205 = vpop.permute.xlu0 %2204
      %2208 = vset.pattern.permute.xlu0 0
      %2209 = vperm.xlu0 %2208, %v2191
      %v2210 = vpop.permute.xlu0 %2209
      %2213 = vset.pattern.permute.xlu0 0
      %2214 = vperm.xlu0 %2213, %v2192
      %v2215 = vpop.permute.xlu0 %2214
      %2218 = vset.pattern.permute.xlu0 0
      %2219 = vperm.xlu0 %2218, %v2193
      %v2220 = vpop.permute.xlu0 %2219
      %2223 = vset.pattern.permute.xlu0 0
      %2224 = vperm.xlu0 %2223, %v2194
      %v2225 = vpop.permute.xlu0 %2224
      %2228 = vset.pattern.permute.xlu0 0
      %2229 = vperm.xlu0 %2228, %v2195
      %v2230 = vpop.permute.xlu0 %2229
      %2233 = vset.pattern.permute.xlu0 0
      %2234 = vperm.xlu0 %2233, %v2196
      %v2235 = vpop.permute.xlu0 %2234
      %v2237 = vadd.f32 %v2143, %v2200
      %v2238 = vadd.f32 %v2145, %v2200
      %v2239 = vadd.f32 %v2149, %v2205
      %v2240 = vadd.f32 %v2151, %v2205
      %v2241 = vadd.f32 %v2155, %v2210
      %v2242 = vadd.f32 %v2157, %v2210
      %v2243 = vadd.f32 %v2161, %v2215
      %v2244 = vadd.f32 %v2163, %v2215
      %v2245 = vadd.f32 %v2167, %v2220
      %v2246 = vadd.f32 %v2169, %v2220
      %v2247 = vadd.f32 %v2173, %v2225
      %v2248 = vadd.f32 %v2175, %v2225
      %v2249 = vadd.f32 %v2179, %v2230
      %v2250 = vadd.f32 %v2181, %v2230
      %v2251 = vadd.f32 %v2185, %v2235
      %v2252 = vadd.f32 %v2187, %v2235
      %v2253 = vld [vmem:[%s5] sm:$0xf]
      %v2254 = vld [vmem:[%s5 + $0x4] sm:$0xf]
      %v2255 = vld [vmem:[%s5 + $0x8] sm:$0xf]
      %v2256 = vld [vmem:[%s5 + $0xc] sm:$0xf]
      %v2257 = vld [vmem:[%s6] sm:$0xff]
      %v2258 = vld [vmem:[%s6 + $0x8] sm:$0xff]
      %v2259 = vld [vmem:[%s6 + $0x10] sm:$0xff]
      %v2260 = vld [vmem:[%s6 + $0x18] sm:$0xff]
      %v2261 = vld [vmem:[%s5 + $0x10] sm:$0xf]
      %v2262 = vld [vmem:[%s5 + $0x14] sm:$0xf]
      %v2263 = vld [vmem:[%s5 + $0x18] sm:$0xf]
      %v2264 = vld [vmem:[%s5 + $0x1c] sm:$0xf]
      %v2265 = vld [vmem:[%s6 + $0x20] sm:$0xff]
      %v2266 = vld [vmem:[%s6 + $0x28] sm:$0xff]
      %v2267 = vld [vmem:[%s6 + $0x30] sm:$0xff]
      %v2268 = vld [vmem:[%s6 + $0x38] sm:$0xff]
      %v2269 = vmax.f32 %v2237, 0.0
      %v2270 = vmax.f32 %v2238, 0.0
      %v2271 = vmax.f32 %v2239, 0.0
      %v2272 = vmax.f32 %v2240, 0.0
      %v2273 = vmax.f32 %v2241, 0.0
      %v2274 = vmax.f32 %v2242, 0.0
      %v2275 = vmax.f32 %v2243, 0.0
      %v2276 = vmax.f32 %v2244, 0.0
      %v2277 = vpack.c.bf16 %v2271, %v2269
      %v2278 = vpack.c.bf16 %v2272, %v2270
      %v2279 = vpack.c.bf16 %v2275, %v2273
      %v2280 = vpack.c.bf16 %v2276, %v2274
      %2282 = vset.pattern.permute.xlu0 0
      %2283 = vperm.xlu0 %2282, %v2257
      %v2284 = vpop.permute.xlu0 %2283
      %2287 = vset.pattern.permute.xlu0 0
      %2288 = vperm.xlu0 %2287, %v2258
      %v2289 = vpop.permute.xlu0 %2288
      %2292 = vset.pattern.permute.xlu0 0
      %2293 = vperm.xlu0 %2292, %v2259
      %v2294 = vpop.permute.xlu0 %2293
      %2297 = vset.pattern.permute.xlu0 0
      %2298 = vperm.xlu0 %2297, %v2260
      %v2299 = vpop.permute.xlu0 %2298
      %v2305 = vunpack.c.l.b16 %v2253
      %v2306 = vunpack.c.l.b16 %v2254
      %v2307 = vunpack.c.l.b16 %v2255
      %v2308 = vunpack.c.l.b16 %v2256
      %v2309 = vpack.c.b16 %v2306, %v2305
      %v2310 = vpack.c.b16 %v2308, %v2307
      %v2312 = vsel %vm1958, %v2309, 0
      %v2315 = vsel %vm1958, %v2310, 0
      %2317 = vmatprep.subr.bf16.mxu0 %v2278
      %2318 = vmatpush1.bf16.msra.mxu0 %v2277
      %2319 = vmatprep.subr.bf16.mxu0 %v2280
      %2320 = vmatpush1.bf16.msra.mxu0 %v2279
      %2321 = vmatprep.subr.bf16.mxu0 0
      %2322 = vmatpush1.bf16.msra.mxu0 0
      %2323 = vmatprep.subr.bf16.mxu0 0
      %2324 = vmatpush1.bf16.msra.mxu0 0
      %2325 = vmatprep.subr.bf16.mxu0 0
      %2326 = vmatpush1.bf16.msra.mxu0 0
      %2327 = vmatprep.subr.bf16.mxu0 0
      %2328 = vmatpush1.bf16.msra.mxu0 0
      %2329 = vmatprep.subr.bf16.mxu0 0
      %2330 = vmatpush1.bf16.msra.mxu0 0
      %2331 = vmatprep.subr.bf16.mxu0 0
      %2332 = vmatpush1.bf16.msra.mxu0 0
      %2333 = vmatprep.subr.bf16.mxu0 0
      %2334 = vmatpush1.bf16.msra.mxu0 0
      %2335 = vmatprep.subr.bf16.mxu0 0
      %2336 = vmatpush1.bf16.msra.mxu0 0
      %2337 = vmatprep.subr.bf16.mxu0 0
      %2338 = vmatpush1.bf16.msra.mxu0 0
      %2339 = vmatprep.subr.bf16.mxu0 0
      %2340 = vmatpush1.bf16.msra.mxu0 0
      %2341 = vmatprep.subr.bf16.mxu0 0
      %2342 = vmatpush1.bf16.msra.mxu0 0
      %2343 = vmatprep.subr.bf16.mxu0 0
      %2344 = vmatpush1.bf16.msra.mxu0 0
      %2345 = vmatprep.subr.bf16.mxu0 0
      %2346 = vmatpush1.bf16.msra.mxu0 0
      %2347 = vmatprep.subr.bf16.mxu0 0
      %2348 = vmatpush1.bf16.msra.mxu0 0
      %2349 = vmatprep.mubr.bf16.mxu0 0
      %2350 = vmatmul.mubr.bf16.gmra.mrb[0].mxu0 %v2312
      %v2351 = vpop.f32.mrb[0].mxu0
      %v2352 = vadd.f32 %v2284, %v2351
      %v2353 = vpop.f32.mrb[0].mxu0
      %v2354 = vadd.f32 %v2284, %v2353
      %v2355 = vpop.f32.mrb[0].mxu0
      %v2356 = vadd.f32 %v2289, %v2355
      %v2357 = vpop.f32.mrb[0].mxu0
      %v2358 = vadd.f32 %v2289, %v2357
      %2359 = vmatprep.mubr.bf16.mxu0 0
      %2360 = vmatmul.mubr.bf16.gmra.mrb[0].mxu0 %v2315
      %v2361 = vpop.f32.mrb[0].mxu0
      %v2362 = vadd.f32 %v2294, %v2361
      %v2363 = vpop.f32.mrb[0].mxu0
      %v2364 = vadd.f32 %v2294, %v2363
      %v2365 = vpop.f32.mrb[0].mxu0
      %v2366 = vadd.f32 %v2299, %v2365
      %v2367 = vpop.f32.mrb[0].mxu0
      %v2368 = vadd.f32 %v2299, %v2367
      %2369 = vdwg.mxu0
      %v2370 = vmax.f32 %v2352, 0.0
      %v2371 = vmax.f32 %v2354, 0.0
      %v2372 = vmax.f32 %v2356, 0.0
      %v2373 = vmax.f32 %v2358, 0.0
      %v2374 = vmax.f32 %v2362, 0.0
      %v2375 = vmax.f32 %v2364, 0.0
      %v2376 = vmax.f32 %v2366, 0.0
      %v2377 = vmax.f32 %v2368, 0.0
      %v2378 = vpack.c.bf16 %v2372, %v2370
      %v2379 = vpack.c.bf16 %v2373, %v2371
      %v2380 = vpack.c.bf16 %v2376, %v2374
      %v2381 = vpack.c.bf16 %v2377, %v2375
      %2383 = vset.pattern.permute.xlu0 0
      %2384 = vperm.xlu0 %2383, %v2265
      %v2385 = vpop.permute.xlu0 %2384
      %2388 = vset.pattern.permute.xlu0 0
      %2389 = vperm.xlu0 %2388, %v2266
      %v2390 = vpop.permute.xlu0 %2389
      %2393 = vset.pattern.permute.xlu0 0
      %2394 = vperm.xlu0 %2393, %v2267
      %v2395 = vpop.permute.xlu0 %2394
      %2398 = vset.pattern.permute.xlu0 0
      %2399 = vperm.xlu0 %2398, %v2268
      %v2400 = vpop.permute.xlu0 %2399
      %v2406 = vunpack.c.l.b16 %v2261
      %v2407 = vunpack.c.l.b16 %v2262
      %v2408 = vunpack.c.l.b16 %v2263
      %v2409 = vunpack.c.l.b16 %v2264
      %v2410 = vpack.c.b16 %v2407, %v2406
      %v2411 = vpack.c.b16 %v2409, %v2408
      %v2413 = vsel %vm1958, %v2410, 0
      %v2416 = vsel %vm1958, %v2411, 0
      %2418 = vmatprep.subr.bf16.mxu0 %v2379
      %2419 = vmatpush1.bf16.msra.mxu0 %v2378
      %2420 = vmatprep.subr.bf16.mxu0 %v2381
      %2421 = vmatpush1.bf16.msra.mxu0 %v2380
      %2422 = vmatprep.subr.bf16.mxu0 0
      %2423 = vmatpush1.bf16.msra.mxu0 0
      %2424 = vmatprep.subr.bf16.mxu0 0
      %2425 = vmatpush1.bf16.msra.mxu0 0
      %2426 = vmatprep.subr.bf16.mxu0 0
      %2427 = vmatpush1.bf16.msra.mxu0 0
      %2428 = vmatprep.subr.bf16.mxu0 0
      %2429 = vmatpush1.bf16.msra.mxu0 0
      %2430 = vmatprep.subr.bf16.mxu0 0
      %2431 = vmatpush1.bf16.msra.mxu0 0
      %2432 = vmatprep.subr.bf16.mxu0 0
      %2433 = vmatpush1.bf16.msra.mxu0 0
      %2434 = vmatprep.subr.bf16.mxu0 0
      %2435 = vmatpush1.bf16.msra.mxu0 0
      %2436 = vmatprep.subr.bf16.mxu0 0
      %2437 = vmatpush1.bf16.msra.mxu0 0
      %2438 = vmatprep.subr.bf16.mxu0 0
      %2439 = vmatpush1.bf16.msra.mxu0 0
      %2440 = vmatprep.subr.bf16.mxu0 0
      %2441 = vmatpush1.bf16.msra.mxu0 0
      %2442 = vmatprep.subr.bf16.mxu0 0
      %2443 = vmatpush1.bf16.msra.mxu0 0
      %2444 = vmatprep.subr.bf16.mxu0 0
      %2445 = vmatpush1.bf16.msra.mxu0 0
      %2446 = vmatprep.subr.bf16.mxu0 0
      %2447 = vmatpush1.bf16.msra.mxu0 0
      %2448 = vmatprep.subr.bf16.mxu0 0
      %2449 = vmatpush1.bf16.msra.mxu0 0
      %2450 = vmatprep.mubr.bf16.mxu0 0
      %2451 = vmatmul.mubr.bf16.gmra.mrb[0].mxu0 %v2413
      %v2452 = vpop.f32.mrb[0].mxu0
      %v2453 = vadd.f32 %v2385, %v2452
      %v2454 = vpop.f32.mrb[0].mxu0
      %v2455 = vadd.f32 %v2385, %v2454
      %v2456 = vpop.f32.mrb[0].mxu0
      %v2457 = vadd.f32 %v2390, %v2456
      %v2458 = vpop.f32.mrb[0].mxu0
      %v2459 = vadd.f32 %v2390, %v2458
      %2460 = vmatprep.mubr.bf16.mxu0 0
      %2461 = vmatmul.mubr.bf16.gmra.mrb[0].mxu0 %v2416
      %v2462 = vpop.f32.mrb[0].mxu0
      %v2463 = vadd.f32 %v2395, %v2462
      %v2464 = vpop.f32.mrb[0].mxu0
      %v2465 = vadd.f32 %v2395, %v2464
      %v2466 = vpop.f32.mrb[0].mxu0
      %v2467 = vadd.f32 %v2400, %v2466
      %v2468 = vpop.f32.mrb[0].mxu0
      %v2469 = vadd.f32 %v2400, %v2468
      %2470 = vdwg.mxu0
      %v2471 = vadd.f32 %v2237, %v2453
      %v2472 = vadd.f32 %v2238, %v2455
      %v2473 = vadd.f32 %v2239, %v2457
      %v2474 = vadd.f32 %v2240, %v2459
      %v2475 = vadd.f32 %v2241, %v2463
      %v2476 = vadd.f32 %v2242, %v2465
      %v2477 = vadd.f32 %v2243, %v2467
      %v2478 = vadd.f32 %v2244, %v2469
      %v2479 = vadd.f32 %v2471, %v2245
      %v2480 = vadd.f32 %v2472, %v2246
      %v2481 = vadd.f32 %v2473, %v2247
      %v2482 = vadd.f32 %v2474, %v2248
      %v2483 = vadd.f32 %v2475, %v2249
      %v2484 = vadd.f32 %v2476, %v2250
      %v2485 = vadd.f32 %v2477, %v2251
      %v2486 = vadd.f32 %v2478, %v2252
      %v2487 = vld [vmem:[%s5 + $0x20] sm:$0xf]
      %v2488 = vld [vmem:[%s5 + $0x24] sm:$0xf]
      %v2489 = vld [vmem:[%s5 + $0x28] sm:$0xf]
      %v2490 = vld [vmem:[%s5 + $0x2c] sm:$0xf]
      %v2491 = vld [vmem:[%s6 + $0x40] sm:$0xff]
      %v2492 = vld [vmem:[%s6 + $0x48] sm:$0xff]
      %v2493 = vld [vmem:[%s6 + $0x50] sm:$0xff]
      %v2494 = vld [vmem:[%s6 + $0x58] sm:$0xff]
      %v2495 = vld [vmem:[%s5 + $0x30] sm:$0xf]
      %v2496 = vld [vmem:[%s5 + $0x34] sm:$0xf]
      %v2497 = vld [vmem:[%s5 + $0x38] sm:$0xf]
      %v2498 = vld [vmem:[%s5 + $0x3c] sm:$0xf]
      %v2499 = vld [vmem:[%s6 + $0x60] sm:$0xff]
      %v2500 = vld [vmem:[%s6 + $0x68] sm:$0xff]
      %v2501 = vld [vmem:[%s6 + $0x70] sm:$0xff]
      %v2502 = vld [vmem:[%s6 + $0x78] sm:$0xff]
      %v2503 = vmax.f32 %v2479, 0.0
      %v2504 = vmax.f32 %v2480, 0.0
      %v2505 = vmax.f32 %v2481, 0.0
      %v2506 = vmax.f32 %v2482, 0.0
      %v2507 = vmax.f32 %v2483, 0.0
      %v2508 = vmax.f32 %v2484, 0.0
      %v2509 = vmax.f32 %v2485, 0.0
      %v2510 = vmax.f32 %v2486, 0.0
      %v2511 = vpack.c.bf16 %v2505, %v2503
      %v2512 = vpack.c.bf16 %v2506, %v2504
      %v2513 = vpack.c.bf16 %v2509, %v2507
      %v2514 = vpack.c.bf16 %v2510, %v2508
      %2516 = vset.pattern.permute.xlu0 0
      %2517 = vperm.xlu0 %2516, %v2491
      %v2518 = vpop.permute.xlu0 %2517
      %2521 = vset.pattern.permute.xlu0 0
      %2522 = vperm.xlu0 %2521, %v2492
      %v2523 = vpop.permute.xlu0 %2522
      %2526 = vset.pattern.permute.xlu0 0
      %2527 = vperm.xlu0 %2526, %v2493
      %v2528 = vpop.permute.xlu0 %2527
      %2531 = vset.pattern.permute.xlu0 0
      %2532 = vperm.xlu0 %2531, %v2494
      %v2533 = vpop.permute.xlu0 %2532
      %v2539 = vunpack.c.l.b16 %v2487
      %v2540 = vunpack.c.l.b16 %v2488
      %v2541 = vunpack.c.l.b16 %v2489
      %v2542 = vunpack.c.l.b16 %v2490
      %v2543 = vpack.c.b16 %v2540, %v2539
      %v2544 = vpack.c.b16 %v2542, %v2541
      %v2546 = vsel %vm1958, %v2543, 0
      %v2549 = vsel %vm1958, %v2544, 0
      %2551 = vmatprep.subr.bf16.mxu0 %v2512
      %2552 = vmatpush1.bf16.msra.mxu0 %v2511
      %2553 = vmatprep.subr.bf16.mxu0 %v2514
      %2554 = vmatpush1.bf16.msra.mxu0 %v2513
      %2555 = vmatprep.subr.bf16.mxu0 0
      %2556 = vmatpush1.bf16.msra.mxu0 0
      %2557 = vmatprep.subr.bf16.mxu0 0
      %2558 = vmatpush1.bf16.msra.mxu0 0
      %2559 = vmatprep.subr.bf16.mxu0 0
      %2560 = vmatpush1.bf16.msra.mxu0 0
      %2561 = vmatprep.subr.bf16.mxu0 0
      %2562 = vmatpush1.bf16.msra.mxu0 0
      %2563 = vmatprep.subr.bf16.mxu0 0
      %2564 = vmatpush1.bf16.msra.mxu0 0
      %2565 = vmatprep.subr.bf16.mxu0 0
      %2566 = vmatpush1.bf16.msra.mxu0 0
      %2567 = vmatprep.subr.bf16.mxu0 0
      %2568 = vmatpush1.bf16.msra.mxu0 0
      %2569 = vmatprep.subr.bf16.mxu0 0
      %2570 = vmatpush1.bf16.msra.mxu0 0
      %2571 = vmatprep.subr.bf16.mxu0 0
      %2572 = vmatpush1.bf16.msra.mxu0 0
      %2573 = vmatprep.subr.bf16.mxu0 0
      %2574 = vmatpush1.bf16.msra.mxu0 0
      %2575 = vmatprep.subr.bf16.mxu0 0
      %2576 = vmatpush1.bf16.msra.mxu0 0
      %2577 = vmatprep.subr.bf16.mxu0 0
      %2578 = vmatpush1.bf16.msra.mxu0 0
      %2579 = vmatprep.subr.bf16.mxu0 0
      %2580 = vmatpush1.bf16.msra.mxu0 0
      %2581 = vmatprep.subr.bf16.mxu0 0
      %2582 = vmatpush1.bf16.msra.mxu0 0
      %2583 = vmatprep.mubr.bf16.mxu0 0
      %2584 = vmatmul.mubr.bf16.gmra.mrb[0].mxu0 %v2546
      %v2585 = vpop.f32.mrb[0].mxu0
      %v2586 = vadd.f32 %v2518, %v2585
      %v2587 = vpop.f32.mrb[0].mxu0
      %v2588 = vadd.f32 %v2518, %v2587
      %v2589 = vpop.f32.mrb[0].mxu0
      %v2590 = vadd.f32 %v2523, %v2589
      %v2591 = vpop.f32.mrb[0].mxu0
      %v2592 = vadd.f32 %v2523, %v2591
      %2593 = vmatprep.mubr.bf16.mxu0 0
      %2594 = vmatmul.mubr.bf16.gmra.mrb[0].mxu0 %v2549
      %v2595 = vpop.f32.mrb[0].mxu0
      %v2596 = vadd.f32 %v2528, %v2595
      %v2597 = vpop.f32.mrb[0].mxu0
      %v2598 = vadd.f32 %v2528, %v2597
      %v2599 = vpop.f32.mrb[0].mxu0
      %v2600 = vadd.f32 %v2533, %v2599
      %v2601 = vpop.f32.mrb[0].mxu0
      %v2602 = vadd.f32 %v2533, %v2601
      %2603 = vdwg.mxu0
      %v2604 = vmax.f32 %v2586, 0.0
      %v2605 = vmax.f32 %v2588, 0.0
      %v2606 = vmax.f32 %v2590, 0.0
      %v2607 = vmax.f32 %v2592, 0.0
      %v2608 = vmax.f32 %v2596, 0.0
      %v2609 = vmax.f32 %v2598, 0.0
      %v2610 = vmax.f32 %v2600, 0.0
      %v2611 = vmax.f32 %v2602, 0.0
      %v2612 = vpack.c.bf16 %v2606, %v2604
      %v2613 = vpack.c.bf16 %v2607, %v2605
      %v2614 = vpack.c.bf16 %v2610, %v2608
      %v2615 = vpack.c.bf16 %v2611, %v2609
      %2617 = vset.pattern.permute.xlu0 0
      %2618 = vperm.xlu0 %2617, %v2499
      %v2619 = vpop.permute.xlu0 %2618
      %2622 = vset.pattern.permute.xlu0 0
      %2623 = vperm.xlu0 %2622, %v2500
      %v2624 = vpop.permute.xlu0 %2623
      %2627 = vset.pattern.permute.xlu0 0
      %2628 = vperm.xlu0 %2627, %v2501
      %v2629 = vpop.permute.xlu0 %2628
      %2632 = vset.pattern.permute.xlu0 0
      %2633 = vperm.xlu0 %2632, %v2502
      %v2634 = vpop.permute.xlu0 %2633
      %v2640 = vunpack.c.l.b16 %v2495
      %v2641 = vunpack.c.l.b16 %v2496
      %v2642 = vunpack.c.l.b16 %v2497
      %v2643 = vunpack.c.l.b16 %v2498
      %v2644 = vpack.c.b16 %v2641, %v2640
      %v2645 = vpack.c.b16 %v2643, %v2642
      %v2647 = vsel %vm1958, %v2644, 0
      %v2650 = vsel %vm1958, %v2645, 0
      %2652 = vmatprep.subr.bf16.mxu0 %v2613
      %2653 = vmatpush1.bf16.msra.mxu0 %v2612
      %2654 = vmatprep.subr.bf16.mxu0 %v2615
      %2655 = vmatpush1.bf16.msra.mxu0 %v2614
      %2656 = vmatprep.subr.bf16.mxu0 0
      %2657 = vmatpush1.bf16.msra.mxu0 0
      %2658 = vmatprep.subr.bf16.mxu0 0
      %2659 = vmatpush1.bf16.msra.mxu0 0
      %2660 = vmatprep.subr.bf16.mxu0 0
      %2661 = vmatpush1.bf16.msra.mxu0 0
      %2662 = vmatprep.subr.bf16.mxu0 0
      %2663 = vmatpush1.bf16.msra.mxu0 0
      %2664 = vmatprep.subr.bf16.mxu0 0
      %2665 = vmatpush1.bf16.msra.mxu0 0
      %2666 = vmatprep.subr.bf16.mxu0 0
      %2667 = vmatpush1.bf16.msra.mxu0 0
      %2668 = vmatprep.subr.bf16.mxu0 0
      %2669 = vmatpush1.bf16.msra.mxu0 0
      %2670 = vmatprep.subr.bf16.mxu0 0
      %2671 = vmatpush1.bf16.msra.mxu0 0
      %2672 = vmatprep.subr.bf16.mxu0 0
      %2673 = vmatpush1.bf16.msra.mxu0 0
      %2674 = vmatprep.subr.bf16.mxu0 0
      %2675 = vmatpush1.bf16.msra.mxu0 0
      %2676 = vmatprep.subr.bf16.mxu0 0
      %2677 = vmatpush1.bf16.msra.mxu0 0
      %2678 = vmatprep.subr.bf16.mxu0 0
      %2679 = vmatpush1.bf16.msra.mxu0 0
      %2680 = vmatprep.subr.bf16.mxu0 0
      %2681 = vmatpush1.bf16.msra.mxu0 0
      %2682 = vmatprep.subr.bf16.mxu0 0
      %2683 = vmatpush1.bf16.msra.mxu0 0
      %2684 = vmatprep.mubr.bf16.mxu0 0
      %2685 = vmatmul.mubr.bf16.gmra.mrb[0].mxu0 %v2647
      %v2686 = vpop.f32.mrb[0].mxu0
      %v2687 = vadd.f32 %v2619, %v2686
      %v2688 = vpop.f32.mrb[0].mxu0
      %v2689 = vadd.f32 %v2619, %v2688
      %v2690 = vpop.f32.mrb[0].mxu0
      %v2691 = vadd.f32 %v2624, %v2690
      %v2692 = vpop.f32.mrb[0].mxu0
      %v2693 = vadd.f32 %v2624, %v2692
      %2694 = vmatprep.mubr.bf16.mxu0 0
      %2695 = vmatmul.mubr.bf16.gmra.mrb[0].mxu0 %v2650
      %v2696 = vpop.f32.mrb[0].mxu0
      %v2697 = vadd.f32 %v2629, %v2696
      %v2698 = vpop.f32.mrb[0].mxu0
      %v2699 = vadd.f32 %v2629, %v2698
      %v2700 = vpop.f32.mrb[0].mxu0
      %v2701 = vadd.f32 %v2634, %v2700
      %v2702 = vpop.f32.mrb[0].mxu0
      %v2703 = vadd.f32 %v2634, %v2702
      %2704 = vdwg.mxu0
      %v2705 = vadd.f32 %v2479, %v2687
      %v2706 = vadd.f32 %v2480, %v2689
      %v2707 = vadd.f32 %v2481, %v2691
      %v2708 = vadd.f32 %v2482, %v2693
      %v2709 = vadd.f32 %v2483, %v2697
      %v2710 = vadd.f32 %v2484, %v2699
      %v2711 = vadd.f32 %v2485, %v2701
      %v2712 = vadd.f32 %v2486, %v2703
      %v2713 = vld [vmem:[%s7] sm:$0xff]
      %v2714 = vld [vmem:[%s7 + $0x8] sm:$0xff]
      %v2715 = vld [vmem:[%s7 + $0x10] sm:$0xff]
      %v2716 = vld [vmem:[%s7 + $0x18] sm:$0xff]
      %v2717 = vmax.f32 %v2705, 0.0
      %v2718 = vmax.f32 %v2706, 0.0
      %v2719 = vmax.f32 %v2707, 0.0
      %v2720 = vmax.f32 %v2708, 0.0
      %v2721 = vmax.f32 %v2709, 0.0
      %v2722 = vmax.f32 %v2710, 0.0
      %v2723 = vmax.f32 %v2711, 0.0
      %v2724 = vmax.f32 %v2712, 0.0
      %2726 = vset.pattern.permute.xlu0 0
      %2727 = vperm.xlu0 %2726, %v2713
      %v2728 = vpop.permute.xlu0 %2727
      %2731 = vset.pattern.permute.xlu0 0
      %2732 = vperm.xlu0 %2731, %v2714
      %v2733 = vpop.permute.xlu0 %2732
      %2736 = vset.pattern.permute.xlu0 0
      %2737 = vperm.xlu0 %2736, %v2715
      %v2738 = vpop.permute.xlu0 %2737
      %2741 = vset.pattern.permute.xlu0 0
      %2742 = vperm.xlu0 %2741, %v2716
      %v2743 = vpop.permute.xlu0 %2742
      %v2745 = vmul.f32 %v2728, %v2717
      %v2746 = vmul.f32 %v2728, %v2718
      %v2747 = vmul.f32 %v2733, %v2719
      %v2748 = vmul.f32 %v2733, %v2720
      %v2749 = vmul.f32 %v2738, %v2721
      %v2750 = vmul.f32 %v2738, %v2722
      %v2751 = vmul.f32 %v2743, %v2723
      %v2752 = vmul.f32 %v2743, %v2724
      %v2753 = vadd.f32 %v2745, %v2747
      %v2754 = vadd.f32 %v2753, %v2749
      %v2755 = vadd.f32 %v2754, %v2751
      %v2756 = vrot.slane %v2755, 4
      %v2757 = vadd.f32 %v2755, %v2756
      %v2758 = vrot.slane %v2757, 2
      %v2759 = vadd.f32 %v2757, %v2758
      %v2760 = vrot.slane %v2759, 1
      %v2761 = vadd.f32 %v2759, %v2760
      %v2762 = vadd.f32 %v2746, %v2748
      %v2763 = vadd.f32 %v2762, %v2750
      %v2764 = vadd.f32 %v2763, %v2752
      %v2765 = vrot.slane %v2764, 4
      %v2766 = vadd.f32 %v2764, %v2765
      %v2767 = vrot.slane %v2766, 2
      %v2768 = vadd.f32 %v2766, %v2767
      %v2769 = vrot.slane %v2768, 1
      %v2770 = vadd.f32 %v2768, %v2769
      %v2771 = vld [vmem:[#allocation2] sm:$0x1]
      %2773 = vset.pattern.permute.xlu0 0
      %2774 = vperm.xlu0 %2773, %v2771
      %v2775 = vpop.permute.xlu0 %2774
      %v2777 = vlaneseq
      %v2778 = vshrl.u32 %v2777, 7
      %v2779 = vsub.s32 0, %v2778
      %v2780 = vrot.slane %v2775, %v2779
      %v2781 = vadd.f32 %v2761, %v2780
      %v2782 = vadd.f32 %v2770, %v2780
      %v2785 = vcombine.low %v2781, %v2782
      %v2787 = vunpack.c.l.s4 1966171168
      %v2788 = vunpack.c.0.s8 %v2787
      %v2789 = vlaneseq
      %v2790 = vshrl.u32 %v2789, 7
      %v2791 = vsub.s32 %v2788, %v2790
      %v2792 = vrot.slane %v2785, %v2791
      %v2794 = vunpack.c.l.s4 1966171168
      %v2795 = vunpack.c.0.s8 %v2794
      %v2796 = vlaneseq
      %v2797 = vshrl.u32 %v2796, 7
      %v2798 = vsub.s32 %v2795, %v2797
      %v2799 = vrot.slane %v2792, %v2798
      %v2801 = vlaneseq
      %vm2802 = vcmp.ge.s32.totalorder %v2801, 0
      %vm2803 = vcmp.lt.s32.totalorder %v2801, 256
      %vm2804 = vmand %vm2802, %vm2803
      %2805 = vst.msk [vmem:[%s390] sm:$0x3] %vm2804, %v2799
      %s2806 = smul.u32 2, %s27
      %p2807 = scmp.lt.s32.totalorder %s26, 1
      %s2808 = scalar_select %p2807, %s26, 1
      %p2809 = scmp.lt.s32.totalorder %s2806, 1
      %s2810 = scalar_select %p2809, %s2806, 1
      %s2811 = smul.addr %s2808, 2
      %s2812 = sadd.s32 %s2810, %s2811
      %s2813 = scalar_lea.vmem %s9, %s2812
      // Predicated region
      $region57: #{conv_onet_forward.3} parent=55 // pred_check
        %p2814 = pneg %p255
      $region58: #{conv_onet_forward.3} parent=55 // pred_check_branch
        %2816 = sbr.rel (%p2814) target = $region60
      $region59: #{conv_onet_forward.3} parent=55 // pred_region
        %s2817 = smul.u32 2, %s27
      $region60: #{conv_onet_forward.3} parent=55 // pred_fallthru
        _
    $region56: #{conv_onet_forward.3} parent=5 // pred_fallthru
      _
    %p2818 = scmp.le.s32.totalorder 2, %s17
    // Predicated region
    $region61: #{conv_onet_forward.3} parent=5 // pred_check
      %p2819 = pneg %p2818
    $region62: #{conv_onet_forward.3} parent=5 // pred_check_branch
      %2821 = sbr.rel (%p2819) target = $region64
    $region63: #{conv_onet_forward.3} parent=5 // pred_region
      %s2822 = ssub.s32 %s17, 2
      // Predicated region
      $region65: #{conv_onet_forward.3} parent=63 // pred_check
        %p2823 = pneg %p261
      $region66: #{conv_onet_forward.3} parent=63 // pred_check_branch
        %2825 = sbr.rel (%p2823) target = $region68
      $region67: #{conv_onet_forward.3} parent=63 // pred_region
        %s2826 = smul.u32 2, %s29
        %p2827 = scmp.lt.s32.totalorder %s28, 1
        %s2828 = scalar_select %p2827, %s28, 1
        %p2829 = scmp.lt.s32.totalorder %s2826, 1
        %s2830 = scalar_select %p2829, %s2826, 1
        %s2831 = smul.addr %s2828, 2
        %s2832 = sadd.s32 %s2830, %s2831
        %s2833 = scalar_lea.vmem %s9, %s2832
      $region68: #{conv_onet_forward.3} parent=63 // pred_fallthru
        _
    $region64: #{conv_onet_forward.3} parent=5 // pred_fallthru
      _
  $region6: #{conv_onet_forward.3} parent=0 // loop_footer
    %s21 = sadd.s32 1, %s17
  $region7: #{conv_onet_forward.3} parent=0 // loop_footer_branch
    %16 = sbr.rel target = $region3
  $region8: #{conv_onet_forward.3} parent=0 // loop_exit
    _

</llo_original>
